<compile_context>
chip_gen: v7x
topology: tpu7x:2x2x1
jax: 0.10.0
libtpu: 0.0.40
codegen_flags: <defaults>
</compile_context>

<pallas_src>
import functools
import math

import jax
import jax.numpy as jnp
from jax.experimental import pallas as pl
from jax.experimental.pallas import tpu as pltpu

# ----------------------------- small BERT config -----------------------------
BATCH = 2
SEQ = 8
HIDDEN = 32
NUM_HEADS = 2
HEAD_DIM = HIDDEN // NUM_HEADS
INTER = 64
NUM_LAYERS = 4          # hidden_layers has NUM_LAYERS + 1 entries (incl. embeddings)
VOCAB = 30
TYPE_VOCAB = 2
MAX_POS = 16
LN_EPS = 1e-12

QKV_PAD = 128           # packed Q|K|V output lanes (one MXU column tile)
assert 3 * HIDDEN <= QKV_PAD

# which hidden states feed np.sum(hidden_layers[-4:-1])
_ACC_HIDDEN = list(range(NUM_LAYERS + 1))[-4:-1]            # hidden-state indices
ACC_LAYERS = tuple(i - 1 for i in _ACC_HIDDEN if i >= 1)    # encoder-layer indices
ACC_INPUT = 0 in _ACC_HIDDEN                                # embeddings in the sum?


# ------------------------------ kernel helpers -------------------------------
def _gelu(x):
    # tanh-approx GELU (tanh routes to the EUP slot on TPU).
    # TODO(synk): HF BertConfig default hidden_act='gelu' is erf-based; swap in
    #             an exact erf GELU if bit-parity with a checkpoint is required.
    c = math.sqrt(2.0 / math.pi)
    return 0.5 * x * (1.0 + jnp.tanh(c * (x + 0.044715 * x * x * x)))


# ------------------------ fused full-stack BERT kernel ------------------------
def fused_bert_kernel(x_ref, mask_ref, eg_ref, eb_ref,
                      wqkv_ref, bqkv_ref, wo_ref, bo_ref, g1_ref, b1_ref,
                      wi_ref, bi_ref, wf_ref, bf_ref, g2_ref, b2_ref,
                      feat_ref,
                      *, batch, seq, hidden, num_heads, head_dim,
                      num_layers, acc_layers, accumulate_input):
    T = batch * seq
    inv_h = 1.0 / hidden

    def layernorm(y, gamma, beta):
        # exact two-pass LN over the full (unpadded) hidden dim
        mu = jnp.sum(y, axis=-1, keepdims=True) * inv_h
        d = y - mu
        var = jnp.sum(d * d, axis=-1, keepdims=True) * inv_h
        return d * jax.lax.rsqrt(var + LN_EPS) * gamma + beta

    # additive attention mask, built & broadcast ONCE, reused by every layer/head
    amask = (1.0 - mask_ref[...]) * -10000.0                     # [B, S]
    amask = jnp.broadcast_to(amask[:, None, :], (batch, seq, seq))

    # embedding LayerNorm folded into the kernel prologue
    x = layernorm(x_ref[...], eg_ref[...], eb_ref[...])          # [T, hidden] f32

    feat = x if accumulate_input else None

    for l in range(num_layers):                                  # static unroll
        xb = x.astype(jnp.bfloat16)

        # fused Q|K|V projection: one [T,hidden] x [hidden,128] MXU tile
        # (bf16 in, f32 acc).  1/sqrt(head_dim) already folded into Wq / bq.
        qkv = jnp.dot(xb, wqkv_ref[l],
                      preferred_element_type=jnp.float32) + bqkv_ref[l]
        q = qkv[:, 0 * hidden:1 * hidden].reshape(batch, seq, hidden)
        k = qkv[:, 1 * hidden:2 * hidden].reshape(batch, seq, hidden)
        v = qkv[:, 2 * hidden:3 * hidden].reshape(batch, seq, hidden)

        # Multi-head attention; heads statically unrolled (same MXU issue count
        # as a batched-head einsum at num_heads=2, no sublane-crossing
        # transposes), per-head context folded straight into the output proj.
        wo_l = wo_ref[l]
        attn = None
        for h in range(num_heads):
            sl = slice(h * head_dim, (h + 1) * head_dim)
            qh = q[:, :, sl].astype(jnp.bfloat16)
            kh = k[:, :, sl].astype(jnp.bfloat16)
            vh = v[:, :, sl].astype(jnp.bfloat16)
            s = jnp.einsum('bqd,bkd->bqk', qh, kh,
                           preferred_element_type=jnp.float32) + amask
            # No max-subtract: logits are tiny and masked logits (-1e4)
            # underflow cleanly to 0 in f32.  Exact division (not approx
            # reciprocal) keeps softmax bit-close to the reference.
            p = jnp.exp(s)
            p = p / jnp.sum(p, axis=-1, keepdims=True)
            ctx = jnp.einsum('bqk,bkd->bqd', p.astype(jnp.bfloat16), vh,
                             preferred_element_type=jnp.float32)   # [B, S, hd]
            head_out = jnp.dot(ctx.reshape(T, head_dim).astype(jnp.bfloat16),
                               wo_l[sl, :],
                               preferred_element_type=jnp.float32)
            attn = head_out if attn is None else attn + head_out

        # attention-output bias deferred into the residual add (no zeros init)
        h1 = layernorm(attn + bo_ref[l] + x, g1_ref[l], b1_ref[l])

        inter = jnp.dot(h1.astype(jnp.bfloat16), wi_ref[l],
                        preferred_element_type=jnp.float32) + bi_ref[l]
        inter = _gelu(inter)
        ff = jnp.dot(inter.astype(jnp.bfloat16), wf_ref[l],
                     preferred_element_type=jnp.float32) + bf_ref[l]
        x = layernorm(ff + h1, g2_ref[l], b2_ref[l])

        if l in acc_layers:        # np.sum(hidden_layers[-4:-1]) folded in
            feat = x if feat is None else feat + x

    if feat is None:
        feat = jnp.zeros((T, hidden), jnp.float32)
    feat_ref[...] = feat           # un-pad lives in-kernel: output is [T, hidden]


def fused_bert_stack(x, mask, eg, eb, p):
    args = (x, mask, eg, eb,
            p['wqkv'], p['bqkv'], p['wo'], p['bo'], p['g1'], p['b1'],
            p['wi'], p['bi'], p['wf'], p['bf'], p['g2'], p['b2'])
    vspec = pl.BlockSpec(memory_space=pltpu.MemorySpace.VMEM)
    kernel = functools.partial(
        fused_bert_kernel, batch=BATCH, seq=SEQ, hidden=HIDDEN,
        num_heads=NUM_HEADS, head_dim=HEAD_DIM, num_layers=NUM_LAYERS,
        acc_layers=ACC_LAYERS, accumulate_input=ACC_INPUT)
    # Single gridless call: all weights (<0.2 MiB) stay VMEM-resident; a layer
    # grid would only add pipeline-step overhead at this size (review item).
    return pl.pallas_call(
        kernel,
        out_shape=jax.ShapeDtypeStruct((x.shape[0], HIDDEN), jnp.float32),
        in_specs=[vspec] * len(args),
        out_specs=vspec,
    )(*args)


# ------------------------------ parameter init --------------------------------
def init_params(key):
    def nrm(k, shape):
        return 0.02 * jax.random.normal(k, shape, dtype=jnp.float32)

    keys = iter(jax.random.split(key, 3 + 6 * NUM_LAYERS))
    emb = dict(
        word=nrm(next(keys), (VOCAB, HIDDEN)),
        pos=nrm(next(keys), (MAX_POS, HIDDEN)),
        typ=nrm(next(keys), (TYPE_VOCAB, HIDDEN)),
        g=jnp.ones((1, HIDDEN), jnp.float32),
        b=jnp.zeros((1, HIDDEN), jnp.float32),
    )

    scale = 1.0 / math.sqrt(HEAD_DIM)       # folded into Wq / bq at pack time
    zeros_h = jnp.zeros((HIDDEN,), jnp.float32)
    ones_h = jnp.ones((HIDDEN,), jnp.float32)
    zeros_i = jnp.zeros((INTER,), jnp.float32)

    def row(v):                              # [1, W] f32 row vector
        return jnp.asarray(v, jnp.float32).reshape(1, -1)

    acc = {k: [] for k in ('wqkv', 'bqkv', 'wo', 'bo', 'g1', 'b1',
                           'wi', 'bi', 'wf', 'bf', 'g2', 'b2')}
    for _ in range(NUM_LAYERS):
        wq = nrm(next(keys), (HIDDEN, HIDDEN))
        wk = nrm(next(keys), (HIDDEN, HIDDEN))
        wv = nrm(next(keys), (HIDDEN, HIDDEN))
        wo = nrm(next(keys), (HIDDEN, HIDDEN))
        wi = nrm(next(keys), (HIDDEN, INTER))
        wf = nrm(next(keys), (INTER, HIDDEN))
        bq, bk, bv = zeros_h, zeros_h, zeros_h   # real bq must be scaled too

        # Q|K|V packed into one 128-lane output tile; attention scale folded
        # into the Q columns (and the Q bias).  bf16 weights for the MXU.
        wqkv = jnp.concatenate(
            [wq * scale, wk, wv,
             jnp.zeros((HIDDEN, QKV_PAD - 3 * HIDDEN), jnp.float32)], axis=1)
        bqkv = jnp.concatenate(
            [bq * scale, bk, bv,
             jnp.zeros((QKV_PAD - 3 * HIDDEN,), jnp.float32)], axis=0)

        acc['wqkv'].append(wqkv.astype(jnp.bfloat16))
        acc['bqkv'].append(row(bqkv))
        acc['wo'].append(wo.astype(jnp.bfloat16))
        acc['bo'].append(row(zeros_h))
        acc['g1'].append(row(ones_h))
        acc['b1'].append(row(zeros_h))
        acc['wi'].append(wi.astype(jnp.bfloat16))
        acc['bi'].append(row(zeros_i))
        acc['wf'].append(wf.astype(jnp.bfloat16))
        acc['bf'].append(row(zeros_h))
        acc['g2'].append(row(ones_h))
        acc['b2'].append(row(zeros_h))
    packed = {k: jnp.stack(v, axis=0) for k, v in acc.items()}
    return emb, packed


# --------------------------- VanillaBertLayer forward --------------------------
def vanilla_bert_layer(tokens, attn_mask, seg_ids, emb, packed):
    B, S = tokens.shape
    # embedding-table gathers are plain-JAX glue (one fused XLA gather+add);
    # the embedding LayerNorm itself now runs inside the fused kernel.
    pos = jnp.arange(S, dtype=jnp.int32)[None, :]
    x = emb['word'][tokens] + emb['pos'][pos] + emb['typ'][seg_ids]   # [B,S,H]

    feat = fused_bert_stack(x.reshape(B * S, HIDDEN),
                            attn_mask.astype(jnp.float32),
                            emb['g'], emb['b'], packed)
    features = feat.reshape(B, S, HIDDEN)      # free bitcast
    # (the torch module's .cuda() transfer is a no-op here)
    return features, attn_mask


# ------------------------------------ main -------------------------------------
if __name__ == "__main__":
    key = jax.random.PRNGKey(0)
    k_param, k_tok, k_seg = jax.random.split(key, 3)

    emb, packed = init_params(k_param)

    tokens = jax.random.randint(k_tok, (BATCH, SEQ), 0, VOCAB, dtype=jnp.int32)
    lengths = jnp.array([SEQ, SEQ - 3], dtype=jnp.int32)
    attn_mask = (jnp.arange(SEQ)[None, :] < lengths[:, None]).astype(jnp.float32)
    seg_ids = (jax.random.randint(k_seg, (BATCH, SEQ), 0, TYPE_VOCAB,
                                  dtype=jnp.int32)
               * attn_mask.astype(jnp.int32))

    forward = jax.jit(vanilla_bert_layer)
    features, mask_out = forward(tokens, attn_mask, seg_ids, emb, packed)
    jax.block_until_ready((features, mask_out))

    assert features.shape == (BATCH, SEQ, HIDDEN)
    assert mask_out.shape == (BATCH, SEQ)
    assert bool(jnp.all(jnp.isfinite(features)))
    print("KERNEL_OK")
</pallas_src>

<mosaic_0001>
module attributes {stable_mosaic.version = 11 : i64} {
  func.func @fused_bert_kernel(%arg0: memref<16x32xf32, #tpu.memory_space<vmem>>, %arg1: memref<2x8xf32, #tpu.memory_space<vmem>>, %arg2: memref<1x32xf32, #tpu.memory_space<vmem>>, %arg3: memref<1x32xf32, #tpu.memory_space<vmem>>, %arg4: memref<4x32x128xbf16, #tpu.memory_space<vmem>>, %arg5: memref<4x1x128xf32, #tpu.memory_space<vmem>>, %arg6: memref<4x32x32xbf16, #tpu.memory_space<vmem>>, %arg7: memref<4x1x32xf32, #tpu.memory_space<vmem>>, %arg8: memref<4x1x32xf32, #tpu.memory_space<vmem>>, %arg9: memref<4x1x32xf32, #tpu.memory_space<vmem>>, %arg10: memref<4x32x64xbf16, #tpu.memory_space<vmem>>, %arg11: memref<4x1x64xf32, #tpu.memory_space<vmem>>, %arg12: memref<4x64x32xbf16, #tpu.memory_space<vmem>>, %arg13: memref<4x1x32xf32, #tpu.memory_space<vmem>>, %arg14: memref<4x1x32xf32, #tpu.memory_space<vmem>>, %arg15: memref<4x1x32xf32, #tpu.memory_space<vmem>>, %arg16: memref<16x32xf32, #tpu.memory_space<vmem>>) attributes {dimension_semantics = [], scalar_prefetch = 0 : i64, scratch_operands = 0 : i64, tpu.core_type = #tpu.core_type<tc>} {
    %c0 = arith.constant 0 : index
    %c0_0 = arith.constant 0 : index
    %0 = vector.load %arg1[%c0, %c0_0] : memref<2x8xf32, #tpu.memory_space<vmem>>, vector<2x8xf32>
    %cst = arith.constant 1.000000e+00 : f32
    %1 = vector.broadcast %cst : f32 to vector<2x8xf32>
    %2 = arith.subf %1, %0 : vector<2x8xf32>
    %cst_1 = arith.constant -1.000000e+04 : f32
    %3 = vector.broadcast %cst_1 : f32 to vector<2x8xf32>
    %4 = arith.mulf %2, %3 : vector<2x8xf32>
    %5 = vector.shape_cast %4 : vector<2x8xf32> to vector<2x1x8xf32>
    %6 = vector.shape_cast %5 : vector<2x1x8xf32> to vector<2x1x8xf32>
    %7 = vector.broadcast %6 : vector<2x1x8xf32> to vector<2x8x8xf32>
    %c0_2 = arith.constant 0 : index
    %c0_3 = arith.constant 0 : index
    %8 = vector.load %arg0[%c0_2, %c0_3] : memref<16x32xf32, #tpu.memory_space<vmem>>, vector<16x32xf32>
    %c0_4 = arith.constant 0 : index
    %c0_5 = arith.constant 0 : index
    %9 = vector.load %arg2[%c0_4, %c0_5] : memref<1x32xf32, #tpu.memory_space<vmem>>, vector<1x32xf32>
    %c0_6 = arith.constant 0 : index
    %c0_7 = arith.constant 0 : index
    %10 = vector.load %arg3[%c0_6, %c0_7] : memref<1x32xf32, #tpu.memory_space<vmem>>, vector<1x32xf32>
    %cst_8 = arith.constant dense<0.000000e+00> : vector<16xf32>
    %11 = vector.multi_reduction <add>, %8, %cst_8 [1] : vector<16x32xf32> to vector<16xf32>
    %12 = vector.shape_cast %11 : vector<16xf32> to vector<16x1xf32>
    %cst_9 = arith.constant 3.125000e-02 : f32
    %13 = vector.broadcast %cst_9 : f32 to vector<16x1xf32>
    %14 = arith.mulf %12, %13 : vector<16x1xf32>
    %15 = vector.broadcast %14 : vector<16x1xf32> to vector<16x32xf32>
    %16 = arith.subf %8, %15 : vector<16x32xf32>
    %17 = arith.mulf %16, %16 : vector<16x32xf32>
    %cst_10 = arith.constant dense<0.000000e+00> : vector<16xf32>
    %18 = vector.multi_reduction <add>, %17, %cst_10 [1] : vector<16x32xf32> to vector<16xf32>
    %19 = vector.shape_cast %18 : vector<16xf32> to vector<16x1xf32>
    %cst_11 = arith.constant 3.125000e-02 : f32
    %20 = vector.broadcast %cst_11 : f32 to vector<16x1xf32>
    %21 = arith.mulf %19, %20 : vector<16x1xf32>
    %cst_12 = arith.constant 9.99999996E-13 : f32
    %22 = vector.broadcast %cst_12 : f32 to vector<16x1xf32>
    %23 = arith.addf %21, %22 : vector<16x1xf32>
    %24 = math.rsqrt %23 : vector<16x1xf32>
    %25 = vector.broadcast %24 : vector<16x1xf32> to vector<16x32xf32>
    %26 = arith.mulf %16, %25 : vector<16x32xf32>
    %27 = vector.broadcast %9 : vector<1x32xf32> to vector<16x32xf32>
    %28 = arith.mulf %26, %27 : vector<16x32xf32>
    %29 = vector.broadcast %10 : vector<1x32xf32> to vector<16x32xf32>
    %30 = arith.addf %28, %29 : vector<16x32xf32>
    %31 = arith.truncf %30 : vector<16x32xf32> to vector<16x32xbf16>
    %c0_13 = arith.constant 0 : index
    %c0_14 = arith.constant 0 : index
    %c0_15 = arith.constant 0 : index
    %32 = vector.load %arg4[%c0_13, %c0_14, %c0_15] : memref<4x32x128xbf16, #tpu.memory_space<vmem>>, vector<1x32x128xbf16>
    %33 = vector.shape_cast %32 : vector<1x32x128xbf16> to vector<32x128xbf16>
    %cst_16 = arith.constant dense<0.000000e+00> : vector<16x128xf32>
    %34 = tpu.matmul %31, %33, %cst_16 {dimension_numbers = #tpu.dot_dimension_numbers<[1], [0], [0], [1], [0, 0, 1, 1], [], []>} : vector<16x32xbf16>, vector<32x128xbf16>, vector<16x128xf32> -> vector<16x128xf32>
    %c0_17 = arith.constant 0 : index
    %c0_18 = arith.constant 0 : index
    %c0_19 = arith.constant 0 : index
    %35 = vector.load %arg5[%c0_17, %c0_18, %c0_19] : memref<4x1x128xf32, #tpu.memory_space<vmem>>, vector<1x1x128xf32>
    %36 = vector.shape_cast %35 : vector<1x1x128xf32> to vector<1x128xf32>
    %37 = vector.broadcast %36 : vector<1x128xf32> to vector<16x128xf32>
    %38 = arith.addf %34, %37 : vector<16x128xf32>
    %39 = vector.extract_strided_slice %38 {offsets = [0, 0], sizes = [16, 32], strides = [1, 1]} : vector<16x128xf32> to vector<16x32xf32>
    %40 = vector.shape_cast %39 : vector<16x32xf32> to vector<2x8x32xf32>
    %41 = vector.extract_strided_slice %38 {offsets = [0, 32], sizes = [16, 32], strides = [1, 1]} : vector<16x128xf32> to vector<16x32xf32>
    %42 = vector.shape_cast %41 : vector<16x32xf32> to vector<2x8x32xf32>
    %43 = vector.extract_strided_slice %38 {offsets = [0, 64], sizes = [16, 32], strides = [1, 1]} : vector<16x128xf32> to vector<16x32xf32>
    %44 = vector.shape_cast %43 : vector<16x32xf32> to vector<2x8x32xf32>
    %c0_20 = arith.constant 0 : index
    %c0_21 = arith.constant 0 : index
    %c0_22 = arith.constant 0 : index
    %45 = vector.load %arg6[%c0_20, %c0_21, %c0_22] : memref<4x32x32xbf16, #tpu.memory_space<vmem>>, vector<1x32x32xbf16>
    %46 = vector.shape_cast %45 : vector<1x32x32xbf16> to vector<32x32xbf16>
    %47 = vector.extract_strided_slice %40 {offsets = [0, 0, 0], sizes = [2, 8, 16], strides = [1, 1, 1]} : vector<2x8x32xf32> to vector<2x8x16xf32>
    %48 = arith.truncf %47 : vector<2x8x16xf32> to vector<2x8x16xbf16>
    %49 = vector.extract_strided_slice %42 {offsets = [0, 0, 0], sizes = [2, 8, 16], strides = [1, 1, 1]} : vector<2x8x32xf32> to vector<2x8x16xf32>
    %50 = arith.truncf %49 : vector<2x8x16xf32> to vector<2x8x16xbf16>
    %51 = vector.extract_strided_slice %44 {offsets = [0, 0, 0], sizes = [2, 8, 16], strides = [1, 1, 1]} : vector<2x8x32xf32> to vector<2x8x16xf32>
    %52 = arith.truncf %51 : vector<2x8x16xf32> to vector<2x8x16xbf16>
    "tpu.trace_start"() <{level = 10 : i32, message = "bqd,bkd->bqk"}> : () -> ()
    %cst_23 = arith.constant dense<0.000000e+00> : vector<2x8x8xf32>
    %53 = tpu.matmul %48, %50, %cst_23 {dimension_numbers = #tpu.dot_dimension_numbers<[2], [2], [1], [1], [0, 0, 0, 1, 1, 1], [0], [0]>} : vector<2x8x16xbf16>, vector<2x8x16xbf16>, vector<2x8x8xf32> -> vector<2x8x8xf32>
    "tpu.trace_stop"() : () -> ()
    %54 = arith.addf %53, %7 : vector<2x8x8xf32>
    %55 = math.exp %54 : vector<2x8x8xf32>
    %cst_24 = arith.constant dense<0.000000e+00> : vector<2x8xf32>
    %56 = vector.multi_reduction <add>, %55, %cst_24 [2] : vector<2x8x8xf32> to vector<2x8xf32>
    %57 = vector.shape_cast %56 : vector<2x8xf32> to vector<2x8x1xf32>
    %58 = vector.broadcast %57 : vector<2x8x1xf32> to vector<2x8x8xf32>
    %59 = arith.divf %55, %58 : vector<2x8x8xf32>
    %60 = arith.truncf %59 : vector<2x8x8xf32> to vector<2x8x8xbf16>
    "tpu.trace_start"() <{level = 10 : i32, message = "bqk,bkd->bqd"}> : () -> ()
    %cst_25 = arith.constant dense<0.000000e+00> : vector<2x8x16xf32>
    %61 = tpu.matmul %60, %52, %cst_25 {dimension_numbers = #tpu.dot_dimension_numbers<[2], [1], [1], [2], [0, 0, 0, 1, 1, 2], [0], [0]>} : vector<2x8x8xbf16>, vector<2x8x16xbf16>, vector<2x8x16xf32> -> vector<2x8x16xf32>
    "tpu.trace_stop"() : () -> ()
    %62 = vector.shape_cast %61 : vector<2x8x16xf32> to vector<16x16xf32>
    %63 = arith.truncf %62 : vector<16x16xf32> to vector<16x16xbf16>
    %64 = vector.extract_strided_slice %46 {offsets = [0, 0], sizes = [16, 32], strides = [1, 1]} : vector<32x32xbf16> to vector<16x32xbf16>
    %cst_26 = arith.constant dense<0.000000e+00> : vector<16x32xf32>
    %65 = tpu.matmul %63, %64, %cst_26 {dimension_numbers = #tpu.dot_dimension_numbers<[1], [0], [0], [1], [0, 0, 1, 1], [], []>} : vector<16x16xbf16>, vector<16x32xbf16>, vector<16x32xf32> -> vector<16x32xf32>
    %66 = vector.extract_strided_slice %40 {offsets = [0, 0, 16], sizes = [2, 8, 16], strides = [1, 1, 1]} : vector<2x8x32xf32> to vector<2x8x16xf32>
    %67 = arith.truncf %66 : vector<2x8x16xf32> to vector<2x8x16xbf16>
    %68 = vector.extract_strided_slice %42 {offsets = [0, 0, 16], sizes = [2, 8, 16], strides = [1, 1, 1]} : vector<2x8x32xf32> to vector<2x8x16xf32>
    %69 = arith.truncf %68 : vector<2x8x16xf32> to vector<2x8x16xbf16>
    %70 = vector.extract_strided_slice %44 {offsets = [0, 0, 16], sizes = [2, 8, 16], strides = [1, 1, 1]} : vector<2x8x32xf32> to vector<2x8x16xf32>
    %71 = arith.truncf %70 : vector<2x8x16xf32> to vector<2x8x16xbf16>
    "tpu.trace_start"() <{level = 10 : i32, message = "bqd,bkd->bqk"}> : () -> ()
    %cst_27 = arith.constant dense<0.000000e+00> : vector<2x8x8xf32>
    %72 = tpu.matmul %67, %69, %cst_27 {dimension_numbers = #tpu.dot_dimension_numbers<[2], [2], [1], [1], [0, 0, 0, 1, 1, 1], [0], [0]>} : vector<2x8x16xbf16>, vector<2x8x16xbf16>, vector<2x8x8xf32> -> vector<2x8x8xf32>
    "tpu.trace_stop"() : () -> ()
    %73 = arith.addf %72, %7 : vector<2x8x8xf32>
    %74 = math.exp %73 : vector<2x8x8xf32>
    %cst_28 = arith.constant dense<0.000000e+00> : vector<2x8xf32>
    %75 = vector.multi_reduction <add>, %74, %cst_28 [2] : vector<2x8x8xf32> to vector<2x8xf32>
    %76 = vector.shape_cast %75 : vector<2x8xf32> to vector<2x8x1xf32>
    %77 = vector.broadcast %76 : vector<2x8x1xf32> to vector<2x8x8xf32>
    %78 = arith.divf %74, %77 : vector<2x8x8xf32>
    %79 = arith.truncf %78 : vector<2x8x8xf32> to vector<2x8x8xbf16>
    "tpu.trace_start"() <{level = 10 : i32, message = "bqk,bkd->bqd"}> : () -> ()
    %cst_29 = arith.constant dense<0.000000e+00> : vector<2x8x16xf32>
    %80 = tpu.matmul %79, %71, %cst_29 {dimension_numbers = #tpu.dot_dimension_numbers<[2], [1], [1], [2], [0, 0, 0, 1, 1, 2], [0], [0]>} : vector<2x8x8xbf16>, vector<2x8x16xbf16>, vector<2x8x16xf32> -> vector<2x8x16xf32>
    "tpu.trace_stop"() : () -> ()
    %81 = vector.shape_cast %80 : vector<2x8x16xf32> to vector<16x16xf32>
    %82 = arith.truncf %81 : vector<16x16xf32> to vector<16x16xbf16>
    %83 = vector.extract_strided_slice %46 {offsets = [16, 0], sizes = [16, 32], strides = [1, 1]} : vector<32x32xbf16> to vector<16x32xbf16>
    %cst_30 = arith.constant dense<0.000000e+00> : vector<16x32xf32>
    %84 = tpu.matmul %82, %83, %cst_30 {dimension_numbers = #tpu.dot_dimension_numbers<[1], [0], [0], [1], [0, 0, 1, 1], [], []>} : vector<16x16xbf16>, vector<16x32xbf16>, vector<16x32xf32> -> vector<16x32xf32>
    %85 = arith.addf %65, %84 : vector<16x32xf32>
    %c0_31 = arith.constant 0 : index
    %c0_32 = arith.constant 0 : index
    %c0_33 = arith.constant 0 : index
    %86 = vector.load %arg7[%c0_31, %c0_32, %c0_33] : memref<4x1x32xf32, #tpu.memory_space<vmem>>, vector<1x1x32xf32>
    %87 = vector.shape_cast %86 : vector<1x1x32xf32> to vector<1x32xf32>
    %88 = vector.broadcast %87 : vector<1x32xf32> to vector<16x32xf32>
    %89 = arith.addf %85, %88 : vector<16x32xf32>
    %90 = arith.addf %89, %30 : vector<16x32xf32>
    %c0_34 = arith.constant 0 : index
    %c0_35 = arith.constant 0 : index
    %c0_36 = arith.constant 0 : index
    %91 = vector.load %arg8[%c0_34, %c0_35, %c0_36] : memref<4x1x32xf32, #tpu.memory_space<vmem>>, vector<1x1x32xf32>
    %92 = vector.shape_cast %91 : vector<1x1x32xf32> to vector<1x32xf32>
    %c0_37 = arith.constant 0 : index
    %c0_38 = arith.constant 0 : index
    %c0_39 = arith.constant 0 : index
    %93 = vector.load %arg9[%c0_37, %c0_38, %c0_39] : memref<4x1x32xf32, #tpu.memory_space<vmem>>, vector<1x1x32xf32>
    %94 = vector.shape_cast %93 : vector<1x1x32xf32> to vector<1x32xf32>
    %cst_40 = arith.constant dense<0.000000e+00> : vector<16xf32>
    %95 = vector.multi_reduction <add>, %90, %cst_40 [1] : vector<16x32xf32> to vector<16xf32>
    %96 = vector.shape_cast %95 : vector<16xf32> to vector<16x1xf32>
    %cst_41 = arith.constant 3.125000e-02 : f32
    %97 = vector.broadcast %cst_41 : f32 to vector<16x1xf32>
    %98 = arith.mulf %96, %97 : vector<16x1xf32>
    %99 = vector.broadcast %98 : vector<16x1xf32> to vector<16x32xf32>
    %100 = arith.subf %90, %99 : vector<16x32xf32>
    %101 = arith.mulf %100, %100 : vector<16x32xf32>
    %cst_42 = arith.constant dense<0.000000e+00> : vector<16xf32>
    %102 = vector.multi_reduction <add>, %101, %cst_42 [1] : vector<16x32xf32> to vector<16xf32>
    %103 = vector.shape_cast %102 : vector<16xf32> to vector<16x1xf32>
    %cst_43 = arith.constant 3.125000e-02 : f32
    %104 = vector.broadcast %cst_43 : f32 to vector<16x1xf32>
    %105 = arith.mulf %103, %104 : vector<16x1xf32>
    %cst_44 = arith.constant 9.99999996E-13 : f32
    %106 = vector.broadcast %cst_44 : f32 to vector<16x1xf32>
    %107 = arith.addf %105, %106 : vector<16x1xf32>
    %108 = math.rsqrt %107 : vector<16x1xf32>
    %109 = vector.broadcast %108 : vector<16x1xf32> to vector<16x32xf32>
    %110 = arith.mulf %100, %109 : vector<16x32xf32>
    %111 = vector.broadcast %92 : vector<1x32xf32> to vector<16x32xf32>
    %112 = arith.mulf %110, %111 : vector<16x32xf32>
    %113 = vector.broadcast %94 : vector<1x32xf32> to vector<16x32xf32>
    %114 = arith.addf %112, %113 : vector<16x32xf32>
    %115 = arith.truncf %114 : vector<16x32xf32> to vector<16x32xbf16>
    %c0_45 = arith.constant 0 : index
    %c0_46 = arith.constant 0 : index
    %c0_47 = arith.constant 0 : index
    %116 = vector.load %arg10[%c0_45, %c0_46, %c0_47] : memref<4x32x64xbf16, #tpu.memory_space<vmem>>, vector<1x32x64xbf16>
    %117 = vector.shape_cast %116 : vector<1x32x64xbf16> to vector<32x64xbf16>
    %cst_48 = arith.constant dense<0.000000e+00> : vector<16x64xf32>
    %118 = tpu.matmul %115, %117, %cst_48 {dimension_numbers = #tpu.dot_dimension_numbers<[1], [0], [0], [1], [0, 0, 1, 1], [], []>} : vector<16x32xbf16>, vector<32x64xbf16>, vector<16x64xf32> -> vector<16x64xf32>
    %c0_49 = arith.constant 0 : index
    %c0_50 = arith.constant 0 : index
    %c0_51 = arith.constant 0 : index
    %119 = vector.load %arg11[%c0_49, %c0_50, %c0_51] : memref<4x1x64xf32, #tpu.memory_space<vmem>>, vector<1x1x64xf32>
    %120 = vector.shape_cast %119 : vector<1x1x64xf32> to vector<1x64xf32>
    %121 = vector.broadcast %120 : vector<1x64xf32> to vector<16x64xf32>
    %122 = arith.addf %118, %121 : vector<16x64xf32>
    %cst_52 = arith.constant 5.000000e-01 : f32
    %123 = vector.broadcast %cst_52 : f32 to vector<16x64xf32>
    %124 = arith.mulf %123, %122 : vector<16x64xf32>
    %cst_53 = arith.constant 4.471500e-02 : f32
    %125 = vector.broadcast %cst_53 : f32 to vector<16x64xf32>
    %126 = arith.mulf %125, %122 : vector<16x64xf32>
    %127 = arith.mulf %126, %122 : vector<16x64xf32>
    %128 = arith.mulf %127, %122 : vector<16x64xf32>
    %129 = arith.addf %122, %128 : vector<16x64xf32>
    %cst_54 = arith.constant 0.797884583 : f32
    %130 = vector.broadcast %cst_54 : f32 to vector<16x64xf32>
    %131 = arith.mulf %130, %129 : vector<16x64xf32>
    %132 = math.tanh %131 : vector<16x64xf32>
    %cst_55 = arith.constant 1.000000e+00 : f32
    %133 = vector.broadcast %cst_55 : f32 to vector<16x64xf32>
    %134 = arith.addf %133, %132 : vector<16x64xf32>
    %135 = arith.mulf %124, %134 : vector<16x64xf32>
    %136 = arith.truncf %135 : vector<16x64xf32> to vector<16x64xbf16>
    %c0_56 = arith.constant 0 : index
    %c0_57 = arith.constant 0 : index
    %c0_58 = arith.constant 0 : index
    %137 = vector.load %arg12[%c0_56, %c0_57, %c0_58] : memref<4x64x32xbf16, #tpu.memory_space<vmem>>, vector<1x64x32xbf16>
    %138 = vector.shape_cast %137 : vector<1x64x32xbf16> to vector<64x32xbf16>
    %cst_59 = arith.constant dense<0.000000e+00> : vector<16x32xf32>
    %139 = tpu.matmul %136, %138, %cst_59 {dimension_numbers = #tpu.dot_dimension_numbers<[1], [0], [0], [1], [0, 0, 1, 1], [], []>} : vector<16x64xbf16>, vector<64x32xbf16>, vector<16x32xf32> -> vector<16x32xf32>
    %c0_60 = arith.constant 0 : index
    %c0_61 = arith.constant 0 : index
    %c0_62 = arith.constant 0 : index
    %140 = vector.load %arg13[%c0_60, %c0_61, %c0_62] : memref<4x1x32xf32, #tpu.memory_space<vmem>>, vector<1x1x32xf32>
    %141 = vector.shape_cast %140 : vector<1x1x32xf32> to vector<1x32xf32>
    %142 = vector.broadcast %141 : vector<1x32xf32> to vector<16x32xf32>
    %143 = arith.addf %139, %142 : vector<16x32xf32>
    %144 = arith.addf %143, %114 : vector<16x32xf32>
    %c0_63 = arith.constant 0 : index
    %c0_64 = arith.constant 0 : index
    %c0_65 = arith.constant 0 : index
    %145 = vector.load %arg14[%c0_63, %c0_64, %c0_65] : memref<4x1x32xf32, #tpu.memory_space<vmem>>, vector<1x1x32xf32>
    %146 = vector.shape_cast %145 : vector<1x1x32xf32> to vector<1x32xf32>
    %c0_66 = arith.constant 0 : index
    %c0_67 = arith.constant 0 : index
    %c0_68 = arith.constant 0 : index
    %147 = vector.load %arg15[%c0_66, %c0_67, %c0_68] : memref<4x1x32xf32, #tpu.memory_space<vmem>>, vector<1x1x32xf32>
    %148 = vector.shape_cast %147 : vector<1x1x32xf32> to vector<1x32xf32>
    %cst_69 = arith.constant dense<0.000000e+00> : vector<16xf32>
    %149 = vector.multi_reduction <add>, %144, %cst_69 [1] : vector<16x32xf32> to vector<16xf32>
    %150 = vector.shape_cast %149 : vector<16xf32> to vector<16x1xf32>
    %cst_70 = arith.constant 3.125000e-02 : f32
    %151 = vector.broadcast %cst_70 : f32 to vector<16x1xf32>
    %152 = arith.mulf %150, %151 : vector<16x1xf32>
    %153 = vector.broadcast %152 : vector<16x1xf32> to vector<16x32xf32>
    %154 = arith.subf %144, %153 : vector<16x32xf32>
    %155 = arith.mulf %154, %154 : vector<16x32xf32>
    %cst_71 = arith.constant dense<0.000000e+00> : vector<16xf32>
    %156 = vector.multi_reduction <add>, %155, %cst_71 [1] : vector<16x32xf32> to vector<16xf32>
    %157 = vector.shape_cast %156 : vector<16xf32> to vector<16x1xf32>
    %cst_72 = arith.constant 3.125000e-02 : f32
    %158 = vector.broadcast %cst_72 : f32 to vector<16x1xf32>
    %159 = arith.mulf %157, %158 : vector<16x1xf32>
    %cst_73 = arith.constant 9.99999996E-13 : f32
    %160 = vector.broadcast %cst_73 : f32 to vector<16x1xf32>
    %161 = arith.addf %159, %160 : vector<16x1xf32>
    %162 = math.rsqrt %161 : vector<16x1xf32>
    %163 = vector.broadcast %162 : vector<16x1xf32> to vector<16x32xf32>
    %164 = arith.mulf %154, %163 : vector<16x32xf32>
    %165 = vector.broadcast %146 : vector<1x32xf32> to vector<16x32xf32>
    %166 = arith.mulf %164, %165 : vector<16x32xf32>
    %167 = vector.broadcast %148 : vector<1x32xf32> to vector<16x32xf32>
    %168 = arith.addf %166, %167 : vector<16x32xf32>
    %169 = arith.truncf %168 : vector<16x32xf32> to vector<16x32xbf16>
    %c1 = arith.constant 1 : index
    %c0_74 = arith.constant 0 : index
    %c0_75 = arith.constant 0 : index
    %170 = vector.load %arg4[%c1, %c0_74, %c0_75] : memref<4x32x128xbf16, #tpu.memory_space<vmem>>, vector<1x32x128xbf16>
    %171 = vector.shape_cast %170 : vector<1x32x128xbf16> to vector<32x128xbf16>
    %cst_76 = arith.constant dense<0.000000e+00> : vector<16x128xf32>
    %172 = tpu.matmul %169, %171, %cst_76 {dimension_numbers = #tpu.dot_dimension_numbers<[1], [0], [0], [1], [0, 0, 1, 1], [], []>} : vector<16x32xbf16>, vector<32x128xbf16>, vector<16x128xf32> -> vector<16x128xf32>
    %c1_77 = arith.constant 1 : index
    %c0_78 = arith.constant 0 : index
    %c0_79 = arith.constant 0 : index
    %173 = vector.load %arg5[%c1_77, %c0_78, %c0_79] : memref<4x1x128xf32, #tpu.memory_space<vmem>>, vector<1x1x128xf32>
    %174 = vector.shape_cast %173 : vector<1x1x128xf32> to vector<1x128xf32>
    %175 = vector.broadcast %174 : vector<1x128xf32> to vector<16x128xf32>
    %176 = arith.addf %172, %175 : vector<16x128xf32>
    %177 = vector.extract_strided_slice %176 {offsets = [0, 0], sizes = [16, 32], strides = [1, 1]} : vector<16x128xf32> to vector<16x32xf32>
    %178 = vector.shape_cast %177 : vector<16x32xf32> to vector<2x8x32xf32>
    %179 = vector.extract_strided_slice %176 {offsets = [0, 32], sizes = [16, 32], strides = [1, 1]} : vector<16x128xf32> to vector<16x32xf32>
    %180 = vector.shape_cast %179 : vector<16x32xf32> to vector<2x8x32xf32>
    %181 = vector.extract_strided_slice %176 {offsets = [0, 64], sizes = [16, 32], strides = [1, 1]} : vector<16x128xf32> to vector<16x32xf32>
    %182 = vector.shape_cast %181 : vector<16x32xf32> to vector<2x8x32xf32>
    %c1_80 = arith.constant 1 : index
    %c0_81 = arith.constant 0 : index
    %c0_82 = arith.constant 0 : index
    %183 = vector.load %arg6[%c1_80, %c0_81, %c0_82] : memref<4x32x32xbf16, #tpu.memory_space<vmem>>, vector<1x32x32xbf16>
    %184 = vector.shape_cast %183 : vector<1x32x32xbf16> to vector<32x32xbf16>
    %185 = vector.extract_strided_slice %178 {offsets = [0, 0, 0], sizes = [2, 8, 16], strides = [1, 1, 1]} : vector<2x8x32xf32> to vector<2x8x16xf32>
    %186 = arith.truncf %185 : vector<2x8x16xf32> to vector<2x8x16xbf16>
    %187 = vector.extract_strided_slice %180 {offsets = [0, 0, 0], sizes = [2, 8, 16], strides = [1, 1, 1]} : vector<2x8x32xf32> to vector<2x8x16xf32>
    %188 = arith.truncf %187 : vector<2x8x16xf32> to vector<2x8x16xbf16>
    %189 = vector.extract_strided_slice %182 {offsets = [0, 0, 0], sizes = [2, 8, 16], strides = [1, 1, 1]} : vector<2x8x32xf32> to vector<2x8x16xf32>
    %190 = arith.truncf %189 : vector<2x8x16xf32> to vector<2x8x16xbf16>
    "tpu.trace_start"() <{level = 10 : i32, message = "bqd,bkd->bqk"}> : () -> ()
    %cst_83 = arith.constant dense<0.000000e+00> : vector<2x8x8xf32>
    %191 = tpu.matmul %186, %188, %cst_83 {dimension_numbers = #tpu.dot_dimension_numbers<[2], [2], [1], [1], [0, 0, 0, 1, 1, 1], [0], [0]>} : vector<2x8x16xbf16>, vector<2x8x16xbf16>, vector<2x8x8xf32> -> vector<2x8x8xf32>
    "tpu.trace_stop"() : () -> ()
    %192 = arith.addf %191, %7 : vector<2x8x8xf32>
    %193 = math.exp %192 : vector<2x8x8xf32>
    %cst_84 = arith.constant dense<0.000000e+00> : vector<2x8xf32>
    %194 = vector.multi_reduction <add>, %193, %cst_84 [2] : vector<2x8x8xf32> to vector<2x8xf32>
    %195 = vector.shape_cast %194 : vector<2x8xf32> to vector<2x8x1xf32>
    %196 = vector.broadcast %195 : vector<2x8x1xf32> to vector<2x8x8xf32>
    %197 = arith.divf %193, %196 : vector<2x8x8xf32>
    %198 = arith.truncf %197 : vector<2x8x8xf32> to vector<2x8x8xbf16>
    "tpu.trace_start"() <{level = 10 : i32, message = "bqk,bkd->bqd"}> : () -> ()
    %cst_85 = arith.constant dense<0.000000e+00> : vector<2x8x16xf32>
    %199 = tpu.matmul %198, %190, %cst_85 {dimension_numbers = #tpu.dot_dimension_numbers<[2], [1], [1], [2], [0, 0, 0, 1, 1, 2], [0], [0]>} : vector<2x8x8xbf16>, vector<2x8x16xbf16>, vector<2x8x16xf32> -> vector<2x8x16xf32>
    "tpu.trace_stop"() : () -> ()
    %200 = vector.shape_cast %199 : vector<2x8x16xf32> to vector<16x16xf32>
    %201 = arith.truncf %200 : vector<16x16xf32> to vector<16x16xbf16>
    %202 = vector.extract_strided_slice %184 {offsets = [0, 0], sizes = [16, 32], strides = [1, 1]} : vector<32x32xbf16> to vector<16x32xbf16>
    %cst_86 = arith.constant dense<0.000000e+00> : vector<16x32xf32>
    %203 = tpu.matmul %201, %202, %cst_86 {dimension_numbers = #tpu.dot_dimension_numbers<[1], [0], [0], [1], [0, 0, 1, 1], [], []>} : vector<16x16xbf16>, vector<16x32xbf16>, vector<16x32xf32> -> vector<16x32xf32>
    %204 = vector.extract_strided_slice %178 {offsets = [0, 0, 16], sizes = [2, 8, 16], strides = [1, 1, 1]} : vector<2x8x32xf32> to vector<2x8x16xf32>
    %205 = arith.truncf %204 : vector<2x8x16xf32> to vector<2x8x16xbf16>
    %206 = vector.extract_strided_slice %180 {offsets = [0, 0, 16], sizes = [2, 8, 16], strides = [1, 1, 1]} : vector<2x8x32xf32> to vector<2x8x16xf32>
    %207 = arith.truncf %206 : vector<2x8x16xf32> to vector<2x8x16xbf16>
    %208 = vector.extract_strided_slice %182 {offsets = [0, 0, 16], sizes = [2, 8, 16], strides = [1, 1, 1]} : vector<2x8x32xf32> to vector<2x8x16xf32>
    %209 = arith.truncf %208 : vector<2x8x16xf32> to vector<2x8x16xbf16>
    "tpu.trace_start"() <{level = 10 : i32, message = "bqd,bkd->bqk"}> : () -> ()
    %cst_87 = arith.constant dense<0.000000e+00> : vector<2x8x8xf32>
    %210 = tpu.matmul %205, %207, %cst_87 {dimension_numbers = #tpu.dot_dimension_numbers<[2], [2], [1], [1], [0, 0, 0, 1, 1, 1], [0], [0]>} : vector<2x8x16xbf16>, vector<2x8x16xbf16>, vector<2x8x8xf32> -> vector<2x8x8xf32>
    "tpu.trace_stop"() : () -> ()
    %211 = arith.addf %210, %7 : vector<2x8x8xf32>
    %212 = math.exp %211 : vector<2x8x8xf32>
    %cst_88 = arith.constant dense<0.000000e+00> : vector<2x8xf32>
    %213 = vector.multi_reduction <add>, %212, %cst_88 [2] : vector<2x8x8xf32> to vector<2x8xf32>
    %214 = vector.shape_cast %213 : vector<2x8xf32> to vector<2x8x1xf32>
    %215 = vector.broadcast %214 : vector<2x8x1xf32> to vector<2x8x8xf32>
    %216 = arith.divf %212, %215 : vector<2x8x8xf32>
    %217 = arith.truncf %216 : vector<2x8x8xf32> to vector<2x8x8xbf16>
    "tpu.trace_start"() <{level = 10 : i32, message = "bqk,bkd->bqd"}> : () -> ()
    %cst_89 = arith.constant dense<0.000000e+00> : vector<2x8x16xf32>
    %218 = tpu.matmul %217, %209, %cst_89 {dimension_numbers = #tpu.dot_dimension_numbers<[2], [1], [1], [2], [0, 0, 0, 1, 1, 2], [0], [0]>} : vector<2x8x8xbf16>, vector<2x8x16xbf16>, vector<2x8x16xf32> -> vector<2x8x16xf32>
    "tpu.trace_stop"() : () -> ()
    %219 = vector.shape_cast %218 : vector<2x8x16xf32> to vector<16x16xf32>
    %220 = arith.truncf %219 : vector<16x16xf32> to vector<16x16xbf16>
    %221 = vector.extract_strided_slice %184 {offsets = [16, 0], sizes = [16, 32], strides = [1, 1]} : vector<32x32xbf16> to vector<16x32xbf16>
    %cst_90 = arith.constant dense<0.000000e+00> : vector<16x32xf32>
    %222 = tpu.matmul %220, %221, %cst_90 {dimension_numbers = #tpu.dot_dimension_numbers<[1], [0], [0], [1], [0, 0, 1, 1], [], []>} : vector<16x16xbf16>, vector<16x32xbf16>, vector<16x32xf32> -> vector<16x32xf32>
    %223 = arith.addf %203, %222 : vector<16x32xf32>
    %c1_91 = arith.constant 1 : index
    %c0_92 = arith.constant 0 : index
    %c0_93 = arith.constant 0 : index
    %224 = vector.load %arg7[%c1_91, %c0_92, %c0_93] : memref<4x1x32xf32, #tpu.memory_space<vmem>>, vector<1x1x32xf32>
    %225 = vector.shape_cast %224 : vector<1x1x32xf32> to vector<1x32xf32>
    %226 = vector.broadcast %225 : vector<1x32xf32> to vector<16x32xf32>
    %227 = arith.addf %223, %226 : vector<16x32xf32>
    %228 = arith.addf %227, %168 : vector<16x32xf32>
    %c1_94 = arith.constant 1 : index
    %c0_95 = arith.constant 0 : index
    %c0_96 = arith.constant 0 : index
    %229 = vector.load %arg8[%c1_94, %c0_95, %c0_96] : memref<4x1x32xf32, #tpu.memory_space<vmem>>, vector<1x1x32xf32>
    %230 = vector.shape_cast %229 : vector<1x1x32xf32> to vector<1x32xf32>
    %c1_97 = arith.constant 1 : index
    %c0_98 = arith.constant 0 : index
    %c0_99 = arith.constant 0 : index
    %231 = vector.load %arg9[%c1_97, %c0_98, %c0_99] : memref<4x1x32xf32, #tpu.memory_space<vmem>>, vector<1x1x32xf32>
    %232 = vector.shape_cast %231 : vector<1x1x32xf32> to vector<1x32xf32>
    %cst_100 = arith.constant dense<0.000000e+00> : vector<16xf32>
    %233 = vector.multi_reduction <add>, %228, %cst_100 [1] : vector<16x32xf32> to vector<16xf32>
    %234 = vector.shape_cast %233 : vector<16xf32> to vector<16x1xf32>
    %cst_101 = arith.constant 3.125000e-02 : f32
    %235 = vector.broadcast %cst_101 : f32 to vector<16x1xf32>
    %236 = arith.mulf %234, %235 : vector<16x1xf32>
    %237 = vector.broadcast %236 : vector<16x1xf32> to vector<16x32xf32>
    %238 = arith.subf %228, %237 : vector<16x32xf32>
    %239 = arith.mulf %238, %238 : vector<16x32xf32>
    %cst_102 = arith.constant dense<0.000000e+00> : vector<16xf32>
    %240 = vector.multi_reduction <add>, %239, %cst_102 [1] : vector<16x32xf32> to vector<16xf32>
    %241 = vector.shape_cast %240 : vector<16xf32> to vector<16x1xf32>
    %cst_103 = arith.constant 3.125000e-02 : f32
    %242 = vector.broadcast %cst_103 : f32 to vector<16x1xf32>
    %243 = arith.mulf %241, %242 : vector<16x1xf32>
    %cst_104 = arith.constant 9.99999996E-13 : f32
    %244 = vector.broadcast %cst_104 : f32 to vector<16x1xf32>
    %245 = arith.addf %243, %244 : vector<16x1xf32>
    %246 = math.rsqrt %245 : vector<16x1xf32>
    %247 = vector.broadcast %246 : vector<16x1xf32> to vector<16x32xf32>
    %248 = arith.mulf %238, %247 : vector<16x32xf32>
    %249 = vector.broadcast %230 : vector<1x32xf32> to vector<16x32xf32>
    %250 = arith.mulf %248, %249 : vector<16x32xf32>
    %251 = vector.broadcast %232 : vector<1x32xf32> to vector<16x32xf32>
    %252 = arith.addf %250, %251 : vector<16x32xf32>
    %253 = arith.truncf %252 : vector<16x32xf32> to vector<16x32xbf16>
    %c1_105 = arith.constant 1 : index
    %c0_106 = arith.constant 0 : index
    %c0_107 = arith.constant 0 : index
    %254 = vector.load %arg10[%c1_105, %c0_106, %c0_107] : memref<4x32x64xbf16, #tpu.memory_space<vmem>>, vector<1x32x64xbf16>
    %255 = vector.shape_cast %254 : vector<1x32x64xbf16> to vector<32x64xbf16>
    %cst_108 = arith.constant dense<0.000000e+00> : vector<16x64xf32>
    %256 = tpu.matmul %253, %255, %cst_108 {dimension_numbers = #tpu.dot_dimension_numbers<[1], [0], [0], [1], [0, 0, 1, 1], [], []>} : vector<16x32xbf16>, vector<32x64xbf16>, vector<16x64xf32> -> vector<16x64xf32>
    %c1_109 = arith.constant 1 : index
    %c0_110 = arith.constant 0 : index
    %c0_111 = arith.constant 0 : index
    %257 = vector.load %arg11[%c1_109, %c0_110, %c0_111] : memref<4x1x64xf32, #tpu.memory_space<vmem>>, vector<1x1x64xf32>
    %258 = vector.shape_cast %257 : vector<1x1x64xf32> to vector<1x64xf32>
    %259 = vector.broadcast %258 : vector<1x64xf32> to vector<16x64xf32>
    %260 = arith.addf %256, %259 : vector<16x64xf32>
    %cst_112 = arith.constant 5.000000e-01 : f32
    %261 = vector.broadcast %cst_112 : f32 to vector<16x64xf32>
    %262 = arith.mulf %261, %260 : vector<16x64xf32>
    %cst_113 = arith.constant 4.471500e-02 : f32
    %263 = vector.broadcast %cst_113 : f32 to vector<16x64xf32>
    %264 = arith.mulf %263, %260 : vector<16x64xf32>
    %265 = arith.mulf %264, %260 : vector<16x64xf32>
    %266 = arith.mulf %265, %260 : vector<16x64xf32>
    %267 = arith.addf %260, %266 : vector<16x64xf32>
    %cst_114 = arith.constant 0.797884583 : f32
    %268 = vector.broadcast %cst_114 : f32 to vector<16x64xf32>
    %269 = arith.mulf %268, %267 : vector<16x64xf32>
    %270 = math.tanh %269 : vector<16x64xf32>
    %cst_115 = arith.constant 1.000000e+00 : f32
    %271 = vector.broadcast %cst_115 : f32 to vector<16x64xf32>
    %272 = arith.addf %271, %270 : vector<16x64xf32>
    %273 = arith.mulf %262, %272 : vector<16x64xf32>
    %274 = arith.truncf %273 : vector<16x64xf32> to vector<16x64xbf16>
    %c1_116 = arith.constant 1 : index
    %c0_117 = arith.constant 0 : index
    %c0_118 = arith.constant 0 : index
    %275 = vector.load %arg12[%c1_116, %c0_117, %c0_118] : memref<4x64x32xbf16, #tpu.memory_space<vmem>>, vector<1x64x32xbf16>
    %276 = vector.shape_cast %275 : vector<1x64x32xbf16> to vector<64x32xbf16>
    %cst_119 = arith.constant dense<0.000000e+00> : vector<16x32xf32>
    %277 = tpu.matmul %274, %276, %cst_119 {dimension_numbers = #tpu.dot_dimension_numbers<[1], [0], [0], [1], [0, 0, 1, 1], [], []>} : vector<16x64xbf16>, vector<64x32xbf16>, vector<16x32xf32> -> vector<16x32xf32>
    %c1_120 = arith.constant 1 : index
    %c0_121 = arith.constant 0 : index
    %c0_122 = arith.constant 0 : index
    %278 = vector.load %arg13[%c1_120, %c0_121, %c0_122] : memref<4x1x32xf32, #tpu.memory_space<vmem>>, vector<1x1x32xf32>
    %279 = vector.shape_cast %278 : vector<1x1x32xf32> to vector<1x32xf32>
    %280 = vector.broadcast %279 : vector<1x32xf32> to vector<16x32xf32>
    %281 = arith.addf %277, %280 : vector<16x32xf32>
    %282 = arith.addf %281, %252 : vector<16x32xf32>
    %c1_123 = arith.constant 1 : index
    %c0_124 = arith.constant 0 : index
    %c0_125 = arith.constant 0 : index
    %283 = vector.load %arg14[%c1_123, %c0_124, %c0_125] : memref<4x1x32xf32, #tpu.memory_space<vmem>>, vector<1x1x32xf32>
    %284 = vector.shape_cast %283 : vector<1x1x32xf32> to vector<1x32xf32>
    %c1_126 = arith.constant 1 : index
    %c0_127 = arith.constant 0 : index
    %c0_128 = arith.constant 0 : index
    %285 = vector.load %arg15[%c1_126, %c0_127, %c0_128] : memref<4x1x32xf32, #tpu.memory_space<vmem>>, vector<1x1x32xf32>
    %286 = vector.shape_cast %285 : vector<1x1x32xf32> to vector<1x32xf32>
    %cst_129 = arith.constant dense<0.000000e+00> : vector<16xf32>
    %287 = vector.multi_reduction <add>, %282, %cst_129 [1] : vector<16x32xf32> to vector<16xf32>
    %288 = vector.shape_cast %287 : vector<16xf32> to vector<16x1xf32>
    %cst_130 = arith.constant 3.125000e-02 : f32
    %289 = vector.broadcast %cst_130 : f32 to vector<16x1xf32>
    %290 = arith.mulf %288, %289 : vector<16x1xf32>
    %291 = vector.broadcast %290 : vector<16x1xf32> to vector<16x32xf32>
    %292 = arith.subf %282, %291 : vector<16x32xf32>
    %293 = arith.mulf %292, %292 : vector<16x32xf32>
    %cst_131 = arith.constant dense<0.000000e+00> : vector<16xf32>
    %294 = vector.multi_reduction <add>, %293, %cst_131 [1] : vector<16x32xf32> to vector<16xf32>
    %295 = vector.shape_cast %294 : vector<16xf32> to vector<16x1xf32>
    %cst_132 = arith.constant 3.125000e-02 : f32
    %296 = vector.broadcast %cst_132 : f32 to vector<16x1xf32>
    %297 = arith.mulf %295, %296 : vector<16x1xf32>
    %cst_133 = arith.constant 9.99999996E-13 : f32
    %298 = vector.broadcast %cst_133 : f32 to vector<16x1xf32>
    %299 = arith.addf %297, %298 : vector<16x1xf32>
    %300 = math.rsqrt %299 : vector<16x1xf32>
    %301 = vector.broadcast %300 : vector<16x1xf32> to vector<16x32xf32>
    %302 = arith.mulf %292, %301 : vector<16x32xf32>
    %303 = vector.broadcast %284 : vector<1x32xf32> to vector<16x32xf32>
    %304 = arith.mulf %302, %303 : vector<16x32xf32>
    %305 = vector.broadcast %286 : vector<1x32xf32> to vector<16x32xf32>
    %306 = arith.addf %304, %305 : vector<16x32xf32>
    %307 = arith.addf %168, %306 : vector<16x32xf32>
    %308 = arith.truncf %306 : vector<16x32xf32> to vector<16x32xbf16>
    %c2 = arith.constant 2 : index
    %c0_134 = arith.constant 0 : index
    %c0_135 = arith.constant 0 : index
    %309 = vector.load %arg4[%c2, %c0_134, %c0_135] : memref<4x32x128xbf16, #tpu.memory_space<vmem>>, vector<1x32x128xbf16>
    %310 = vector.shape_cast %309 : vector<1x32x128xbf16> to vector<32x128xbf16>
    %cst_136 = arith.constant dense<0.000000e+00> : vector<16x128xf32>
    %311 = tpu.matmul %308, %310, %cst_136 {dimension_numbers = #tpu.dot_dimension_numbers<[1], [0], [0], [1], [0, 0, 1, 1], [], []>} : vector<16x32xbf16>, vector<32x128xbf16>, vector<16x128xf32> -> vector<16x128xf32>
    %c2_137 = arith.constant 2 : index
    %c0_138 = arith.constant 0 : index
    %c0_139 = arith.constant 0 : index
    %312 = vector.load %arg5[%c2_137, %c0_138, %c0_139] : memref<4x1x128xf32, #tpu.memory_space<vmem>>, vector<1x1x128xf32>
    %313 = vector.shape_cast %312 : vector<1x1x128xf32> to vector<1x128xf32>
    %314 = vector.broadcast %313 : vector<1x128xf32> to vector<16x128xf32>
    %315 = arith.addf %311, %314 : vector<16x128xf32>
    %316 = vector.extract_strided_slice %315 {offsets = [0, 0], sizes = [16, 32], strides = [1, 1]} : vector<16x128xf32> to vector<16x32xf32>
    %317 = vector.shape_cast %316 : vector<16x32xf32> to vector<2x8x32xf32>
    %318 = vector.extract_strided_slice %315 {offsets = [0, 32], sizes = [16, 32], strides = [1, 1]} : vector<16x128xf32> to vector<16x32xf32>
    %319 = vector.shape_cast %318 : vector<16x32xf32> to vector<2x8x32xf32>
    %320 = vector.extract_strided_slice %315 {offsets = [0, 64], sizes = [16, 32], strides = [1, 1]} : vector<16x128xf32> to vector<16x32xf32>
    %321 = vector.shape_cast %320 : vector<16x32xf32> to vector<2x8x32xf32>
    %c2_140 = arith.constant 2 : index
    %c0_141 = arith.constant 0 : index
    %c0_142 = arith.constant 0 : index
    %322 = vector.load %arg6[%c2_140, %c0_141, %c0_142] : memref<4x32x32xbf16, #tpu.memory_space<vmem>>, vector<1x32x32xbf16>
    %323 = vector.shape_cast %322 : vector<1x32x32xbf16> to vector<32x32xbf16>
    %324 = vector.extract_strided_slice %317 {offsets = [0, 0, 0], sizes = [2, 8, 16], strides = [1, 1, 1]} : vector<2x8x32xf32> to vector<2x8x16xf32>
    %325 = arith.truncf %324 : vector<2x8x16xf32> to vector<2x8x16xbf16>
    %326 = vector.extract_strided_slice %319 {offsets = [0, 0, 0], sizes = [2, 8, 16], strides = [1, 1, 1]} : vector<2x8x32xf32> to vector<2x8x16xf32>
    %327 = arith.truncf %326 : vector<2x8x16xf32> to vector<2x8x16xbf16>
    %328 = vector.extract_strided_slice %321 {offsets = [0, 0, 0], sizes = [2, 8, 16], strides = [1, 1, 1]} : vector<2x8x32xf32> to vector<2x8x16xf32>
    %329 = arith.truncf %328 : vector<2x8x16xf32> to vector<2x8x16xbf16>
    "tpu.trace_start"() <{level = 10 : i32, message = "bqd,bkd->bqk"}> : () -> ()
    %cst_143 = arith.constant dense<0.000000e+00> : vector<2x8x8xf32>
    %330 = tpu.matmul %325, %327, %cst_143 {dimension_numbers = #tpu.dot_dimension_numbers<[2], [2], [1], [1], [0, 0, 0, 1, 1, 1], [0], [0]>} : vector<2x8x16xbf16>, vector<2x8x16xbf16>, vector<2x8x8xf32> -> vector<2x8x8xf32>
    "tpu.trace_stop"() : () -> ()
    %331 = arith.addf %330, %7 : vector<2x8x8xf32>
    %332 = math.exp %331 : vector<2x8x8xf32>
    %cst_144 = arith.constant dense<0.000000e+00> : vector<2x8xf32>
    %333 = vector.multi_reduction <add>, %332, %cst_144 [2] : vector<2x8x8xf32> to vector<2x8xf32>
    %334 = vector.shape_cast %333 : vector<2x8xf32> to vector<2x8x1xf32>
    %335 = vector.broadcast %334 : vector<2x8x1xf32> to vector<2x8x8xf32>
    %336 = arith.divf %332, %335 : vector<2x8x8xf32>
    %337 = arith.truncf %336 : vector<2x8x8xf32> to vector<2x8x8xbf16>
    "tpu.trace_start"() <{level = 10 : i32, message = "bqk,bkd->bqd"}> : () -> ()
    %cst_145 = arith.constant dense<0.000000e+00> : vector<2x8x16xf32>
    %338 = tpu.matmul %337, %329, %cst_145 {dimension_numbers = #tpu.dot_dimension_numbers<[2], [1], [1], [2], [0, 0, 0, 1, 1, 2], [0], [0]>} : vector<2x8x8xbf16>, vector<2x8x16xbf16>, vector<2x8x16xf32> -> vector<2x8x16xf32>
    "tpu.trace_stop"() : () -> ()
    %339 = vector.shape_cast %338 : vector<2x8x16xf32> to vector<16x16xf32>
    %340 = arith.truncf %339 : vector<16x16xf32> to vector<16x16xbf16>
    %341 = vector.extract_strided_slice %323 {offsets = [0, 0], sizes = [16, 32], strides = [1, 1]} : vector<32x32xbf16> to vector<16x32xbf16>
    %cst_146 = arith.constant dense<0.000000e+00> : vector<16x32xf32>
    %342 = tpu.matmul %340, %341, %cst_146 {dimension_numbers = #tpu.dot_dimension_numbers<[1], [0], [0], [1], [0, 0, 1, 1], [], []>} : vector<16x16xbf16>, vector<16x32xbf16>, vector<16x32xf32> -> vector<16x32xf32>
    %343 = vector.extract_strided_slice %317 {offsets = [0, 0, 16], sizes = [2, 8, 16], strides = [1, 1, 1]} : vector<2x8x32xf32> to vector<2x8x16xf32>
    %344 = arith.truncf %343 : vector<2x8x16xf32> to vector<2x8x16xbf16>
    %345 = vector.extract_strided_slice %319 {offsets = [0, 0, 16], sizes = [2, 8, 16], strides = [1, 1, 1]} : vector<2x8x32xf32> to vector<2x8x16xf32>
    %346 = arith.truncf %345 : vector<2x8x16xf32> to vector<2x8x16xbf16>
    %347 = vector.extract_strided_slice %321 {offsets = [0, 0, 16], sizes = [2, 8, 16], strides = [1, 1, 1]} : vector<2x8x32xf32> to vector<2x8x16xf32>
    %348 = arith.truncf %347 : vector<2x8x16xf32> to vector<2x8x16xbf16>
    "tpu.trace_start"() <{level = 10 : i32, message = "bqd,bkd->bqk"}> : () -> ()
    %cst_147 = arith.constant dense<0.000000e+00> : vector<2x8x8xf32>
    %349 = tpu.matmul %344, %346, %cst_147 {dimension_numbers = #tpu.dot_dimension_numbers<[2], [2], [1], [1], [0, 0, 0, 1, 1, 1], [0], [0]>} : vector<2x8x16xbf16>, vector<2x8x16xbf16>, vector<2x8x8xf32> -> vector<2x8x8xf32>
    "tpu.trace_stop"() : () -> ()
    %350 = arith.addf %349, %7 : vector<2x8x8xf32>
    %351 = math.exp %350 : vector<2x8x8xf32>
    %cst_148 = arith.constant dense<0.000000e+00> : vector<2x8xf32>
    %352 = vector.multi_reduction <add>, %351, %cst_148 [2] : vector<2x8x8xf32> to vector<2x8xf32>
    %353 = vector.shape_cast %352 : vector<2x8xf32> to vector<2x8x1xf32>
    %354 = vector.broadcast %353 : vector<2x8x1xf32> to vector<2x8x8xf32>
    %355 = arith.divf %351, %354 : vector<2x8x8xf32>
    %356 = arith.truncf %355 : vector<2x8x8xf32> to vector<2x8x8xbf16>
    "tpu.trace_start"() <{level = 10 : i32, message = "bqk,bkd->bqd"}> : () -> ()
    %cst_149 = arith.constant dense<0.000000e+00> : vector<2x8x16xf32>
    %357 = tpu.matmul %356, %348, %cst_149 {dimension_numbers = #tpu.dot_dimension_numbers<[2], [1], [1], [2], [0, 0, 0, 1, 1, 2], [0], [0]>} : vector<2x8x8xbf16>, vector<2x8x16xbf16>, vector<2x8x16xf32> -> vector<2x8x16xf32>
    "tpu.trace_stop"() : () -> ()
    %358 = vector.shape_cast %357 : vector<2x8x16xf32> to vector<16x16xf32>
    %359 = arith.truncf %358 : vector<16x16xf32> to vector<16x16xbf16>
    %360 = vector.extract_strided_slice %323 {offsets = [16, 0], sizes = [16, 32], strides = [1, 1]} : vector<32x32xbf16> to vector<16x32xbf16>
    %cst_150 = arith.constant dense<0.000000e+00> : vector<16x32xf32>
    %361 = tpu.matmul %359, %360, %cst_150 {dimension_numbers = #tpu.dot_dimension_numbers<[1], [0], [0], [1], [0, 0, 1, 1], [], []>} : vector<16x16xbf16>, vector<16x32xbf16>, vector<16x32xf32> -> vector<16x32xf32>
    %362 = arith.addf %342, %361 : vector<16x32xf32>
    %c2_151 = arith.constant 2 : index
    %c0_152 = arith.constant 0 : index
    %c0_153 = arith.constant 0 : index
    %363 = vector.load %arg7[%c2_151, %c0_152, %c0_153] : memref<4x1x32xf32, #tpu.memory_space<vmem>>, vector<1x1x32xf32>
    %364 = vector.shape_cast %363 : vector<1x1x32xf32> to vector<1x32xf32>
    %365 = vector.broadcast %364 : vector<1x32xf32> to vector<16x32xf32>
    %366 = arith.addf %362, %365 : vector<16x32xf32>
    %367 = arith.addf %366, %306 : vector<16x32xf32>
    %c2_154 = arith.constant 2 : index
    %c0_155 = arith.constant 0 : index
    %c0_156 = arith.constant 0 : index
    %368 = vector.load %arg8[%c2_154, %c0_155, %c0_156] : memref<4x1x32xf32, #tpu.memory_space<vmem>>, vector<1x1x32xf32>
    %369 = vector.shape_cast %368 : vector<1x1x32xf32> to vector<1x32xf32>
    %c2_157 = arith.constant 2 : index
    %c0_158 = arith.constant 0 : index
    %c0_159 = arith.constant 0 : index
    %370 = vector.load %arg9[%c2_157, %c0_158, %c0_159] : memref<4x1x32xf32, #tpu.memory_space<vmem>>, vector<1x1x32xf32>
    %371 = vector.shape_cast %370 : vector<1x1x32xf32> to vector<1x32xf32>
    %cst_160 = arith.constant dense<0.000000e+00> : vector<16xf32>
    %372 = vector.multi_reduction <add>, %367, %cst_160 [1] : vector<16x32xf32> to vector<16xf32>
    %373 = vector.shape_cast %372 : vector<16xf32> to vector<16x1xf32>
    %cst_161 = arith.constant 3.125000e-02 : f32
    %374 = vector.broadcast %cst_161 : f32 to vector<16x1xf32>
    %375 = arith.mulf %373, %374 : vector<16x1xf32>
    %376 = vector.broadcast %375 : vector<16x1xf32> to vector<16x32xf32>
    %377 = arith.subf %367, %376 : vector<16x32xf32>
    %378 = arith.mulf %377, %377 : vector<16x32xf32>
    %cst_162 = arith.constant dense<0.000000e+00> : vector<16xf32>
    %379 = vector.multi_reduction <add>, %378, %cst_162 [1] : vector<16x32xf32> to vector<16xf32>
    %380 = vector.shape_cast %379 : vector<16xf32> to vector<16x1xf32>
    %cst_163 = arith.constant 3.125000e-02 : f32
    %381 = vector.broadcast %cst_163 : f32 to vector<16x1xf32>
    %382 = arith.mulf %380, %381 : vector<16x1xf32>
    %cst_164 = arith.constant 9.99999996E-13 : f32
    %383 = vector.broadcast %cst_164 : f32 to vector<16x1xf32>
    %384 = arith.addf %382, %383 : vector<16x1xf32>
    %385 = math.rsqrt %384 : vector<16x1xf32>
    %386 = vector.broadcast %385 : vector<16x1xf32> to vector<16x32xf32>
    %387 = arith.mulf %377, %386 : vector<16x32xf32>
    %388 = vector.broadcast %369 : vector<1x32xf32> to vector<16x32xf32>
    %389 = arith.mulf %387, %388 : vector<16x32xf32>
    %390 = vector.broadcast %371 : vector<1x32xf32> to vector<16x32xf32>
    %391 = arith.addf %389, %390 : vector<16x32xf32>
    %392 = arith.truncf %391 : vector<16x32xf32> to vector<16x32xbf16>
    %c2_165 = arith.constant 2 : index
    %c0_166 = arith.constant 0 : index
    %c0_167 = arith.constant 0 : index
    %393 = vector.load %arg10[%c2_165, %c0_166, %c0_167] : memref<4x32x64xbf16, #tpu.memory_space<vmem>>, vector<1x32x64xbf16>
    %394 = vector.shape_cast %393 : vector<1x32x64xbf16> to vector<32x64xbf16>
    %cst_168 = arith.constant dense<0.000000e+00> : vector<16x64xf32>
    %395 = tpu.matmul %392, %394, %cst_168 {dimension_numbers = #tpu.dot_dimension_numbers<[1], [0], [0], [1], [0, 0, 1, 1], [], []>} : vector<16x32xbf16>, vector<32x64xbf16>, vector<16x64xf32> -> vector<16x64xf32>
    %c2_169 = arith.constant 2 : index
    %c0_170 = arith.constant 0 : index
    %c0_171 = arith.constant 0 : index
    %396 = vector.load %arg11[%c2_169, %c0_170, %c0_171] : memref<4x1x64xf32, #tpu.memory_space<vmem>>, vector<1x1x64xf32>
    %397 = vector.shape_cast %396 : vector<1x1x64xf32> to vector<1x64xf32>
    %398 = vector.broadcast %397 : vector<1x64xf32> to vector<16x64xf32>
    %399 = arith.addf %395, %398 : vector<16x64xf32>
    %cst_172 = arith.constant 5.000000e-01 : f32
    %400 = vector.broadcast %cst_172 : f32 to vector<16x64xf32>
    %401 = arith.mulf %400, %399 : vector<16x64xf32>
    %cst_173 = arith.constant 4.471500e-02 : f32
    %402 = vector.broadcast %cst_173 : f32 to vector<16x64xf32>
    %403 = arith.mulf %402, %399 : vector<16x64xf32>
    %404 = arith.mulf %403, %399 : vector<16x64xf32>
    %405 = arith.mulf %404, %399 : vector<16x64xf32>
    %406 = arith.addf %399, %405 : vector<16x64xf32>
    %cst_174 = arith.constant 0.797884583 : f32
    %407 = vector.broadcast %cst_174 : f32 to vector<16x64xf32>
    %408 = arith.mulf %407, %406 : vector<16x64xf32>
    %409 = math.tanh %408 : vector<16x64xf32>
    %cst_175 = arith.constant 1.000000e+00 : f32
    %410 = vector.broadcast %cst_175 : f32 to vector<16x64xf32>
    %411 = arith.addf %410, %409 : vector<16x64xf32>
    %412 = arith.mulf %401, %411 : vector<16x64xf32>
    %413 = arith.truncf %412 : vector<16x64xf32> to vector<16x64xbf16>
    %c2_176 = arith.constant 2 : index
    %c0_177 = arith.constant 0 : index
    %c0_178 = arith.constant 0 : index
    %414 = vector.load %arg12[%c2_176, %c0_177, %c0_178] : memref<4x64x32xbf16, #tpu.memory_space<vmem>>, vector<1x64x32xbf16>
    %415 = vector.shape_cast %414 : vector<1x64x32xbf16> to vector<64x32xbf16>
    %cst_179 = arith.constant dense<0.000000e+00> : vector<16x32xf32>
    %416 = tpu.matmul %413, %415, %cst_179 {dimension_numbers = #tpu.dot_dimension_numbers<[1], [0], [0], [1], [0, 0, 1, 1], [], []>} : vector<16x64xbf16>, vector<64x32xbf16>, vector<16x32xf32> -> vector<16x32xf32>
    %c2_180 = arith.constant 2 : index
    %c0_181 = arith.constant 0 : index
    %c0_182 = arith.constant 0 : index
    %417 = vector.load %arg13[%c2_180, %c0_181, %c0_182] : memref<4x1x32xf32, #tpu.memory_space<vmem>>, vector<1x1x32xf32>
    %418 = vector.shape_cast %417 : vector<1x1x32xf32> to vector<1x32xf32>
    %419 = vector.broadcast %418 : vector<1x32xf32> to vector<16x32xf32>
    %420 = arith.addf %416, %419 : vector<16x32xf32>
    %421 = arith.addf %420, %391 : vector<16x32xf32>
    %c2_183 = arith.constant 2 : index
    %c0_184 = arith.constant 0 : index
    %c0_185 = arith.constant 0 : index
    %422 = vector.load %arg14[%c2_183, %c0_184, %c0_185] : memref<4x1x32xf32, #tpu.memory_space<vmem>>, vector<1x1x32xf32>
    %423 = vector.shape_cast %422 : vector<1x1x32xf32> to vector<1x32xf32>
    %c2_186 = arith.constant 2 : index
    %c0_187 = arith.constant 0 : index
    %c0_188 = arith.constant 0 : index
    %424 = vector.load %arg15[%c2_186, %c0_187, %c0_188] : memref<4x1x32xf32, #tpu.memory_space<vmem>>, vector<1x1x32xf32>
    %425 = vector.shape_cast %424 : vector<1x1x32xf32> to vector<1x32xf32>
    %cst_189 = arith.constant dense<0.000000e+00> : vector<16xf32>
    %426 = vector.multi_reduction <add>, %421, %cst_189 [1] : vector<16x32xf32> to vector<16xf32>
    %427 = vector.shape_cast %426 : vector<16xf32> to vector<16x1xf32>
    %cst_190 = arith.constant 3.125000e-02 : f32
    %428 = vector.broadcast %cst_190 : f32 to vector<16x1xf32>
    %429 = arith.mulf %427, %428 : vector<16x1xf32>
    %430 = vector.broadcast %429 : vector<16x1xf32> to vector<16x32xf32>
    %431 = arith.subf %421, %430 : vector<16x32xf32>
    %432 = arith.mulf %431, %431 : vector<16x32xf32>
    %cst_191 = arith.constant dense<0.000000e+00> : vector<16xf32>
    %433 = vector.multi_reduction <add>, %432, %cst_191 [1] : vector<16x32xf32> to vector<16xf32>
    %434 = vector.shape_cast %433 : vector<16xf32> to vector<16x1xf32>
    %cst_192 = arith.constant 3.125000e-02 : f32
    %435 = vector.broadcast %cst_192 : f32 to vector<16x1xf32>
    %436 = arith.mulf %434, %435 : vector<16x1xf32>
    %cst_193 = arith.constant 9.99999996E-13 : f32
    %437 = vector.broadcast %cst_193 : f32 to vector<16x1xf32>
    %438 = arith.addf %436, %437 : vector<16x1xf32>
    %439 = math.rsqrt %438 : vector<16x1xf32>
    %440 = vector.broadcast %439 : vector<16x1xf32> to vector<16x32xf32>
    %441 = arith.mulf %431, %440 : vector<16x32xf32>
    %442 = vector.broadcast %423 : vector<1x32xf32> to vector<16x32xf32>
    %443 = arith.mulf %441, %442 : vector<16x32xf32>
    %444 = vector.broadcast %425 : vector<1x32xf32> to vector<16x32xf32>
    %445 = arith.addf %443, %444 : vector<16x32xf32>
    %446 = arith.addf %307, %445 : vector<16x32xf32>
    %c0_194 = arith.constant 0 : index
    %c0_195 = arith.constant 0 : index
    %447 = vector.load %arg16[%c0_194, %c0_195] : memref<16x32xf32, #tpu.memory_space<vmem>>, vector<16x32xf32>
    tpu.vector_store %arg16[%c0_194, %c0_195], %446 {strides = array<i32>} : memref<16x32xf32, #tpu.memory_space<vmem>>, vector<16x32xf32>,
    return
  }
}

</mosaic_0001>

<llo_original>
// kernel: vanilla_bert_layer.1
$region0: #{vanilla_bert_layer.1}
  #allocation0 [shape = 'u32[]', space=smem, size = 0x4, offset = 0x4, fixed_abs, tag = 'smem constant byte address 0x4 - core index']
  #allocation1 [shape = 'u32[144,128]{1,0:T(1,128)}', space=vmem, size = 0x12000, scoped, tag = 'internal scratch']
  %s0 = inlined_call_operand.vmem [shape: f32[16,32], index: 0, kind: input, shape index: {}]
  %s1 = inlined_call_operand.vmem [shape: f32[2,8], index: 1, kind: input, shape index: {}]
  %s2 = inlined_call_operand.vmem [shape: f32[1,32], index: 2, kind: input, shape index: {}]
  %s3 = inlined_call_operand.vmem [shape: f32[1,32], index: 3, kind: input, shape index: {}]
  %s4 = inlined_call_operand.vmem [shape: bf16[4,32,128], index: 4, kind: input, shape index: {}]
  %s5 = inlined_call_operand.vmem [shape: f32[4,1,128], index: 5, kind: input, shape index: {}]
  %s6 = inlined_call_operand.vmem [shape: bf16[4,32,32], index: 6, kind: input, shape index: {}]
  %s7 = inlined_call_operand.vmem [shape: f32[4,1,32], index: 7, kind: input, shape index: {}]
  %s8 = inlined_call_operand.vmem [shape: f32[4,1,32], index: 8, kind: input, shape index: {}]
  %s9 = inlined_call_operand.vmem [shape: f32[4,1,32], index: 9, kind: input, shape index: {}]
  %s10 = inlined_call_operand.vmem [shape: bf16[4,32,64], index: 10, kind: input, shape index: {}]
  %s11 = inlined_call_operand.vmem [shape: f32[4,1,64], index: 11, kind: input, shape index: {}]
  %s12 = inlined_call_operand.vmem [shape: bf16[4,64,32], index: 12, kind: input, shape index: {}]
  %s13 = inlined_call_operand.vmem [shape: f32[4,1,32], index: 13, kind: input, shape index: {}]
  %s14 = inlined_call_operand.vmem [shape: f32[4,1,32], index: 14, kind: input, shape index: {}]
  %s15 = inlined_call_operand.vmem [shape: f32[4,1,32], index: 15, kind: input, shape index: {}]
  %s16 = inlined_call_operand.hbm [shape: f32[16,32], index: 16, kind: output, shape index: {}]
  %s17 = sld [smem:[#allocation0]]
  $region74: #{vanilla_bert_layer.1} parent=0
    _
  %s19 = ssub.s32 1, %s17
  %s20 = scalar_select 0, %s19, %s17
  $region1: #{vanilla_bert_layer.1} parent=0
    #allocation2 [shape = 'u8[8192]{0}', space=vmem, size = 0x2000, scoped, tag = 'output window, operand 0, single buffered']
    #allocation3 [shape = 's32[1]{0}', space=sflag, size = 0x4, scoped, tag = 'scoped memory for vanilla_bert_layer.1']
    %21 = vsyncpa [#allocation3], 0
    // Predicated region
    $region2: #{vanilla_bert_layer.1} parent=1 // pred_check
      _
    $region3: #{vanilla_bert_layer.1} parent=1 // pred_check_branch
      %23 = sbr.rel (0) target = $region5
    $region4: #{vanilla_bert_layer.1} parent=1 // pred_region
      _
    $region5: #{vanilla_bert_layer.1} parent=1 // pred_fallthru
      _
    // Predicated region
    $region6: #{vanilla_bert_layer.1} parent=1 // pred_check
      _
    $region7: #{vanilla_bert_layer.1} parent=1 // pred_check_branch
      %25 = sbr.rel (0) target = $region9
    $region8: #{vanilla_bert_layer.1} parent=1 // pred_region
      _
    $region9: #{vanilla_bert_layer.1} parent=1 // pred_fallthru
      _
    // Predicated region
    $region10: #{vanilla_bert_layer.1} parent=1 // pred_check
      _
    $region11: #{vanilla_bert_layer.1} parent=1 // pred_check_branch
      %27 = sbr.rel (0) target = $region13
    $region12: #{vanilla_bert_layer.1} parent=1 // pred_region
      _
    $region13: #{vanilla_bert_layer.1} parent=1 // pred_fallthru
      _
    // Predicated region
    $region14: #{vanilla_bert_layer.1} parent=1 // pred_check
      _
    $region15: #{vanilla_bert_layer.1} parent=1 // pred_check_branch
      %29 = sbr.rel (0) target = $region17
    $region16: #{vanilla_bert_layer.1} parent=1 // pred_region
      _
    $region17: #{vanilla_bert_layer.1} parent=1 // pred_fallthru
      _
    // Predicated region
    $region18: #{vanilla_bert_layer.1} parent=1 // pred_check
      _
    $region19: #{vanilla_bert_layer.1} parent=1 // pred_check_branch
      %31 = sbr.rel (0) target = $region21
    $region20: #{vanilla_bert_layer.1} parent=1 // pred_region
      _
    $region21: #{vanilla_bert_layer.1} parent=1 // pred_fallthru
      _
    // Predicated region
    $region22: #{vanilla_bert_layer.1} parent=1 // pred_check
      _
    $region23: #{vanilla_bert_layer.1} parent=1 // pred_check_branch
      %33 = sbr.rel (0) target = $region25
    $region24: #{vanilla_bert_layer.1} parent=1 // pred_region
      _
    $region25: #{vanilla_bert_layer.1} parent=1 // pred_fallthru
      _
    // Predicated region
    $region26: #{vanilla_bert_layer.1} parent=1 // pred_check
      _
    $region27: #{vanilla_bert_layer.1} parent=1 // pred_check_branch
      %35 = sbr.rel (0) target = $region29
    $region28: #{vanilla_bert_layer.1} parent=1 // pred_region
      _
    $region29: #{vanilla_bert_layer.1} parent=1 // pred_fallthru
      _
    // Predicated region
    $region30: #{vanilla_bert_layer.1} parent=1 // pred_check
      _
    $region31: #{vanilla_bert_layer.1} parent=1 // pred_check_branch
      %37 = sbr.rel (0) target = $region33
    $region32: #{vanilla_bert_layer.1} parent=1 // pred_region
      _
    $region33: #{vanilla_bert_layer.1} parent=1 // pred_fallthru
      _
    // Predicated region
    $region34: #{vanilla_bert_layer.1} parent=1 // pred_check
      _
    $region35: #{vanilla_bert_layer.1} parent=1 // pred_check_branch
      %39 = sbr.rel (0) target = $region37
    $region36: #{vanilla_bert_layer.1} parent=1 // pred_region
      _
    $region37: #{vanilla_bert_layer.1} parent=1 // pred_fallthru
      _
    // Predicated region
    $region38: #{vanilla_bert_layer.1} parent=1 // pred_check
      _
    $region39: #{vanilla_bert_layer.1} parent=1 // pred_check_branch
      %41 = sbr.rel (0) target = $region41
    $region40: #{vanilla_bert_layer.1} parent=1 // pred_region
      _
    $region41: #{vanilla_bert_layer.1} parent=1 // pred_fallthru
      _
    // Predicated region
    $region42: #{vanilla_bert_layer.1} parent=1 // pred_check
      _
    $region43: #{vanilla_bert_layer.1} parent=1 // pred_check_branch
      %43 = sbr.rel (0) target = $region45
    $region44: #{vanilla_bert_layer.1} parent=1 // pred_region
      _
    $region45: #{vanilla_bert_layer.1} parent=1 // pred_fallthru
      _
    // Predicated region
    $region46: #{vanilla_bert_layer.1} parent=1 // pred_check
      _
    $region47: #{vanilla_bert_layer.1} parent=1 // pred_check_branch
      %45 = sbr.rel (0) target = $region49
    $region48: #{vanilla_bert_layer.1} parent=1 // pred_region
      _
    $region49: #{vanilla_bert_layer.1} parent=1 // pred_fallthru
      _
    // Predicated region
    $region50: #{vanilla_bert_layer.1} parent=1 // pred_check
      _
    $region51: #{vanilla_bert_layer.1} parent=1 // pred_check_branch
      %47 = sbr.rel (0) target = $region53
    $region52: #{vanilla_bert_layer.1} parent=1 // pred_region
      _
    $region53: #{vanilla_bert_layer.1} parent=1 // pred_fallthru
      _
    // Predicated region
    $region54: #{vanilla_bert_layer.1} parent=1 // pred_check
      _
    $region55: #{vanilla_bert_layer.1} parent=1 // pred_check_branch
      %49 = sbr.rel (0) target = $region57
    $region56: #{vanilla_bert_layer.1} parent=1 // pred_region
      _
    $region57: #{vanilla_bert_layer.1} parent=1 // pred_fallthru
      _
    // Predicated region
    $region58: #{vanilla_bert_layer.1} parent=1 // pred_check
      _
    $region59: #{vanilla_bert_layer.1} parent=1 // pred_check_branch
      %51 = sbr.rel (0) target = $region61
    $region60: #{vanilla_bert_layer.1} parent=1 // pred_region
      _
    $region61: #{vanilla_bert_layer.1} parent=1 // pred_fallthru
      _
    // Predicated region
    $region62: #{vanilla_bert_layer.1} parent=1 // pred_check
      _
    $region63: #{vanilla_bert_layer.1} parent=1 // pred_check_branch
      %53 = sbr.rel (0) target = $region65
    $region64: #{vanilla_bert_layer.1} parent=1 // pred_region
      _
    $region65: #{vanilla_bert_layer.1} parent=1 // pred_fallthru
      _
    %v55 = vld [vmem:[%s1] sm:$0x3]
    %v56 = vsub.f32 1.0, %v55
    %v57 = vmul.f32 %v56, -10000.0
    %v60 = vunpack.c.l.s4 1966171168
    %v61 = vunpack.c.0.s8 %v60
    %v62 = vlaneseq
    %v63 = vshrl.u32 %v62, 7
    %v64 = vsub.s32 %v61, %v63
    %v65 = vrot.slane %v57, %v64
    %v66 = vcombine.high %v65, %v65
    %v68 = vunpack.c.l.s4 1966171168
    %v69 = vunpack.c.0.s8 %v68
    %v70 = vlaneseq
    %v71 = vshrl.u32 %v70, 7
    %v72 = vsub.s32 %v69, %v71
    %v73 = vrot.slane %v65, %v72
    %v75 = vunpack.c.l.s4 1966171168
    %v76 = vunpack.c.0.s8 %v75
    %v77 = vlaneseq
    %v78 = vshrl.u32 %v77, 7
    %v79 = vsub.s32 %v76, %v78
    %v80 = vrot.slane %v66, %v79
    %v81 = vlaneseq
    %v82 = vshrl.u32 %v81, 7
    %v83 = vsub.s32 0, %v82
    %v84 = vrot.slane %v73, %v83
    %v85 = vlaneseq
    %v86 = vshrl.u32 %v85, 7
    %v87 = vsub.s32 0, %v86
    %v88 = vrot.slane %v80, %v87
    %v91 = vld [vmem:[%s0] sm:$0xff]
    %v92 = vld [vmem:[%s0 + $0x8] sm:$0xff]
    %v93 = vld [vmem:[%s2] sm:$0x1]
    %v94 = vld [vmem:[%s3] sm:$0x1]
    %vm95 = vcmask 261120
    %v96 = vsel %vm95, %v91, 0.0
    %97 = vadd.xlane.f32.xlu0 %v96
    %v98 = vpop.xlane.xlu0 %97
    %v99 = vsel %vm95, %v92, 0.0
    %100 = vadd.xlane.f32.xlu0 %v99
    %v101 = vpop.xlane.xlu0 %100
    %v102 = vmul.f32 %v98, 0.03125
    %v103 = vmul.f32 %v101, 0.03125
    %v104 = vsub.f32 %v91, %v102
    %v105 = vsub.f32 %v92, %v103
    %v106 = vmul.f32 %v104, %v104
    %v107 = vmul.f32 %v105, %v105
    %v108 = vsel %vm95, %v106, 0.0
    %109 = vadd.xlane.f32.xlu0 %v108
    %v110 = vpop.xlane.xlu0 %109
    %v111 = vsel %vm95, %v107, 0.0
    %112 = vadd.xlane.f32.xlu0 %v111
    %v113 = vpop.xlane.xlu0 %112
    %v114 = vmul.f32 %v110, 0.03125
    %v115 = vmul.f32 %v113, 0.03125
    %v116 = vadd.f32 %v114, 1e-12
    %v117 = vadd.f32 %v115, 1e-12
    %v118 = vrsqrt.pop %v116
    %v119 = vrsqrt.pop %v117
    %v120 = vmul.f32 %v104, %v118
    %v121 = vmul.f32 %v105, %v119
    %v123 = vlaneseq
    %v124 = vshrl.u32 %v123, 7
    %v125 = vsub.s32 0, %v124
    %v126 = vrot.slane %v93, %v125
    %v128 = vmul.f32 %v120, %v126
    %v129 = vmul.f32 %v121, %v126
    %v131 = vlaneseq
    %v132 = vshrl.u32 %v131, 7
    %v133 = vsub.s32 0, %v132
    %v134 = vrot.slane %v94, %v133
    %v136 = vadd.f32 %v128, %v134
    %v137 = vadd.f32 %v129, %v134
    %v138 = vpack.c.bf16 %v137, %v136
    %v139 = vld [vmem:[%s4] sm:$0xf]
    %v140 = vld [vmem:[%s4 + $0x4] sm:$0xf]
    %v141 = vld [vmem:[%s4 + $0x8] sm:$0xf]
    %v142 = vld [vmem:[%s4 + $0xc] sm:$0xf]
    %v143 = vld [vmem:[%s5] sm:$0x1]
    %v145 = vlaneseq
    %v146 = vshrl.u32 %v145, 7
    %v147 = vsub.s32 0, %v146
    %v148 = vrot.slane %v143, %v147
    %v154 = vunpack.c.l.b16 %v139
    %v155 = vunpack.c.l.b16 %v140
    %v156 = vunpack.c.l.b16 %v141
    %v157 = vunpack.c.l.b16 %v142
    %v158 = vpack.c.b16 %v155, %v154
    %v159 = vpack.c.b16 %v157, %v156
    %v163 = vsel %vm95, %v138, 0
    %165 = vmatprep.subr.bf16.mxu0 0
    %166 = vmatpush1.bf16.msra.mxu0 %v158
    %167 = vmatprep.subr.bf16.mxu0 0
    %168 = vmatpush1.bf16.msra.mxu0 %v159
    %169 = vmatprep.subr.bf16.mxu0 0
    %170 = vmatpush1.bf16.msra.mxu0 0
    %171 = vmatprep.subr.bf16.mxu0 0
    %172 = vmatpush1.bf16.msra.mxu0 0
    %173 = vmatprep.subr.bf16.mxu0 0
    %174 = vmatpush1.bf16.msra.mxu0 0
    %175 = vmatprep.subr.bf16.mxu0 0
    %176 = vmatpush1.bf16.msra.mxu0 0
    %177 = vmatprep.subr.bf16.mxu0 0
    %178 = vmatpush1.bf16.msra.mxu0 0
    %179 = vmatprep.subr.bf16.mxu0 0
    %180 = vmatpush1.bf16.msra.mxu0 0
    %181 = vmatprep.subr.bf16.mxu0 0
    %182 = vmatpush1.bf16.msra.mxu0 0
    %183 = vmatprep.subr.bf16.mxu0 0
    %184 = vmatpush1.bf16.msra.mxu0 0
    %185 = vmatprep.subr.bf16.mxu0 0
    %186 = vmatpush1.bf16.msra.mxu0 0
    %187 = vmatprep.subr.bf16.mxu0 0
    %188 = vmatpush1.bf16.msra.mxu0 0
    %189 = vmatprep.subr.bf16.mxu0 0
    %190 = vmatpush1.bf16.msra.mxu0 0
    %191 = vmatprep.subr.bf16.mxu0 0
    %192 = vmatpush1.bf16.msra.mxu0 0
    %193 = vmatprep.subr.bf16.mxu0 0
    %194 = vmatpush1.bf16.msra.mxu0 0
    %195 = vmatprep.subr.bf16.mxu0 0
    %196 = vmatpush1.bf16.msra.mxu0 0
    %197 = vmatprep.mubr.bf16.mxu0 0
    %198 = vmatmul.mubr.bf16.gmra.mrb[0].mxu0 %v163
    %v199 = vpop.f32.mrb[0].mxu0
    %v200 = vadd.f32 %v148, %v199
    %v201 = vpop.f32.mrb[0].mxu0
    %v202 = vpop.f32.mrb[0].mxu0
    %v203 = vadd.f32 %v148, %v202
    %v204 = vpop.f32.mrb[0].mxu0
    %205 = vdwg.mxu0
    %v206 = vld [vmem:[%s6] sm:$0xf]
    %v207 = vld [vmem:[%s6 + $0x4] sm:$0xf]
    %v208 = vld [vmem:[%s6 + $0x8] sm:$0xf]
    %v209 = vld [vmem:[%s6 + $0xc] sm:$0xf]
    %v210 = vpack.c.bf16 %v200, %v200
    %v211 = vpack.c.bf16 %v203, %v203
    %213 = vrot.lane.b32.xlu0 %v210, 96
    %v214 = vpop.permute.xlu0 %213
    %vm215 = vcmask 130048
    %v217 = vsel %vm215, %v210, 0
    %v220 = vsel %vm215, %v214, 0
    %222 = vmatprep.subr.bf16.mxu0 0
    %223 = vmatpush1.bf16.xpose.msra.mxu0 %v220
    %224 = vmatprep.subr.bf16.mxu0 0
    %225 = vmatpush1.bf16.xpose.msra.mxu0 0
    %226 = vmatprep.subr.bf16.mxu0 0
    %227 = vmatpush1.bf16.xpose.msra.mxu0 0
    %228 = vmatprep.subr.bf16.mxu0 0
    %229 = vmatpush1.bf16.xpose.msra.mxu0 0
    %230 = vmatprep.subr.bf16.mxu0 0
    %231 = vmatpush1.bf16.xpose.msra.mxu0 0
    %232 = vmatprep.subr.bf16.mxu0 0
    %233 = vmatpush1.bf16.xpose.msra.mxu0 0
    %234 = vmatprep.subr.bf16.mxu0 0
    %235 = vmatpush1.bf16.xpose.msra.mxu0 0
    %236 = vmatprep.subr.bf16.mxu0 0
    %237 = vmatpush1.bf16.xpose.msra.mxu0 0
    %238 = vmatprep.subr.bf16.mxu0 0
    %239 = vmatpush1.bf16.xpose.msra.mxu0 0
    %240 = vmatprep.subr.bf16.mxu0 0
    %241 = vmatpush1.bf16.xpose.msra.mxu0 0
    %242 = vmatprep.subr.bf16.mxu0 0
    %243 = vmatpush1.bf16.xpose.msra.mxu0 0
    %244 = vmatprep.subr.bf16.mxu0 0
    %245 = vmatpush1.bf16.xpose.msra.mxu0 0
    %246 = vmatprep.subr.bf16.mxu0 0
    %247 = vmatpush1.bf16.xpose.msra.mxu0 0
    %248 = vmatprep.subr.bf16.mxu0 0
    %249 = vmatpush1.bf16.xpose.msra.mxu0 0
    %250 = vmatprep.subr.bf16.mxu0 0
    %251 = vmatpush1.bf16.xpose.msra.mxu0 0
    %252 = vmatprep.subr.bf16.mxu0 0
    %253 = vmatpush1.bf16.xpose.msra.mxu0 0
    %254 = vmatprep.mubr.bf16.mxu0 0
    %255 = vmatmul.mubr.bf16.gmra.mrb[0].mxu0 %v217
    %v256 = vpop.f32.mrb[0].mxu0
    %v257 = vadd.f32 %v84, %v256
    %v258 = vpop.f32.mrb[0].mxu0
    %v259 = vpop.f32.mrb[0].mxu0
    %v260 = vpop.f32.mrb[0].mxu0
    %261 = vdwg.mxu0
    %263 = vrot.lane.b32.xlu0 %v211, 96
    %v264 = vpop.permute.xlu0 %263
    %v266 = vsel %vm215, %v211, 0
    %v269 = vsel %vm215, %v264, 0
    %271 = vmatprep.subr.bf16.mxu0 0
    %272 = vmatpush1.bf16.xpose.msra.mxu0 %v269
    %273 = vmatprep.subr.bf16.mxu0 0
    %274 = vmatpush1.bf16.xpose.msra.mxu0 0
    %275 = vmatprep.subr.bf16.mxu0 0
    %276 = vmatpush1.bf16.xpose.msra.mxu0 0
    %277 = vmatprep.subr.bf16.mxu0 0
    %278 = vmatpush1.bf16.xpose.msra.mxu0 0
    %279 = vmatprep.subr.bf16.mxu0 0
    %280 = vmatpush1.bf16.xpose.msra.mxu0 0
    %281 = vmatprep.subr.bf16.mxu0 0
    %282 = vmatpush1.bf16.xpose.msra.mxu0 0
    %283 = vmatprep.subr.bf16.mxu0 0
    %284 = vmatpush1.bf16.xpose.msra.mxu0 0
    %285 = vmatprep.subr.bf16.mxu0 0
    %286 = vmatpush1.bf16.xpose.msra.mxu0 0
    %287 = vmatprep.subr.bf16.mxu0 0
    %288 = vmatpush1.bf16.xpose.msra.mxu0 0
    %289 = vmatprep.subr.bf16.mxu0 0
    %290 = vmatpush1.bf16.xpose.msra.mxu0 0
    %291 = vmatprep.subr.bf16.mxu0 0
    %292 = vmatpush1.bf16.xpose.msra.mxu0 0
    %293 = vmatprep.subr.bf16.mxu0 0
    %294 = vmatpush1.bf16.xpose.msra.mxu0 0
    %295 = vmatprep.subr.bf16.mxu0 0
    %296 = vmatpush1.bf16.xpose.msra.mxu0 0
    %297 = vmatprep.subr.bf16.mxu0 0
    %298 = vmatpush1.bf16.xpose.msra.mxu0 0
    %299 = vmatprep.subr.bf16.mxu0 0
    %300 = vmatpush1.bf16.xpose.msra.mxu0 0
    %301 = vmatprep.subr.bf16.mxu0 0
    %302 = vmatpush1.bf16.xpose.msra.mxu0 0
    %303 = vmatprep.mubr.bf16.mxu0 0
    %304 = vmatmul.mubr.bf16.gmra.mrb[0].mxu0 %v266
    %v305 = vpop.f32.mrb[0].mxu0
    %v306 = vadd.f32 %v88, %v305
    %v307 = vpop.f32.mrb[0].mxu0
    %v308 = vpop.f32.mrb[0].mxu0
    %v309 = vpop.f32.mrb[0].mxu0
    %310 = vdwg.mxu0
    %v311 = vmul.f32 %v257, 1.442695
    %v312 = vpow.pop %v311
    %v313 = vmul.f32 %v306, 1.442695
    %v314 = vpow.pop %v313
    %vm315 = vcmask 64512
    %v316 = vsel %vm315, %v312, 0.0
    %317 = vadd.xlane.f32.xlu0 %v316
    %v318 = vpop.xlane.xlu0 %317
    %v319 = vsel %vm315, %v314, 0.0
    %320 = vadd.xlane.f32.xlu0 %v319
    %v321 = vpop.xlane.xlu0 %320
    %v322 = vrcp.pop %v318
    %v323 = vmul.f32 %v312, %v322
    %v324 = vrcp.pop %v321
    %v325 = vmul.f32 %v314, %v324
    %v326 = vpack.c.bf16 %v323, %v323
    %v327 = vpack.c.bf16 %v325, %v325
    %328 = vrot.lane.b32.xlu0 %v210, 64
    %v329 = vpop.permute.xlu0 %328
    %v331 = vsel %vm315, %v326, 0
    %vm333 = vcmask 1043456
    %v335 = vsel %vm333, %v329, 0
    %337 = vmatprep.subr.bf16.mxu0 0
    %338 = vmatpush1.bf16.msra.mxu0 %v335
    %339 = vmatprep.subr.bf16.mxu0 0
    %340 = vmatpush1.bf16.msra.mxu0 0
    %341 = vmatprep.subr.bf16.mxu0 0
    %342 = vmatpush1.bf16.msra.mxu0 0
    %343 = vmatprep.subr.bf16.mxu0 0
    %344 = vmatpush1.bf16.msra.mxu0 0
    %345 = vmatprep.subr.bf16.mxu0 0
    %346 = vmatpush1.bf16.msra.mxu0 0
    %347 = vmatprep.subr.bf16.mxu0 0
    %348 = vmatpush1.bf16.msra.mxu0 0
    %349 = vmatprep.subr.bf16.mxu0 0
    %350 = vmatpush1.bf16.msra.mxu0 0
    %351 = vmatprep.subr.bf16.mxu0 0
    %352 = vmatpush1.bf16.msra.mxu0 0
    %353 = vmatprep.subr.bf16.mxu0 0
    %354 = vmatpush1.bf16.msra.mxu0 0
    %355 = vmatprep.subr.bf16.mxu0 0
    %356 = vmatpush1.bf16.msra.mxu0 0
    %357 = vmatprep.subr.bf16.mxu0 0
    %358 = vmatpush1.bf16.msra.mxu0 0
    %359 = vmatprep.subr.bf16.mxu0 0
    %360 = vmatpush1.bf16.msra.mxu0 0
    %361 = vmatprep.subr.bf16.mxu0 0
    %362 = vmatpush1.bf16.msra.mxu0 0
    %363 = vmatprep.subr.bf16.mxu0 0
    %364 = vmatpush1.bf16.msra.mxu0 0
    %365 = vmatprep.subr.bf16.mxu0 0
    %366 = vmatpush1.bf16.msra.mxu0 0
    %367 = vmatprep.subr.bf16.mxu0 0
    %368 = vmatpush1.bf16.msra.mxu0 0
    %369 = vmatprep.mubr.bf16.mxu0 0
    %370 = vmatmul.mubr.bf16.gmra.mrb[0].mxu0 %v331
    %v371 = vpop.f32.mrb[0].mxu0
    %v372 = vadd.f32 0.0, %v371
    %v373 = vpop.f32.mrb[0].mxu0
    %v374 = vpop.f32.mrb[0].mxu0
    %v375 = vpop.f32.mrb[0].mxu0
    %376 = vdwg.mxu0
    %377 = vrot.lane.b32.xlu0 %v211, 64
    %v378 = vpop.permute.xlu0 %377
    %v380 = vsel %vm315, %v327, 0
    %v383 = vsel %vm333, %v378, 0
    %385 = vmatprep.subr.bf16.mxu0 0
    %386 = vmatpush1.bf16.msra.mxu0 %v383
    %387 = vmatprep.subr.bf16.mxu0 0
    %388 = vmatpush1.bf16.msra.mxu0 0
    %389 = vmatprep.subr.bf16.mxu0 0
    %390 = vmatpush1.bf16.msra.mxu0 0
    %391 = vmatprep.subr.bf16.mxu0 0
    %392 = vmatpush1.bf16.msra.mxu0 0
    %393 = vmatprep.subr.bf16.mxu0 0
    %394 = vmatpush1.bf16.msra.mxu0 0
    %395 = vmatprep.subr.bf16.mxu0 0
    %396 = vmatpush1.bf16.msra.mxu0 0
    %397 = vmatprep.subr.bf16.mxu0 0
    %398 = vmatpush1.bf16.msra.mxu0 0
    %399 = vmatprep.subr.bf16.mxu0 0
    %400 = vmatpush1.bf16.msra.mxu0 0
    %401 = vmatprep.subr.bf16.mxu0 0
    %402 = vmatpush1.bf16.msra.mxu0 0
    %403 = vmatprep.subr.bf16.mxu0 0
    %404 = vmatpush1.bf16.msra.mxu0 0
    %405 = vmatprep.subr.bf16.mxu0 0
    %406 = vmatpush1.bf16.msra.mxu0 0
    %407 = vmatprep.subr.bf16.mxu0 0
    %408 = vmatpush1.bf16.msra.mxu0 0
    %409 = vmatprep.subr.bf16.mxu0 0
    %410 = vmatpush1.bf16.msra.mxu0 0
    %411 = vmatprep.subr.bf16.mxu0 0
    %412 = vmatpush1.bf16.msra.mxu0 0
    %413 = vmatprep.subr.bf16.mxu0 0
    %414 = vmatpush1.bf16.msra.mxu0 0
    %415 = vmatprep.subr.bf16.mxu0 0
    %416 = vmatpush1.bf16.msra.mxu0 0
    %417 = vmatprep.mubr.bf16.mxu0 0
    %418 = vmatmul.mubr.bf16.gmra.mrb[0].mxu0 %v380
    %v419 = vpop.f32.mrb[0].mxu0
    %v420 = vadd.f32 0.0, %v419
    %v421 = vpop.f32.mrb[0].mxu0
    %v422 = vpop.f32.mrb[0].mxu0
    %v423 = vpop.f32.mrb[0].mxu0
    %424 = vdwg.mxu0
    %v425 = vpack.c.bf16 %v420, %v372
    %426 = vrot.lane.b32.xlu0 %v210, 112
    %v427 = vpop.permute.xlu0 %426
    %428 = vrot.lane.b32.xlu0 %v210, 80
    %v429 = vpop.permute.xlu0 %428
    %v431 = vsel %vm215, %v427, 0
    %v434 = vsel %vm215, %v429, 0
    %436 = vmatprep.subr.bf16.mxu0 0
    %437 = vmatpush1.bf16.xpose.msra.mxu0 %v434
    %438 = vmatprep.subr.bf16.mxu0 0
    %439 = vmatpush1.bf16.xpose.msra.mxu0 0
    %440 = vmatprep.subr.bf16.mxu0 0
    %441 = vmatpush1.bf16.xpose.msra.mxu0 0
    %442 = vmatprep.subr.bf16.mxu0 0
    %443 = vmatpush1.bf16.xpose.msra.mxu0 0
    %444 = vmatprep.subr.bf16.mxu0 0
    %445 = vmatpush1.bf16.xpose.msra.mxu0 0
    %446 = vmatprep.subr.bf16.mxu0 0
    %447 = vmatpush1.bf16.xpose.msra.mxu0 0
    %448 = vmatprep.subr.bf16.mxu0 0
    %449 = vmatpush1.bf16.xpose.msra.mxu0 0
    %450 = vmatprep.subr.bf16.mxu0 0
    %451 = vmatpush1.bf16.xpose.msra.mxu0 0
    %452 = vmatprep.subr.bf16.mxu0 0
    %453 = vmatpush1.bf16.xpose.msra.mxu0 0
    %454 = vmatprep.subr.bf16.mxu0 0
    %455 = vmatpush1.bf16.xpose.msra.mxu0 0
    %456 = vmatprep.subr.bf16.mxu0 0
    %457 = vmatpush1.bf16.xpose.msra.mxu0 0
    %458 = vmatprep.subr.bf16.mxu0 0
    %459 = vmatpush1.bf16.xpose.msra.mxu0 0
    %460 = vmatprep.subr.bf16.mxu0 0
    %461 = vmatpush1.bf16.xpose.msra.mxu0 0
    %462 = vmatprep.subr.bf16.mxu0 0
    %463 = vmatpush1.bf16.xpose.msra.mxu0 0
    %464 = vmatprep.subr.bf16.mxu0 0
    %465 = vmatpush1.bf16.xpose.msra.mxu0 0
    %466 = vmatprep.subr.bf16.mxu0 0
    %467 = vmatpush1.bf16.xpose.msra.mxu0 0
    %468 = vmatprep.mubr.bf16.mxu0 0
    %469 = vmatmul.mubr.bf16.gmra.mrb[0].mxu0 %v431
    %v470 = vpop.f32.mrb[0].mxu0
    %v471 = vadd.f32 %v84, %v470
    %v472 = vpop.f32.mrb[0].mxu0
    %v473 = vpop.f32.mrb[0].mxu0
    %v474 = vpop.f32.mrb[0].mxu0
    %475 = vdwg.mxu0
    %476 = vrot.lane.b32.xlu0 %v211, 112
    %v477 = vpop.permute.xlu0 %476
    %478 = vrot.lane.b32.xlu0 %v211, 80
    %v479 = vpop.permute.xlu0 %478
    %v481 = vsel %vm215, %v477, 0
    %v484 = vsel %vm215, %v479, 0
    %486 = vmatprep.subr.bf16.mxu0 0
    %487 = vmatpush1.bf16.xpose.msra.mxu0 %v484
    %488 = vmatprep.subr.bf16.mxu0 0
    %489 = vmatpush1.bf16.xpose.msra.mxu0 0
    %490 = vmatprep.subr.bf16.mxu0 0
    %491 = vmatpush1.bf16.xpose.msra.mxu0 0
    %492 = vmatprep.subr.bf16.mxu0 0
    %493 = vmatpush1.bf16.xpose.msra.mxu0 0
    %494 = vmatprep.subr.bf16.mxu0 0
    %495 = vmatpush1.bf16.xpose.msra.mxu0 0
    %496 = vmatprep.subr.bf16.mxu0 0
    %497 = vmatpush1.bf16.xpose.msra.mxu0 0
    %498 = vmatprep.subr.bf16.mxu0 0
    %499 = vmatpush1.bf16.xpose.msra.mxu0 0
    %500 = vmatprep.subr.bf16.mxu0 0
    %501 = vmatpush1.bf16.xpose.msra.mxu0 0
    %502 = vmatprep.subr.bf16.mxu0 0
    %503 = vmatpush1.bf16.xpose.msra.mxu0 0
    %504 = vmatprep.subr.bf16.mxu0 0
    %505 = vmatpush1.bf16.xpose.msra.mxu0 0
    %506 = vmatprep.subr.bf16.mxu0 0
    %507 = vmatpush1.bf16.xpose.msra.mxu0 0
    %508 = vmatprep.subr.bf16.mxu0 0
    %509 = vmatpush1.bf16.xpose.msra.mxu0 0
    %510 = vmatprep.subr.bf16.mxu0 0
    %511 = vmatpush1.bf16.xpose.msra.mxu0 0
    %512 = vmatprep.subr.bf16.mxu0 0
    %513 = vmatpush1.bf16.xpose.msra.mxu0 0
    %514 = vmatprep.subr.bf16.mxu0 0
    %515 = vmatpush1.bf16.xpose.msra.mxu0 0
    %516 = vmatprep.subr.bf16.mxu0 0
    %517 = vmatpush1.bf16.xpose.msra.mxu0 0
    %518 = vmatprep.mubr.bf16.mxu0 0
    %519 = vmatmul.mubr.bf16.gmra.mrb[0].mxu0 %v481
    %v520 = vpop.f32.mrb[0].mxu0
    %v521 = vadd.f32 %v88, %v520
    %v522 = vpop.f32.mrb[0].mxu0
    %v523 = vpop.f32.mrb[0].mxu0
    %v524 = vpop.f32.mrb[0].mxu0
    %525 = vdwg.mxu0
    %v526 = vmul.f32 %v471, 1.442695
    %v527 = vpow.pop %v526
    %v528 = vmul.f32 %v521, 1.442695
    %v529 = vpow.pop %v528
    %v530 = vsel %vm315, %v527, 0.0
    %531 = vadd.xlane.f32.xlu0 %v530
    %v532 = vpop.xlane.xlu0 %531
    %v533 = vsel %vm315, %v529, 0.0
    %534 = vadd.xlane.f32.xlu0 %v533
    %v535 = vpop.xlane.xlu0 %534
    %v536 = vrcp.pop %v532
    %v537 = vmul.f32 %v527, %v536
    %v538 = vrcp.pop %v535
    %v539 = vmul.f32 %v529, %v538
    %v540 = vpack.c.bf16 %v537, %v537
    %v541 = vpack.c.bf16 %v539, %v539
    %542 = vrot.lane.b32.xlu0 %v210, 48
    %v543 = vpop.permute.xlu0 %542
    %v545 = vsel %vm315, %v540, 0
    %v548 = vsel %vm333, %v543, 0
    %550 = vmatprep.subr.bf16.mxu0 0
    %551 = vmatpush1.bf16.msra.mxu0 %v548
    %552 = vmatprep.subr.bf16.mxu0 0
    %553 = vmatpush1.bf16.msra.mxu0 0
    %554 = vmatprep.subr.bf16.mxu0 0
    %555 = vmatpush1.bf16.msra.mxu0 0
    %556 = vmatprep.subr.bf16.mxu0 0
    %557 = vmatpush1.bf16.msra.mxu0 0
    %558 = vmatprep.subr.bf16.mxu0 0
    %559 = vmatpush1.bf16.msra.mxu0 0
    %560 = vmatprep.subr.bf16.mxu0 0
    %561 = vmatpush1.bf16.msra.mxu0 0
    %562 = vmatprep.subr.bf16.mxu0 0
    %563 = vmatpush1.bf16.msra.mxu0 0
    %564 = vmatprep.subr.bf16.mxu0 0
    %565 = vmatpush1.bf16.msra.mxu0 0
    %566 = vmatprep.subr.bf16.mxu0 0
    %567 = vmatpush1.bf16.msra.mxu0 0
    %568 = vmatprep.subr.bf16.mxu0 0
    %569 = vmatpush1.bf16.msra.mxu0 0
    %570 = vmatprep.subr.bf16.mxu0 0
    %571 = vmatpush1.bf16.msra.mxu0 0
    %572 = vmatprep.subr.bf16.mxu0 0
    %573 = vmatpush1.bf16.msra.mxu0 0
    %574 = vmatprep.subr.bf16.mxu0 0
    %575 = vmatpush1.bf16.msra.mxu0 0
    %576 = vmatprep.subr.bf16.mxu0 0
    %577 = vmatpush1.bf16.msra.mxu0 0
    %578 = vmatprep.subr.bf16.mxu0 0
    %579 = vmatpush1.bf16.msra.mxu0 0
    %580 = vmatprep.subr.bf16.mxu0 0
    %581 = vmatpush1.bf16.msra.mxu0 0
    %582 = vmatprep.mubr.bf16.mxu0 0
    %583 = vmatmul.mubr.bf16.gmra.mrb[0].mxu0 %v545
    %v584 = vpop.f32.mrb[0].mxu0
    %v585 = vadd.f32 0.0, %v584
    %v586 = vpop.f32.mrb[0].mxu0
    %v587 = vpop.f32.mrb[0].mxu0
    %v588 = vpop.f32.mrb[0].mxu0
    %589 = vdwg.mxu0
    %590 = vrot.lane.b32.xlu0 %v211, 48
    %v591 = vpop.permute.xlu0 %590
    %v593 = vsel %vm315, %v541, 0
    %v596 = vsel %vm333, %v591, 0
    %598 = vmatprep.subr.bf16.mxu0 0
    %599 = vmatpush1.bf16.msra.mxu0 %v596
    %600 = vmatprep.subr.bf16.mxu0 0
    %601 = vmatpush1.bf16.msra.mxu0 0
    %602 = vmatprep.subr.bf16.mxu0 0
    %603 = vmatpush1.bf16.msra.mxu0 0
    %604 = vmatprep.subr.bf16.mxu0 0
    %605 = vmatpush1.bf16.msra.mxu0 0
    %606 = vmatprep.subr.bf16.mxu0 0
    %607 = vmatpush1.bf16.msra.mxu0 0
    %608 = vmatprep.subr.bf16.mxu0 0
    %609 = vmatpush1.bf16.msra.mxu0 0
    %610 = vmatprep.subr.bf16.mxu0 0
    %611 = vmatpush1.bf16.msra.mxu0 0
    %612 = vmatprep.subr.bf16.mxu0 0
    %613 = vmatpush1.bf16.msra.mxu0 0
    %614 = vmatprep.subr.bf16.mxu0 0
    %615 = vmatpush1.bf16.msra.mxu0 0
    %616 = vmatprep.subr.bf16.mxu0 0
    %617 = vmatpush1.bf16.msra.mxu0 0
    %618 = vmatprep.subr.bf16.mxu0 0
    %619 = vmatpush1.bf16.msra.mxu0 0
    %620 = vmatprep.subr.bf16.mxu0 0
    %621 = vmatpush1.bf16.msra.mxu0 0
    %622 = vmatprep.subr.bf16.mxu0 0
    %623 = vmatpush1.bf16.msra.mxu0 0
    %624 = vmatprep.subr.bf16.mxu0 0
    %625 = vmatpush1.bf16.msra.mxu0 0
    %626 = vmatprep.subr.bf16.mxu0 0
    %627 = vmatpush1.bf16.msra.mxu0 0
    %628 = vmatprep.subr.bf16.mxu0 0
    %629 = vmatpush1.bf16.msra.mxu0 0
    %630 = vmatprep.mubr.bf16.mxu0 0
    %631 = vmatmul.mubr.bf16.gmra.mrb[0].mxu0 %v593
    %v632 = vpop.f32.mrb[0].mxu0
    %v633 = vadd.f32 0.0, %v632
    %v634 = vpop.f32.mrb[0].mxu0
    %v635 = vpop.f32.mrb[0].mxu0
    %v636 = vpop.f32.mrb[0].mxu0
    %637 = vdwg.mxu0
    %v638 = vpack.c.bf16 %v633, %v585
    %v641 = vunpack.c.l.b16 %v208
    %v642 = vunpack.c.l.b16 %v209
    %v643 = vpack.c.b16 %v642, %v641
    %v646 = vsel %vm215, %v638, 0
    %648 = vmatprep.subr.bf16.mxu0 0
    %649 = vmatpush1.bf16.msra.mxu0 %v643
    %650 = vmatprep.subr.bf16.mxu0 0
    %651 = vmatpush1.bf16.msra.mxu0 0
    %652 = vmatprep.subr.bf16.mxu0 0
    %653 = vmatpush1.bf16.msra.mxu0 0
    %654 = vmatprep.subr.bf16.mxu0 0
    %655 = vmatpush1.bf16.msra.mxu0 0
    %656 = vmatprep.subr.bf16.mxu0 0
    %657 = vmatpush1.bf16.msra.mxu0 0
    %658 = vmatprep.subr.bf16.mxu0 0
    %659 = vmatpush1.bf16.msra.mxu0 0
    %660 = vmatprep.subr.bf16.mxu0 0
    %661 = vmatpush1.bf16.msra.mxu0 0
    %662 = vmatprep.subr.bf16.mxu0 0
    %663 = vmatpush1.bf16.msra.mxu0 0
    %664 = vmatprep.subr.bf16.mxu0 0
    %665 = vmatpush1.bf16.msra.mxu0 0
    %666 = vmatprep.subr.bf16.mxu0 0
    %667 = vmatpush1.bf16.msra.mxu0 0
    %668 = vmatprep.subr.bf16.mxu0 0
    %669 = vmatpush1.bf16.msra.mxu0 0
    %670 = vmatprep.subr.bf16.mxu0 0
    %671 = vmatpush1.bf16.msra.mxu0 0
    %672 = vmatprep.subr.bf16.mxu0 0
    %673 = vmatpush1.bf16.msra.mxu0 0
    %674 = vmatprep.subr.bf16.mxu0 0
    %675 = vmatpush1.bf16.msra.mxu0 0
    %676 = vmatprep.subr.bf16.mxu0 0
    %677 = vmatpush1.bf16.msra.mxu0 0
    %678 = vmatprep.subr.bf16.mxu0 0
    %679 = vmatpush1.bf16.msra.mxu0 0
    %680 = vmatprep.mubr.bf16.mxu0 0
    %681 = vmatmul.mubr.bf16.gmra.mrb[0].mxu0 %v646
    %v682 = vpop.f32.mrb[0].mxu0
    %v683 = vadd.f32 0.0, %v682
    %v684 = vpop.f32.mrb[0].mxu0
    %v685 = vpop.f32.mrb[0].mxu0
    %v686 = vadd.f32 0.0, %v685
    %v687 = vpop.f32.mrb[0].mxu0
    %688 = vdwg.mxu0
    %v691 = vunpack.c.l.b16 %v206
    %v692 = vunpack.c.l.b16 %v207
    %v693 = vpack.c.b16 %v692, %v691
    %v696 = vsel %vm215, %v425, 0
    %698 = vmatprep.subr.bf16.mxu0 0
    %699 = vmatpush1.bf16.msra.mxu0 %v693
    %700 = vmatprep.subr.bf16.mxu0 0
    %701 = vmatpush1.bf16.msra.mxu0 0
    %702 = vmatprep.subr.bf16.mxu0 0
    %703 = vmatpush1.bf16.msra.mxu0 0
    %704 = vmatprep.subr.bf16.mxu0 0
    %705 = vmatpush1.bf16.msra.mxu0 0
    %706 = vmatprep.subr.bf16.mxu0 0
    %707 = vmatpush1.bf16.msra.mxu0 0
    %708 = vmatprep.subr.bf16.mxu0 0
    %709 = vmatpush1.bf16.msra.mxu0 0
    %710 = vmatprep.subr.bf16.mxu0 0
    %711 = vmatpush1.bf16.msra.mxu0 0
    %712 = vmatprep.subr.bf16.mxu0 0
    %713 = vmatpush1.bf16.msra.mxu0 0
    %714 = vmatprep.subr.bf16.mxu0 0
    %715 = vmatpush1.bf16.msra.mxu0 0
    %716 = vmatprep.subr.bf16.mxu0 0
    %717 = vmatpush1.bf16.msra.mxu0 0
    %718 = vmatprep.subr.bf16.mxu0 0
    %719 = vmatpush1.bf16.msra.mxu0 0
    %720 = vmatprep.subr.bf16.mxu0 0
    %721 = vmatpush1.bf16.msra.mxu0 0
    %722 = vmatprep.subr.bf16.mxu0 0
    %723 = vmatpush1.bf16.msra.mxu0 0
    %724 = vmatprep.subr.bf16.mxu0 0
    %725 = vmatpush1.bf16.msra.mxu0 0
    %726 = vmatprep.subr.bf16.mxu0 0
    %727 = vmatpush1.bf16.msra.mxu0 0
    %728 = vmatprep.subr.bf16.mxu0 0
    %729 = vmatpush1.bf16.msra.mxu0 0
    %730 = vmatprep.mubr.bf16.mxu0 0
    %731 = vmatmul.mubr.bf16.gmra.mrb[0].mxu0 %v696
    %v732 = vpop.f32.mrb[0].mxu0
    %v733 = vadd.f32 %v683, %v732
    %v734 = vpop.f32.mrb[0].mxu0
    %v735 = vpop.f32.mrb[0].mxu0
    %v736 = vadd.f32 %v686, %v735
    %v737 = vpop.f32.mrb[0].mxu0
    %738 = vdwg.mxu0
    %v739 = vld [vmem:[%s7] sm:$0x1]
    %v741 = vlaneseq
    %v742 = vshrl.u32 %v741, 7
    %v743 = vsub.s32 0, %v742
    %v744 = vrot.slane %v739, %v743
    %v746 = vadd.f32 %v733, %v744
    %v747 = vadd.f32 %v736, %v744
    %v748 = vadd.f32 %v746, %v136
    %v749 = vadd.f32 %v747, %v137
    %v750 = vld [vmem:[%s8] sm:$0x1]
    %v751 = vld [vmem:[%s9] sm:$0x1]
    %v752 = vsel %vm95, %v748, 0.0
    %753 = vadd.xlane.f32.xlu0 %v752
    %v754 = vpop.xlane.xlu0 %753
    %v755 = vsel %vm95, %v749, 0.0
    %756 = vadd.xlane.f32.xlu0 %v755
    %v757 = vpop.xlane.xlu0 %756
    %v758 = vmul.f32 %v754, 0.03125
    %v759 = vmul.f32 %v757, 0.03125
    %v760 = vsub.f32 %v748, %v758
    %v761 = vsub.f32 %v749, %v759
    %v762 = vmul.f32 %v760, %v760
    %v763 = vmul.f32 %v761, %v761
    %v764 = vsel %vm95, %v762, 0.0
    %765 = vadd.xlane.f32.xlu0 %v764
    %v766 = vpop.xlane.xlu0 %765
    %v767 = vsel %vm95, %v763, 0.0
    %768 = vadd.xlane.f32.xlu0 %v767
    %v769 = vpop.xlane.xlu0 %768
    %v770 = vmul.f32 %v766, 0.03125
    %v771 = vmul.f32 %v769, 0.03125
    %v772 = vadd.f32 %v770, 1e-12
    %v773 = vadd.f32 %v771, 1e-12
    %v774 = vrsqrt.pop %v772
    %v775 = vrsqrt.pop %v773
    %v776 = vmul.f32 %v760, %v774
    %v777 = vmul.f32 %v761, %v775
    %v779 = vlaneseq
    %v780 = vshrl.u32 %v779, 7
    %v781 = vsub.s32 0, %v780
    %v782 = vrot.slane %v750, %v781
    %v784 = vmul.f32 %v776, %v782
    %v785 = vmul.f32 %v777, %v782
    %v787 = vlaneseq
    %v788 = vshrl.u32 %v787, 7
    %v789 = vsub.s32 0, %v788
    %v790 = vrot.slane %v751, %v789
    %v792 = vadd.f32 %v784, %v790
    %v793 = vadd.f32 %v785, %v790
    %v794 = vpack.c.bf16 %v793, %v792
    %v795 = vld [vmem:[%s10] sm:$0xf]
    %v796 = vld [vmem:[%s10 + $0x4] sm:$0xf]
    %v797 = vld [vmem:[%s10 + $0x8] sm:$0xf]
    %v798 = vld [vmem:[%s10 + $0xc] sm:$0xf]
    %v799 = vld [vmem:[%s11] sm:$0x1]
    %v801 = vlaneseq
    %v802 = vshrl.u32 %v801, 7
    %v803 = vsub.s32 0, %v802
    %v804 = vrot.slane %v799, %v803
    %v810 = vunpack.c.l.b16 %v795
    %v811 = vunpack.c.l.b16 %v796
    %v812 = vunpack.c.l.b16 %v797
    %v813 = vunpack.c.l.b16 %v798
    %v814 = vpack.c.b16 %v811, %v810
    %v815 = vpack.c.b16 %v813, %v812
    %v819 = vsel %vm95, %v794, 0
    %821 = vmatprep.subr.bf16.mxu0 0
    %822 = vmatpush1.bf16.msra.mxu0 %v814
    %823 = vmatprep.subr.bf16.mxu0 0
    %824 = vmatpush1.bf16.msra.mxu0 %v815
    %825 = vmatprep.subr.bf16.mxu0 0
    %826 = vmatpush1.bf16.msra.mxu0 0
    %827 = vmatprep.subr.bf16.mxu0 0
    %828 = vmatpush1.bf16.msra.mxu0 0
    %829 = vmatprep.subr.bf16.mxu0 0
    %830 = vmatpush1.bf16.msra.mxu0 0
    %831 = vmatprep.subr.bf16.mxu0 0
    %832 = vmatpush1.bf16.msra.mxu0 0
    %833 = vmatprep.subr.bf16.mxu0 0
    %834 = vmatpush1.bf16.msra.mxu0 0
    %835 = vmatprep.subr.bf16.mxu0 0
    %836 = vmatpush1.bf16.msra.mxu0 0
    %837 = vmatprep.subr.bf16.mxu0 0
    %838 = vmatpush1.bf16.msra.mxu0 0
    %839 = vmatprep.subr.bf16.mxu0 0
    %840 = vmatpush1.bf16.msra.mxu0 0
    %841 = vmatprep.subr.bf16.mxu0 0
    %842 = vmatpush1.bf16.msra.mxu0 0
    %843 = vmatprep.subr.bf16.mxu0 0
    %844 = vmatpush1.bf16.msra.mxu0 0
    %845 = vmatprep.subr.bf16.mxu0 0
    %846 = vmatpush1.bf16.msra.mxu0 0
    %847 = vmatprep.subr.bf16.mxu0 0
    %848 = vmatpush1.bf16.msra.mxu0 0
    %849 = vmatprep.subr.bf16.mxu0 0
    %850 = vmatpush1.bf16.msra.mxu0 0
    %851 = vmatprep.subr.bf16.mxu0 0
    %852 = vmatpush1.bf16.msra.mxu0 0
    %853 = vmatprep.mubr.bf16.mxu0 0
    %854 = vmatmul.mubr.bf16.gmra.mrb[0].mxu0 %v819
    %v855 = vpop.f32.mrb[0].mxu0
    %v856 = vadd.f32 %v804, %v855
    %v857 = vpop.f32.mrb[0].mxu0
    %v858 = vpop.f32.mrb[0].mxu0
    %v859 = vadd.f32 %v804, %v858
    %v860 = vpop.f32.mrb[0].mxu0
    %861 = vdwg.mxu0
    %v862 = vmul.f32 %v856, 0.5
    %v863 = vmul.f32 %v859, 0.5
    %v864 = vmul.f32 %v856, 0.044715
    %v865 = vmul.f32 %v859, 0.044715
    %v866 = vmul.f32 %v864, %v856
    %v867 = vmul.f32 %v865, %v859
    %v868 = vmul.f32 %v866, %v856
    %v869 = vmul.f32 %v867, %v859
    %v870 = vadd.f32 %v856, %v868
    %v871 = vadd.f32 %v859, %v869
    %v872 = vmul.f32 %v870, 0.7978846
    %v873 = vmul.f32 %v871, 0.7978846
    %v874 = vtanh.pop %v872
    %v875 = vtanh.pop %v873
    %v876 = vadd.f32 %v874, 1.0
    %v877 = vadd.f32 %v875, 1.0
    %v878 = vmul.f32 %v862, %v876
    %v879 = vmul.f32 %v863, %v877
    %v880 = vpack.c.bf16 %v879, %v878
    %v881 = vld [vmem:[%s12] sm:$0xf]
    %v882 = vld [vmem:[%s12 + $0x4] sm:$0xf]
    %v883 = vld [vmem:[%s12 + $0x8] sm:$0xf]
    %v884 = vld [vmem:[%s12 + $0xc] sm:$0xf]
    %v885 = vld [vmem:[%s12 + $0x10] sm:$0xf]
    %v886 = vld [vmem:[%s12 + $0x14] sm:$0xf]
    %v887 = vld [vmem:[%s12 + $0x18] sm:$0xf]
    %v888 = vld [vmem:[%s12 + $0x1c] sm:$0xf]
    %v889 = vld [vmem:[%s13] sm:$0x1]
    %v891 = vlaneseq
    %v892 = vshrl.u32 %v891, 7
    %v893 = vsub.s32 0, %v892
    %v894 = vrot.slane %v889, %v893
    %v904 = vunpack.c.l.b16 %v881
    %v905 = vunpack.c.l.b16 %v882
    %v906 = vunpack.c.l.b16 %v883
    %v907 = vunpack.c.l.b16 %v884
    %v908 = vunpack.c.l.b16 %v885
    %v909 = vunpack.c.l.b16 %v886
    %v910 = vunpack.c.l.b16 %v887
    %v911 = vunpack.c.l.b16 %v888
    %v912 = vpack.c.b16 %v905, %v904
    %v913 = vpack.c.b16 %v907, %v906
    %v914 = vpack.c.b16 %v909, %v908
    %v915 = vpack.c.b16 %v911, %v910
    %vm920 = vcmask 523264
    %v922 = vsel %vm920, %v880, 0
    %924 = vmatprep.subr.bf16.mxu0 0
    %925 = vmatpush1.bf16.msra.mxu0 %v912
    %926 = vmatprep.subr.bf16.mxu0 0
    %927 = vmatpush1.bf16.msra.mxu0 %v913
    %928 = vmatprep.subr.bf16.mxu0 0
    %929 = vmatpush1.bf16.msra.mxu0 %v914
    %930 = vmatprep.subr.bf16.mxu0 0
    %931 = vmatpush1.bf16.msra.mxu0 %v915
    %932 = vmatprep.subr.bf16.mxu0 0
    %933 = vmatpush1.bf16.msra.mxu0 0
    %934 = vmatprep.subr.bf16.mxu0 0
    %935 = vmatpush1.bf16.msra.mxu0 0
    %936 = vmatprep.subr.bf16.mxu0 0
    %937 = vmatpush1.bf16.msra.mxu0 0
    %938 = vmatprep.subr.bf16.mxu0 0
    %939 = vmatpush1.bf16.msra.mxu0 0
    %940 = vmatprep.subr.bf16.mxu0 0
    %941 = vmatpush1.bf16.msra.mxu0 0
    %942 = vmatprep.subr.bf16.mxu0 0
    %943 = vmatpush1.bf16.msra.mxu0 0
    %944 = vmatprep.subr.bf16.mxu0 0
    %945 = vmatpush1.bf16.msra.mxu0 0
    %946 = vmatprep.subr.bf16.mxu0 0
    %947 = vmatpush1.bf16.msra.mxu0 0
    %948 = vmatprep.subr.bf16.mxu0 0
    %949 = vmatpush1.bf16.msra.mxu0 0
    %950 = vmatprep.subr.bf16.mxu0 0
    %951 = vmatpush1.bf16.msra.mxu0 0
    %952 = vmatprep.subr.bf16.mxu0 0
    %953 = vmatpush1.bf16.msra.mxu0 0
    %954 = vmatprep.subr.bf16.mxu0 0
    %955 = vmatpush1.bf16.msra.mxu0 0
    %956 = vmatprep.mubr.bf16.mxu0 0
    %957 = vmatmul.mubr.bf16.gmra.mrb[0].mxu0 %v922
    %v958 = vpop.f32.mrb[0].mxu0
    %v959 = vadd.f32 %v894, %v958
    %v960 = vpop.f32.mrb[0].mxu0
    %v961 = vpop.f32.mrb[0].mxu0
    %v962 = vadd.f32 %v894, %v961
    %v963 = vpop.f32.mrb[0].mxu0
    %964 = vdwg.mxu0
    %v965 = vadd.f32 %v959, %v792
    %v966 = vadd.f32 %v962, %v793
    %v967 = vld [vmem:[%s14] sm:$0x1]
    %v968 = vld [vmem:[%s15] sm:$0x1]
    %v969 = vsel %vm95, %v965, 0.0
    %970 = vadd.xlane.f32.xlu0 %v969
    %v971 = vpop.xlane.xlu0 %970
    %v972 = vsel %vm95, %v966, 0.0
    %973 = vadd.xlane.f32.xlu0 %v972
    %v974 = vpop.xlane.xlu0 %973
    %v975 = vmul.f32 %v971, 0.03125
    %v976 = vmul.f32 %v974, 0.03125
    %v977 = vsub.f32 %v965, %v975
    %v978 = vsub.f32 %v966, %v976
    %v979 = vmul.f32 %v977, %v977
    %v980 = vmul.f32 %v978, %v978
    %v981 = vsel %vm95, %v979, 0.0
    %982 = vadd.xlane.f32.xlu0 %v981
    %v983 = vpop.xlane.xlu0 %982
    %v984 = vsel %vm95, %v980, 0.0
    %985 = vadd.xlane.f32.xlu0 %v984
    %v986 = vpop.xlane.xlu0 %985
    %v987 = vmul.f32 %v983, 0.03125
    %v988 = vmul.f32 %v986, 0.03125
    %v989 = vadd.f32 %v987, 1e-12
    %v990 = vadd.f32 %v988, 1e-12
    %v991 = vrsqrt.pop %v989
    %v992 = vrsqrt.pop %v990
    %v993 = vmul.f32 %v977, %v991
    %v994 = vmul.f32 %v978, %v992
    %v996 = vlaneseq
    %v997 = vshrl.u32 %v996, 7
    %v998 = vsub.s32 0, %v997
    %v999 = vrot.slane %v967, %v998
    %v1001 = vmul.f32 %v993, %v999
    %v1002 = vmul.f32 %v994, %v999
    %v1004 = vlaneseq
    %v1005 = vshrl.u32 %v1004, 7
    %v1006 = vsub.s32 0, %v1005
    %v1007 = vrot.slane %v968, %v1006
    %v1009 = vadd.f32 %v1001, %v1007
    %v1010 = vadd.f32 %v1002, %v1007
    %v1011 = vpack.c.bf16 %v1010, %v1009
    %s1012 = scalar_lea.vmem %s4, 16
    %v1013 = vld [vmem:[%s1012] sm:$0xf]
    %v1014 = vld [vmem:[%s1012 + $0x4] sm:$0xf]
    %v1015 = vld [vmem:[%s1012 + $0x8] sm:$0xf]
    %v1016 = vld [vmem:[%s1012 + $0xc] sm:$0xf]
    %s1017 = scalar_lea.vmem %s5, 1
    %v1018 = vld [vmem:[%s1017] sm:$0x1]
    %v1020 = vlaneseq
    %v1021 = vshrl.u32 %v1020, 7
    %v1022 = vsub.s32 0, %v1021
    %v1023 = vrot.slane %v1018, %v1022
    %v1029 = vunpack.c.l.b16 %v1013
    %v1030 = vunpack.c.l.b16 %v1014
    %v1031 = vunpack.c.l.b16 %v1015
    %v1032 = vunpack.c.l.b16 %v1016
    %v1033 = vpack.c.b16 %v1030, %v1029
    %v1034 = vpack.c.b16 %v1032, %v1031
    %v1038 = vsel %vm95, %v1011, 0
    %1040 = vmatprep.subr.bf16.mxu0 0
    %1041 = vmatpush1.bf16.msra.mxu0 %v1033
    %1042 = vmatprep.subr.bf16.mxu0 0
    %1043 = vmatpush1.bf16.msra.mxu0 %v1034
    %1044 = vmatprep.subr.bf16.mxu0 0
    %1045 = vmatpush1.bf16.msra.mxu0 0
    %1046 = vmatprep.subr.bf16.mxu0 0
    %1047 = vmatpush1.bf16.msra.mxu0 0
    %1048 = vmatprep.subr.bf16.mxu0 0
    %1049 = vmatpush1.bf16.msra.mxu0 0
    %1050 = vmatprep.subr.bf16.mxu0 0
    %1051 = vmatpush1.bf16.msra.mxu0 0
    %1052 = vmatprep.subr.bf16.mxu0 0
    %1053 = vmatpush1.bf16.msra.mxu0 0
    %1054 = vmatprep.subr.bf16.mxu0 0
    %1055 = vmatpush1.bf16.msra.mxu0 0
    %1056 = vmatprep.subr.bf16.mxu0 0
    %1057 = vmatpush1.bf16.msra.mxu0 0
    %1058 = vmatprep.subr.bf16.mxu0 0
    %1059 = vmatpush1.bf16.msra.mxu0 0
    %1060 = vmatprep.subr.bf16.mxu0 0
    %1061 = vmatpush1.bf16.msra.mxu0 0
    %1062 = vmatprep.subr.bf16.mxu0 0
    %1063 = vmatpush1.bf16.msra.mxu0 0
    %1064 = vmatprep.subr.bf16.mxu0 0
    %1065 = vmatpush1.bf16.msra.mxu0 0
    %1066 = vmatprep.subr.bf16.mxu0 0
    %1067 = vmatpush1.bf16.msra.mxu0 0
    %1068 = vmatprep.subr.bf16.mxu0 0
    %1069 = vmatpush1.bf16.msra.mxu0 0
    %1070 = vmatprep.subr.bf16.mxu0 0
    %1071 = vmatpush1.bf16.msra.mxu0 0
    %1072 = vmatprep.mubr.bf16.mxu0 0
    %1073 = vmatmul.mubr.bf16.gmra.mrb[0].mxu0 %v1038
    %v1074 = vpop.f32.mrb[0].mxu0
    %v1075 = vadd.f32 %v1023, %v1074
    %v1076 = vpop.f32.mrb[0].mxu0
    %v1077 = vpop.f32.mrb[0].mxu0
    %v1078 = vadd.f32 %v1023, %v1077
    %v1079 = vpop.f32.mrb[0].mxu0
    %1080 = vdwg.mxu0
    %s1081 = scalar_lea.vmem %s6, 16
    %v1082 = vld [vmem:[%s1081] sm:$0xf]
    %v1083 = vld [vmem:[%s1081 + $0x4] sm:$0xf]
    %v1084 = vld [vmem:[%s1081 + $0x8] sm:$0xf]
    %v1085 = vld [vmem:[%s1081 + $0xc] sm:$0xf]
    %v1086 = vpack.c.bf16 %v1075, %v1075
    %v1087 = vpack.c.bf16 %v1078, %v1078
    %1089 = vrot.lane.b32.xlu0 %v1086, 96
    %v1090 = vpop.permute.xlu0 %1089
    %v1092 = vsel %vm215, %v1086, 0
    %v1095 = vsel %vm215, %v1090, 0
    %1097 = vmatprep.subr.bf16.mxu0 0
    %1098 = vmatpush1.bf16.xpose.msra.mxu0 %v1095
    %1099 = vmatprep.subr.bf16.mxu0 0
    %1100 = vmatpush1.bf16.xpose.msra.mxu0 0
    %1101 = vmatprep.subr.bf16.mxu0 0
    %1102 = vmatpush1.bf16.xpose.msra.mxu0 0
    %1103 = vmatprep.subr.bf16.mxu0 0
    %1104 = vmatpush1.bf16.xpose.msra.mxu0 0
    %1105 = vmatprep.subr.bf16.mxu0 0
    %1106 = vmatpush1.bf16.xpose.msra.mxu0 0
    %1107 = vmatprep.subr.bf16.mxu0 0
    %1108 = vmatpush1.bf16.xpose.msra.mxu0 0
    %1109 = vmatprep.subr.bf16.mxu0 0
    %1110 = vmatpush1.bf16.xpose.msra.mxu0 0
    %1111 = vmatprep.subr.bf16.mxu0 0
    %1112 = vmatpush1.bf16.xpose.msra.mxu0 0
    %1113 = vmatprep.subr.bf16.mxu0 0
    %1114 = vmatpush1.bf16.xpose.msra.mxu0 0
    %1115 = vmatprep.subr.bf16.mxu0 0
    %1116 = vmatpush1.bf16.xpose.msra.mxu0 0
    %1117 = vmatprep.subr.bf16.mxu0 0
    %1118 = vmatpush1.bf16.xpose.msra.mxu0 0
    %1119 = vmatprep.subr.bf16.mxu0 0
    %1120 = vmatpush1.bf16.xpose.msra.mxu0 0
    %1121 = vmatprep.subr.bf16.mxu0 0
    %1122 = vmatpush1.bf16.xpose.msra.mxu0 0
    %1123 = vmatprep.subr.bf16.mxu0 0
    %1124 = vmatpush1.bf16.xpose.msra.mxu0 0
    %1125 = vmatprep.subr.bf16.mxu0 0
    %1126 = vmatpush1.bf16.xpose.msra.mxu0 0
    %1127 = vmatprep.subr.bf16.mxu0 0
    %1128 = vmatpush1.bf16.xpose.msra.mxu0 0
    %1129 = vmatprep.mubr.bf16.mxu0 0
    %1130 = vmatmul.mubr.bf16.gmra.mrb[0].mxu0 %v1092
    %v1131 = vpop.f32.mrb[0].mxu0
    %v1132 = vadd.f32 %v84, %v1131
    %v1133 = vpop.f32.mrb[0].mxu0
    %v1134 = vpop.f32.mrb[0].mxu0
    %v1135 = vpop.f32.mrb[0].mxu0
    %1136 = vdwg.mxu0
    %1138 = vrot.lane.b32.xlu0 %v1087, 96
    %v1139 = vpop.permute.xlu0 %1138
    %v1141 = vsel %vm215, %v1087, 0
    %v1144 = vsel %vm215, %v1139, 0
    %1146 = vmatprep.subr.bf16.mxu0 0
    %1147 = vmatpush1.bf16.xpose.msra.mxu0 %v1144
    %1148 = vmatprep.subr.bf16.mxu0 0
    %1149 = vmatpush1.bf16.xpose.msra.mxu0 0
    %1150 = vmatprep.subr.bf16.mxu0 0
    %1151 = vmatpush1.bf16.xpose.msra.mxu0 0
    %1152 = vmatprep.subr.bf16.mxu0 0
    %1153 = vmatpush1.bf16.xpose.msra.mxu0 0
    %1154 = vmatprep.subr.bf16.mxu0 0
    %1155 = vmatpush1.bf16.xpose.msra.mxu0 0
    %1156 = vmatprep.subr.bf16.mxu0 0
    %1157 = vmatpush1.bf16.xpose.msra.mxu0 0
    %1158 = vmatprep.subr.bf16.mxu0 0
    %1159 = vmatpush1.bf16.xpose.msra.mxu0 0
    %1160 = vmatprep.subr.bf16.mxu0 0
    %1161 = vmatpush1.bf16.xpose.msra.mxu0 0
    %1162 = vmatprep.subr.bf16.mxu0 0
    %1163 = vmatpush1.bf16.xpose.msra.mxu0 0
    %1164 = vmatprep.subr.bf16.mxu0 0
    %1165 = vmatpush1.bf16.xpose.msra.mxu0 0
    %1166 = vmatprep.subr.bf16.mxu0 0
    %1167 = vmatpush1.bf16.xpose.msra.mxu0 0
    %1168 = vmatprep.subr.bf16.mxu0 0
    %1169 = vmatpush1.bf16.xpose.msra.mxu0 0
    %1170 = vmatprep.subr.bf16.mxu0 0
    %1171 = vmatpush1.bf16.xpose.msra.mxu0 0
    %1172 = vmatprep.subr.bf16.mxu0 0
    %1173 = vmatpush1.bf16.xpose.msra.mxu0 0
    %1174 = vmatprep.subr.bf16.mxu0 0
    %1175 = vmatpush1.bf16.xpose.msra.mxu0 0
    %1176 = vmatprep.subr.bf16.mxu0 0
    %1177 = vmatpush1.bf16.xpose.msra.mxu0 0
    %1178 = vmatprep.mubr.bf16.mxu0 0
    %1179 = vmatmul.mubr.bf16.gmra.mrb[0].mxu0 %v1141
    %v1180 = vpop.f32.mrb[0].mxu0
    %v1181 = vadd.f32 %v88, %v1180
    %v1182 = vpop.f32.mrb[0].mxu0
    %v1183 = vpop.f32.mrb[0].mxu0
    %v1184 = vpop.f32.mrb[0].mxu0
    %1185 = vdwg.mxu0
    %v1186 = vmul.f32 %v1132, 1.442695
    %v1187 = vpow.pop %v1186
    %v1188 = vmul.f32 %v1181, 1.442695
    %v1189 = vpow.pop %v1188
    %v1190 = vsel %vm315, %v1187, 0.0
    %1191 = vadd.xlane.f32.xlu0 %v1190
    %v1192 = vpop.xlane.xlu0 %1191
    %v1193 = vsel %vm315, %v1189, 0.0
    %1194 = vadd.xlane.f32.xlu0 %v1193
    %v1195 = vpop.xlane.xlu0 %1194
    %v1196 = vrcp.pop %v1192
    %v1197 = vmul.f32 %v1187, %v1196
    %v1198 = vrcp.pop %v1195
    %v1199 = vmul.f32 %v1189, %v1198
    %v1200 = vpack.c.bf16 %v1197, %v1197
    %v1201 = vpack.c.bf16 %v1199, %v1199
    %1202 = vrot.lane.b32.xlu0 %v1086, 64
    %v1203 = vpop.permute.xlu0 %1202
    %v1205 = vsel %vm315, %v1200, 0
    %v1208 = vsel %vm333, %v1203, 0
    %1210 = vmatprep.subr.bf16.mxu0 0
    %1211 = vmatpush1.bf16.msra.mxu0 %v1208
    %1212 = vmatprep.subr.bf16.mxu0 0
    %1213 = vmatpush1.bf16.msra.mxu0 0
    %1214 = vmatprep.subr.bf16.mxu0 0
    %1215 = vmatpush1.bf16.msra.mxu0 0
    %1216 = vmatprep.subr.bf16.mxu0 0
    %1217 = vmatpush1.bf16.msra.mxu0 0
    %1218 = vmatprep.subr.bf16.mxu0 0
    %1219 = vmatpush1.bf16.msra.mxu0 0
    %1220 = vmatprep.subr.bf16.mxu0 0
    %1221 = vmatpush1.bf16.msra.mxu0 0
    %1222 = vmatprep.subr.bf16.mxu0 0
    %1223 = vmatpush1.bf16.msra.mxu0 0
    %1224 = vmatprep.subr.bf16.mxu0 0
    %1225 = vmatpush1.bf16.msra.mxu0 0
    %1226 = vmatprep.subr.bf16.mxu0 0
    %1227 = vmatpush1.bf16.msra.mxu0 0
    %1228 = vmatprep.subr.bf16.mxu0 0
    %1229 = vmatpush1.bf16.msra.mxu0 0
    %1230 = vmatprep.subr.bf16.mxu0 0
    %1231 = vmatpush1.bf16.msra.mxu0 0
    %1232 = vmatprep.subr.bf16.mxu0 0
    %1233 = vmatpush1.bf16.msra.mxu0 0
    %1234 = vmatprep.subr.bf16.mxu0 0
    %1235 = vmatpush1.bf16.msra.mxu0 0
    %1236 = vmatprep.subr.bf16.mxu0 0
    %1237 = vmatpush1.bf16.msra.mxu0 0
    %1238 = vmatprep.subr.bf16.mxu0 0
    %1239 = vmatpush1.bf16.msra.mxu0 0
    %1240 = vmatprep.subr.bf16.mxu0 0
    %1241 = vmatpush1.bf16.msra.mxu0 0
    %1242 = vmatprep.mubr.bf16.mxu0 0
    %1243 = vmatmul.mubr.bf16.gmra.mrb[0].mxu0 %v1205
    %v1244 = vpop.f32.mrb[0].mxu0
    %v1245 = vadd.f32 0.0, %v1244
    %v1246 = vpop.f32.mrb[0].mxu0
    %v1247 = vpop.f32.mrb[0].mxu0
    %v1248 = vpop.f32.mrb[0].mxu0
    %1249 = vdwg.mxu0
    %1250 = vrot.lane.b32.xlu0 %v1087, 64
    %v1251 = vpop.permute.xlu0 %1250
    %v1253 = vsel %vm315, %v1201, 0
    %v1256 = vsel %vm333, %v1251, 0
    %1258 = vmatprep.subr.bf16.mxu0 0
    %1259 = vmatpush1.bf16.msra.mxu0 %v1256
    %1260 = vmatprep.subr.bf16.mxu0 0
    %1261 = vmatpush1.bf16.msra.mxu0 0
    %1262 = vmatprep.subr.bf16.mxu0 0
    %1263 = vmatpush1.bf16.msra.mxu0 0
    %1264 = vmatprep.subr.bf16.mxu0 0
    %1265 = vmatpush1.bf16.msra.mxu0 0
    %1266 = vmatprep.subr.bf16.mxu0 0
    %1267 = vmatpush1.bf16.msra.mxu0 0
    %1268 = vmatprep.subr.bf16.mxu0 0
    %1269 = vmatpush1.bf16.msra.mxu0 0
    %1270 = vmatprep.subr.bf16.mxu0 0
    %1271 = vmatpush1.bf16.msra.mxu0 0
    %1272 = vmatprep.subr.bf16.mxu0 0
    %1273 = vmatpush1.bf16.msra.mxu0 0
    %1274 = vmatprep.subr.bf16.mxu0 0
    %1275 = vmatpush1.bf16.msra.mxu0 0
    %1276 = vmatprep.subr.bf16.mxu0 0
    %1277 = vmatpush1.bf16.msra.mxu0 0
    %1278 = vmatprep.subr.bf16.mxu0 0
    %1279 = vmatpush1.bf16.msra.mxu0 0
    %1280 = vmatprep.subr.bf16.mxu0 0
    %1281 = vmatpush1.bf16.msra.mxu0 0
    %1282 = vmatprep.subr.bf16.mxu0 0
    %1283 = vmatpush1.bf16.msra.mxu0 0
    %1284 = vmatprep.subr.bf16.mxu0 0
    %1285 = vmatpush1.bf16.msra.mxu0 0
    %1286 = vmatprep.subr.bf16.mxu0 0
    %1287 = vmatpush1.bf16.msra.mxu0 0
    %1288 = vmatprep.subr.bf16.mxu0 0
    %1289 = vmatpush1.bf16.msra.mxu0 0
    %1290 = vmatprep.mubr.bf16.mxu0 0
    %1291 = vmatmul.mubr.bf16.gmra.mrb[0].mxu0 %v1253
    %v1292 = vpop.f32.mrb[0].mxu0
    %v1293 = vadd.f32 0.0, %v1292
    %v1294 = vpop.f32.mrb[0].mxu0
    %v1295 = vpop.f32.mrb[0].mxu0
    %v1296 = vpop.f32.mrb[0].mxu0
    %1297 = vdwg.mxu0
    %v1298 = vpack.c.bf16 %v1293, %v1245
    %1299 = vrot.lane.b32.xlu0 %v1086, 112
    %v1300 = vpop.permute.xlu0 %1299
    %1301 = vrot.lane.b32.xlu0 %v1086, 80
    %v1302 = vpop.permute.xlu0 %1301
    %v1304 = vsel %vm215, %v1300, 0
    %v1307 = vsel %vm215, %v1302, 0
    %1309 = vmatprep.subr.bf16.mxu0 0
    %1310 = vmatpush1.bf16.xpose.msra.mxu0 %v1307
    %1311 = vmatprep.subr.bf16.mxu0 0
    %1312 = vmatpush1.bf16.xpose.msra.mxu0 0
    %1313 = vmatprep.subr.bf16.mxu0 0
    %1314 = vmatpush1.bf16.xpose.msra.mxu0 0
    %1315 = vmatprep.subr.bf16.mxu0 0
    %1316 = vmatpush1.bf16.xpose.msra.mxu0 0
    %1317 = vmatprep.subr.bf16.mxu0 0
    %1318 = vmatpush1.bf16.xpose.msra.mxu0 0
    %1319 = vmatprep.subr.bf16.mxu0 0
    %1320 = vmatpush1.bf16.xpose.msra.mxu0 0
    %1321 = vmatprep.subr.bf16.mxu0 0
    %1322 = vmatpush1.bf16.xpose.msra.mxu0 0
    %1323 = vmatprep.subr.bf16.mxu0 0
    %1324 = vmatpush1.bf16.xpose.msra.mxu0 0
    %1325 = vmatprep.subr.bf16.mxu0 0
    %1326 = vmatpush1.bf16.xpose.msra.mxu0 0
    %1327 = vmatprep.subr.bf16.mxu0 0
    %1328 = vmatpush1.bf16.xpose.msra.mxu0 0
    %1329 = vmatprep.subr.bf16.mxu0 0
    %1330 = vmatpush1.bf16.xpose.msra.mxu0 0
    %1331 = vmatprep.subr.bf16.mxu0 0
    %1332 = vmatpush1.bf16.xpose.msra.mxu0 0
    %1333 = vmatprep.subr.bf16.mxu0 0
    %1334 = vmatpush1.bf16.xpose.msra.mxu0 0
    %1335 = vmatprep.subr.bf16.mxu0 0
    %1336 = vmatpush1.bf16.xpose.msra.mxu0 0
    %1337 = vmatprep.subr.bf16.mxu0 0
    %1338 = vmatpush1.bf16.xpose.msra.mxu0 0
    %1339 = vmatprep.subr.bf16.mxu0 0
    %1340 = vmatpush1.bf16.xpose.msra.mxu0 0
    %1341 = vmatprep.mubr.bf16.mxu0 0
    %1342 = vmatmul.mubr.bf16.gmra.mrb[0].mxu0 %v1304
    %v1343 = vpop.f32.mrb[0].mxu0
    %v1344 = vadd.f32 %v84, %v1343
    %v1345 = vpop.f32.mrb[0].mxu0
    %v1346 = vpop.f32.mrb[0].mxu0
    %v1347 = vpop.f32.mrb[0].mxu0
    %1348 = vdwg.mxu0
    %1349 = vrot.lane.b32.xlu0 %v1087, 112
    %v1350 = vpop.permute.xlu0 %1349
    %1351 = vrot.lane.b32.xlu0 %v1087, 80
    %v1352 = vpop.permute.xlu0 %1351
    %v1354 = vsel %vm215, %v1350, 0
    %v1357 = vsel %vm215, %v1352, 0
    %1359 = vmatprep.subr.bf16.mxu0 0
    %1360 = vmatpush1.bf16.xpose.msra.mxu0 %v1357
    %1361 = vmatprep.subr.bf16.mxu0 0
    %1362 = vmatpush1.bf16.xpose.msra.mxu0 0
    %1363 = vmatprep.subr.bf16.mxu0 0
    %1364 = vmatpush1.bf16.xpose.msra.mxu0 0
    %1365 = vmatprep.subr.bf16.mxu0 0
    %1366 = vmatpush1.bf16.xpose.msra.mxu0 0
    %1367 = vmatprep.subr.bf16.mxu0 0
    %1368 = vmatpush1.bf16.xpose.msra.mxu0 0
    %1369 = vmatprep.subr.bf16.mxu0 0
    %1370 = vmatpush1.bf16.xpose.msra.mxu0 0
    %1371 = vmatprep.subr.bf16.mxu0 0
    %1372 = vmatpush1.bf16.xpose.msra.mxu0 0
    %1373 = vmatprep.subr.bf16.mxu0 0
    %1374 = vmatpush1.bf16.xpose.msra.mxu0 0
    %1375 = vmatprep.subr.bf16.mxu0 0
    %1376 = vmatpush1.bf16.xpose.msra.mxu0 0
    %1377 = vmatprep.subr.bf16.mxu0 0
    %1378 = vmatpush1.bf16.xpose.msra.mxu0 0
    %1379 = vmatprep.subr.bf16.mxu0 0
    %1380 = vmatpush1.bf16.xpose.msra.mxu0 0
    %1381 = vmatprep.subr.bf16.mxu0 0
    %1382 = vmatpush1.bf16.xpose.msra.mxu0 0
    %1383 = vmatprep.subr.bf16.mxu0 0
    %1384 = vmatpush1.bf16.xpose.msra.mxu0 0
    %1385 = vmatprep.subr.bf16.mxu0 0
    %1386 = vmatpush1.bf16.xpose.msra.mxu0 0
    %1387 = vmatprep.subr.bf16.mxu0 0
    %1388 = vmatpush1.bf16.xpose.msra.mxu0 0
    %1389 = vmatprep.subr.bf16.mxu0 0
    %1390 = vmatpush1.bf16.xpose.msra.mxu0 0
    %1391 = vmatprep.mubr.bf16.mxu0 0
    %1392 = vmatmul.mubr.bf16.gmra.mrb[0].mxu0 %v1354
    %v1393 = vpop.f32.mrb[0].mxu0
    %v1394 = vadd.f32 %v88, %v1393
    %v1395 = vpop.f32.mrb[0].mxu0
    %v1396 = vpop.f32.mrb[0].mxu0
    %v1397 = vpop.f32.mrb[0].mxu0
    %1398 = vdwg.mxu0
    %v1399 = vmul.f32 %v1344, 1.442695
    %v1400 = vpow.pop %v1399
    %v1401 = vmul.f32 %v1394, 1.442695
    %v1402 = vpow.pop %v1401
    %v1403 = vsel %vm315, %v1400, 0.0
    %1404 = vadd.xlane.f32.xlu0 %v1403
    %v1405 = vpop.xlane.xlu0 %1404
    %v1406 = vsel %vm315, %v1402, 0.0
    %1407 = vadd.xlane.f32.xlu0 %v1406
    %v1408 = vpop.xlane.xlu0 %1407
    %v1409 = vrcp.pop %v1405
    %v1410 = vmul.f32 %v1400, %v1409
    %v1411 = vrcp.pop %v1408
    %v1412 = vmul.f32 %v1402, %v1411
    %v1413 = vpack.c.bf16 %v1410, %v1410
    %v1414 = vpack.c.bf16 %v1412, %v1412
    %1415 = vrot.lane.b32.xlu0 %v1086, 48
    %v1416 = vpop.permute.xlu0 %1415
    %v1418 = vsel %vm315, %v1413, 0
    %v1421 = vsel %vm333, %v1416, 0
    %1423 = vmatprep.subr.bf16.mxu0 0
    %1424 = vmatpush1.bf16.msra.mxu0 %v1421
    %1425 = vmatprep.subr.bf16.mxu0 0
    %1426 = vmatpush1.bf16.msra.mxu0 0
    %1427 = vmatprep.subr.bf16.mxu0 0
    %1428 = vmatpush1.bf16.msra.mxu0 0
    %1429 = vmatprep.subr.bf16.mxu0 0
    %1430 = vmatpush1.bf16.msra.mxu0 0
    %1431 = vmatprep.subr.bf16.mxu0 0
    %1432 = vmatpush1.bf16.msra.mxu0 0
    %1433 = vmatprep.subr.bf16.mxu0 0
    %1434 = vmatpush1.bf16.msra.mxu0 0
    %1435 = vmatprep.subr.bf16.mxu0 0
    %1436 = vmatpush1.bf16.msra.mxu0 0
    %1437 = vmatprep.subr.bf16.mxu0 0
    %1438 = vmatpush1.bf16.msra.mxu0 0
    %1439 = vmatprep.subr.bf16.mxu0 0
    %1440 = vmatpush1.bf16.msra.mxu0 0
    %1441 = vmatprep.subr.bf16.mxu0 0
    %1442 = vmatpush1.bf16.msra.mxu0 0
    %1443 = vmatprep.subr.bf16.mxu0 0
    %1444 = vmatpush1.bf16.msra.mxu0 0
    %1445 = vmatprep.subr.bf16.mxu0 0
    %1446 = vmatpush1.bf16.msra.mxu0 0
    %1447 = vmatprep.subr.bf16.mxu0 0
    %1448 = vmatpush1.bf16.msra.mxu0 0
    %1449 = vmatprep.subr.bf16.mxu0 0
    %1450 = vmatpush1.bf16.msra.mxu0 0
    %1451 = vmatprep.subr.bf16.mxu0 0
    %1452 = vmatpush1.bf16.msra.mxu0 0
    %1453 = vmatprep.subr.bf16.mxu0 0
    %1454 = vmatpush1.bf16.msra.mxu0 0
    %1455 = vmatprep.mubr.bf16.mxu0 0
    %1456 = vmatmul.mubr.bf16.gmra.mrb[0].mxu0 %v1418
    %v1457 = vpop.f32.mrb[0].mxu0
    %v1458 = vadd.f32 0.0, %v1457
    %v1459 = vpop.f32.mrb[0].mxu0
    %v1460 = vpop.f32.mrb[0].mxu0
    %v1461 = vpop.f32.mrb[0].mxu0
    %1462 = vdwg.mxu0
    %1463 = vrot.lane.b32.xlu0 %v1087, 48
    %v1464 = vpop.permute.xlu0 %1463
    %v1466 = vsel %vm315, %v1414, 0
    %v1469 = vsel %vm333, %v1464, 0
    %1471 = vmatprep.subr.bf16.mxu0 0
    %1472 = vmatpush1.bf16.msra.mxu0 %v1469
    %1473 = vmatprep.subr.bf16.mxu0 0
    %1474 = vmatpush1.bf16.msra.mxu0 0
    %1475 = vmatprep.subr.bf16.mxu0 0
    %1476 = vmatpush1.bf16.msra.mxu0 0
    %1477 = vmatprep.subr.bf16.mxu0 0
    %1478 = vmatpush1.bf16.msra.mxu0 0
    %1479 = vmatprep.subr.bf16.mxu0 0
    %1480 = vmatpush1.bf16.msra.mxu0 0
    %1481 = vmatprep.subr.bf16.mxu0 0
    %1482 = vmatpush1.bf16.msra.mxu0 0
    %1483 = vmatprep.subr.bf16.mxu0 0
    %1484 = vmatpush1.bf16.msra.mxu0 0
    %1485 = vmatprep.subr.bf16.mxu0 0
    %1486 = vmatpush1.bf16.msra.mxu0 0
    %1487 = vmatprep.subr.bf16.mxu0 0
    %1488 = vmatpush1.bf16.msra.mxu0 0
    %1489 = vmatprep.subr.bf16.mxu0 0
    %1490 = vmatpush1.bf16.msra.mxu0 0
    %1491 = vmatprep.subr.bf16.mxu0 0
    %1492 = vmatpush1.bf16.msra.mxu0 0
    %1493 = vmatprep.subr.bf16.mxu0 0
    %1494 = vmatpush1.bf16.msra.mxu0 0
    %1495 = vmatprep.subr.bf16.mxu0 0
    %1496 = vmatpush1.bf16.msra.mxu0 0
    %1497 = vmatprep.subr.bf16.mxu0 0
    %1498 = vmatpush1.bf16.msra.mxu0 0
    %1499 = vmatprep.subr.bf16.mxu0 0
    %1500 = vmatpush1.bf16.msra.mxu0 0
    %1501 = vmatprep.subr.bf16.mxu0 0
    %1502 = vmatpush1.bf16.msra.mxu0 0
    %1503 = vmatprep.mubr.bf16.mxu0 0
    %1504 = vmatmul.mubr.bf16.gmra.mrb[0].mxu0 %v1466
    %v1505 = vpop.f32.mrb[0].mxu0
    %v1506 = vadd.f32 0.0, %v1505
    %v1507 = vpop.f32.mrb[0].mxu0
    %v1508 = vpop.f32.mrb[0].mxu0
    %v1509 = vpop.f32.mrb[0].mxu0
    %1510 = vdwg.mxu0
    %v1511 = vpack.c.bf16 %v1506, %v1458
    %v1514 = vunpack.c.l.b16 %v1084
    %v1515 = vunpack.c.l.b16 %v1085
    %v1516 = vpack.c.b16 %v1515, %v1514
    %v1519 = vsel %vm215, %v1511, 0
    %1521 = vmatprep.subr.bf16.mxu0 0
    %1522 = vmatpush1.bf16.msra.mxu0 %v1516
    %1523 = vmatprep.subr.bf16.mxu0 0
    %1524 = vmatpush1.bf16.msra.mxu0 0
    %1525 = vmatprep.subr.bf16.mxu0 0
    %1526 = vmatpush1.bf16.msra.mxu0 0
    %1527 = vmatprep.subr.bf16.mxu0 0
    %1528 = vmatpush1.bf16.msra.mxu0 0
    %1529 = vmatprep.subr.bf16.mxu0 0
    %1530 = vmatpush1.bf16.msra.mxu0 0
    %1531 = vmatprep.subr.bf16.mxu0 0
    %1532 = vmatpush1.bf16.msra.mxu0 0
    %1533 = vmatprep.subr.bf16.mxu0 0
    %1534 = vmatpush1.bf16.msra.mxu0 0
    %1535 = vmatprep.subr.bf16.mxu0 0
    %1536 = vmatpush1.bf16.msra.mxu0 0
    %1537 = vmatprep.subr.bf16.mxu0 0
    %1538 = vmatpush1.bf16.msra.mxu0 0
    %1539 = vmatprep.subr.bf16.mxu0 0
    %1540 = vmatpush1.bf16.msra.mxu0 0
    %1541 = vmatprep.subr.bf16.mxu0 0
    %1542 = vmatpush1.bf16.msra.mxu0 0
    %1543 = vmatprep.subr.bf16.mxu0 0
    %1544 = vmatpush1.bf16.msra.mxu0 0
    %1545 = vmatprep.subr.bf16.mxu0 0
    %1546 = vmatpush1.bf16.msra.mxu0 0
    %1547 = vmatprep.subr.bf16.mxu0 0
    %1548 = vmatpush1.bf16.msra.mxu0 0
    %1549 = vmatprep.subr.bf16.mxu0 0
    %1550 = vmatpush1.bf16.msra.mxu0 0
    %1551 = vmatprep.subr.bf16.mxu0 0
    %1552 = vmatpush1.bf16.msra.mxu0 0
    %1553 = vmatprep.mubr.bf16.mxu0 0
    %1554 = vmatmul.mubr.bf16.gmra.mrb[0].mxu0 %v1519
    %v1555 = vpop.f32.mrb[0].mxu0
    %v1556 = vadd.f32 0.0, %v1555
    %v1557 = vpop.f32.mrb[0].mxu0
    %v1558 = vpop.f32.mrb[0].mxu0
    %v1559 = vadd.f32 0.0, %v1558
    %v1560 = vpop.f32.mrb[0].mxu0
    %1561 = vdwg.mxu0
    %v1564 = vunpack.c.l.b16 %v1082
    %v1565 = vunpack.c.l.b16 %v1083
    %v1566 = vpack.c.b16 %v1565, %v1564
    %v1569 = vsel %vm215, %v1298, 0
    %1571 = vmatprep.subr.bf16.mxu0 0
    %1572 = vmatpush1.bf16.msra.mxu0 %v1566
    %1573 = vmatprep.subr.bf16.mxu0 0
    %1574 = vmatpush1.bf16.msra.mxu0 0
    %1575 = vmatprep.subr.bf16.mxu0 0
    %1576 = vmatpush1.bf16.msra.mxu0 0
    %1577 = vmatprep.subr.bf16.mxu0 0
    %1578 = vmatpush1.bf16.msra.mxu0 0
    %1579 = vmatprep.subr.bf16.mxu0 0
    %1580 = vmatpush1.bf16.msra.mxu0 0
    %1581 = vmatprep.subr.bf16.mxu0 0
    %1582 = vmatpush1.bf16.msra.mxu0 0
    %1583 = vmatprep.subr.bf16.mxu0 0
    %1584 = vmatpush1.bf16.msra.mxu0 0
    %1585 = vmatprep.subr.bf16.mxu0 0
    %1586 = vmatpush1.bf16.msra.mxu0 0
    %1587 = vmatprep.subr.bf16.mxu0 0
    %1588 = vmatpush1.bf16.msra.mxu0 0
    %1589 = vmatprep.subr.bf16.mxu0 0
    %1590 = vmatpush1.bf16.msra.mxu0 0
    %1591 = vmatprep.subr.bf16.mxu0 0
    %1592 = vmatpush1.bf16.msra.mxu0 0
    %1593 = vmatprep.subr.bf16.mxu0 0
    %1594 = vmatpush1.bf16.msra.mxu0 0
    %1595 = vmatprep.subr.bf16.mxu0 0
    %1596 = vmatpush1.bf16.msra.mxu0 0
    %1597 = vmatprep.subr.bf16.mxu0 0
    %1598 = vmatpush1.bf16.msra.mxu0 0
    %1599 = vmatprep.subr.bf16.mxu0 0
    %1600 = vmatpush1.bf16.msra.mxu0 0
    %1601 = vmatprep.subr.bf16.mxu0 0
    %1602 = vmatpush1.bf16.msra.mxu0 0
    %1603 = vmatprep.mubr.bf16.mxu0 0
    %1604 = vmatmul.mubr.bf16.gmra.mrb[0].mxu0 %v1569
    %v1605 = vpop.f32.mrb[0].mxu0
    %v1606 = vadd.f32 %v1556, %v1605
    %v1607 = vpop.f32.mrb[0].mxu0
    %v1608 = vpop.f32.mrb[0].mxu0
    %v1609 = vadd.f32 %v1559, %v1608
    %v1610 = vpop.f32.mrb[0].mxu0
    %1611 = vdwg.mxu0
    %s1612 = scalar_lea.vmem %s7, 1
    %v1613 = vld [vmem:[%s1612] sm:$0x1]
    %v1615 = vlaneseq
    %v1616 = vshrl.u32 %v1615, 7
    %v1617 = vsub.s32 0, %v1616
    %v1618 = vrot.slane %v1613, %v1617
    %v1620 = vadd.f32 %v1606, %v1618
    %v1621 = vadd.f32 %v1609, %v1618
    %v1622 = vadd.f32 %v1620, %v1009
    %v1623 = vadd.f32 %v1621, %v1010
    %s1624 = scalar_lea.vmem %s8, 1
    %v1625 = vld [vmem:[%s1624] sm:$0x1]
    %s1626 = scalar_lea.vmem %s9, 1
    %v1627 = vld [vmem:[%s1626] sm:$0x1]
    %v1628 = vsel %vm95, %v1622, 0.0
    %1629 = vadd.xlane.f32.xlu0 %v1628
    %v1630 = vpop.xlane.xlu0 %1629
    %v1631 = vsel %vm95, %v1623, 0.0
    %1632 = vadd.xlane.f32.xlu0 %v1631
    %v1633 = vpop.xlane.xlu0 %1632
    %v1634 = vmul.f32 %v1630, 0.03125
    %v1635 = vmul.f32 %v1633, 0.03125
    %v1636 = vsub.f32 %v1622, %v1634
    %v1637 = vsub.f32 %v1623, %v1635
    %v1638 = vmul.f32 %v1636, %v1636
    %v1639 = vmul.f32 %v1637, %v1637
    %v1640 = vsel %vm95, %v1638, 0.0
    %1641 = vadd.xlane.f32.xlu0 %v1640
    %v1642 = vpop.xlane.xlu0 %1641
    %v1643 = vsel %vm95, %v1639, 0.0
    %1644 = vadd.xlane.f32.xlu0 %v1643
    %v1645 = vpop.xlane.xlu0 %1644
    %v1646 = vmul.f32 %v1642, 0.03125
    %v1647 = vmul.f32 %v1645, 0.03125
    %v1648 = vadd.f32 %v1646, 1e-12
    %v1649 = vadd.f32 %v1647, 1e-12
    %v1650 = vrsqrt.pop %v1648
    %v1651 = vrsqrt.pop %v1649
    %v1652 = vmul.f32 %v1636, %v1650
    %v1653 = vmul.f32 %v1637, %v1651
    %v1655 = vlaneseq
    %v1656 = vshrl.u32 %v1655, 7
    %v1657 = vsub.s32 0, %v1656
    %v1658 = vrot.slane %v1625, %v1657
    %v1660 = vmul.f32 %v1652, %v1658
    %v1661 = vmul.f32 %v1653, %v1658
    %v1663 = vlaneseq
    %v1664 = vshrl.u32 %v1663, 7
    %v1665 = vsub.s32 0, %v1664
    %v1666 = vrot.slane %v1627, %v1665
    %v1668 = vadd.f32 %v1660, %v1666
    %v1669 = vadd.f32 %v1661, %v1666
    %v1670 = vpack.c.bf16 %v1669, %v1668
    %s1671 = scalar_lea.vmem %s10, 16
    %v1672 = vld [vmem:[%s1671] sm:$0xf]
    %v1673 = vld [vmem:[%s1671 + $0x4] sm:$0xf]
    %v1674 = vld [vmem:[%s1671 + $0x8] sm:$0xf]
    %v1675 = vld [vmem:[%s1671 + $0xc] sm:$0xf]
    %s1676 = scalar_lea.vmem %s11, 1
    %v1677 = vld [vmem:[%s1676] sm:$0x1]
    %v1679 = vlaneseq
    %v1680 = vshrl.u32 %v1679, 7
    %v1681 = vsub.s32 0, %v1680
    %v1682 = vrot.slane %v1677, %v1681
    %v1688 = vunpack.c.l.b16 %v1672
    %v1689 = vunpack.c.l.b16 %v1673
    %v1690 = vunpack.c.l.b16 %v1674
    %v1691 = vunpack.c.l.b16 %v1675
    %v1692 = vpack.c.b16 %v1689, %v1688
    %v1693 = vpack.c.b16 %v1691, %v1690
    %v1697 = vsel %vm95, %v1670, 0
    %1699 = vmatprep.subr.bf16.mxu0 0
    %1700 = vmatpush1.bf16.msra.mxu0 %v1692
    %1701 = vmatprep.subr.bf16.mxu0 0
    %1702 = vmatpush1.bf16.msra.mxu0 %v1693
    %1703 = vmatprep.subr.bf16.mxu0 0
    %1704 = vmatpush1.bf16.msra.mxu0 0
    %1705 = vmatprep.subr.bf16.mxu0 0
    %1706 = vmatpush1.bf16.msra.mxu0 0
    %1707 = vmatprep.subr.bf16.mxu0 0
    %1708 = vmatpush1.bf16.msra.mxu0 0
    %1709 = vmatprep.subr.bf16.mxu0 0
    %1710 = vmatpush1.bf16.msra.mxu0 0
    %1711 = vmatprep.subr.bf16.mxu0 0
    %1712 = vmatpush1.bf16.msra.mxu0 0
    %1713 = vmatprep.subr.bf16.mxu0 0
    %1714 = vmatpush1.bf16.msra.mxu0 0
    %1715 = vmatprep.subr.bf16.mxu0 0
    %1716 = vmatpush1.bf16.msra.mxu0 0
    %1717 = vmatprep.subr.bf16.mxu0 0
    %1718 = vmatpush1.bf16.msra.mxu0 0
    %1719 = vmatprep.subr.bf16.mxu0 0
    %1720 = vmatpush1.bf16.msra.mxu0 0
    %1721 = vmatprep.subr.bf16.mxu0 0
    %1722 = vmatpush1.bf16.msra.mxu0 0
    %1723 = vmatprep.subr.bf16.mxu0 0
    %1724 = vmatpush1.bf16.msra.mxu0 0
    %1725 = vmatprep.subr.bf16.mxu0 0
    %1726 = vmatpush1.bf16.msra.mxu0 0
    %1727 = vmatprep.subr.bf16.mxu0 0
    %1728 = vmatpush1.bf16.msra.mxu0 0
    %1729 = vmatprep.subr.bf16.mxu0 0
    %1730 = vmatpush1.bf16.msra.mxu0 0
    %1731 = vmatprep.mubr.bf16.mxu0 0
    %1732 = vmatmul.mubr.bf16.gmra.mrb[0].mxu0 %v1697
    %v1733 = vpop.f32.mrb[0].mxu0
    %v1734 = vadd.f32 %v1682, %v1733
    %v1735 = vpop.f32.mrb[0].mxu0
    %v1736 = vpop.f32.mrb[0].mxu0
    %v1737 = vadd.f32 %v1682, %v1736
    %v1738 = vpop.f32.mrb[0].mxu0
    %1739 = vdwg.mxu0
    %v1740 = vmul.f32 %v1734, 0.5
    %v1741 = vmul.f32 %v1737, 0.5
    %v1742 = vmul.f32 %v1734, 0.044715
    %v1743 = vmul.f32 %v1737, 0.044715
    %v1744 = vmul.f32 %v1742, %v1734
    %v1745 = vmul.f32 %v1743, %v1737
    %v1746 = vmul.f32 %v1744, %v1734
    %v1747 = vmul.f32 %v1745, %v1737
    %v1748 = vadd.f32 %v1734, %v1746
    %v1749 = vadd.f32 %v1737, %v1747
    %v1750 = vmul.f32 %v1748, 0.7978846
    %v1751 = vmul.f32 %v1749, 0.7978846
    %v1752 = vtanh.pop %v1750
    %v1753 = vtanh.pop %v1751
    %v1754 = vadd.f32 %v1752, 1.0
    %v1755 = vadd.f32 %v1753, 1.0
    %v1756 = vmul.f32 %v1740, %v1754
    %v1757 = vmul.f32 %v1741, %v1755
    %v1758 = vpack.c.bf16 %v1757, %v1756
    %s1759 = scalar_lea.vmem %s12, 32
    %v1760 = vld [vmem:[%s1759] sm:$0xf]
    %v1761 = vld [vmem:[%s1759 + $0x4] sm:$0xf]
    %v1762 = vld [vmem:[%s1759 + $0x8] sm:$0xf]
    %v1763 = vld [vmem:[%s1759 + $0xc] sm:$0xf]
    %v1764 = vld [vmem:[%s1759 + $0x10] sm:$0xf]
    %v1765 = vld [vmem:[%s1759 + $0x14] sm:$0xf]
    %v1766 = vld [vmem:[%s1759 + $0x18] sm:$0xf]
    %v1767 = vld [vmem:[%s1759 + $0x1c] sm:$0xf]
    %s1768 = scalar_lea.vmem %s13, 1
    %v1769 = vld [vmem:[%s1768] sm:$0x1]
    %v1771 = vlaneseq
    %v1772 = vshrl.u32 %v1771, 7
    %v1773 = vsub.s32 0, %v1772
    %v1774 = vrot.slane %v1769, %v1773
    %v1784 = vunpack.c.l.b16 %v1760
    %v1785 = vunpack.c.l.b16 %v1761
    %v1786 = vunpack.c.l.b16 %v1762
    %v1787 = vunpack.c.l.b16 %v1763
    %v1788 = vunpack.c.l.b16 %v1764
    %v1789 = vunpack.c.l.b16 %v1765
    %v1790 = vunpack.c.l.b16 %v1766
    %v1791 = vunpack.c.l.b16 %v1767
    %v1792 = vpack.c.b16 %v1785, %v1784
    %v1793 = vpack.c.b16 %v1787, %v1786
    %v1794 = vpack.c.b16 %v1789, %v1788
    %v1795 = vpack.c.b16 %v1791, %v1790
    %v1801 = vsel %vm920, %v1758, 0
    %1803 = vmatprep.subr.bf16.mxu0 0
    %1804 = vmatpush1.bf16.msra.mxu0 %v1792
    %1805 = vmatprep.subr.bf16.mxu0 0
    %1806 = vmatpush1.bf16.msra.mxu0 %v1793
    %1807 = vmatprep.subr.bf16.mxu0 0
    %1808 = vmatpush1.bf16.msra.mxu0 %v1794
    %1809 = vmatprep.subr.bf16.mxu0 0
    %1810 = vmatpush1.bf16.msra.mxu0 %v1795
    %1811 = vmatprep.subr.bf16.mxu0 0
    %1812 = vmatpush1.bf16.msra.mxu0 0
    %1813 = vmatprep.subr.bf16.mxu0 0
    %1814 = vmatpush1.bf16.msra.mxu0 0
    %1815 = vmatprep.subr.bf16.mxu0 0
    %1816 = vmatpush1.bf16.msra.mxu0 0
    %1817 = vmatprep.subr.bf16.mxu0 0
    %1818 = vmatpush1.bf16.msra.mxu0 0
    %1819 = vmatprep.subr.bf16.mxu0 0
    %1820 = vmatpush1.bf16.msra.mxu0 0
    %1821 = vmatprep.subr.bf16.mxu0 0
    %1822 = vmatpush1.bf16.msra.mxu0 0
    %1823 = vmatprep.subr.bf16.mxu0 0
    %1824 = vmatpush1.bf16.msra.mxu0 0
    %1825 = vmatprep.subr.bf16.mxu0 0
    %1826 = vmatpush1.bf16.msra.mxu0 0
    %1827 = vmatprep.subr.bf16.mxu0 0
    %1828 = vmatpush1.bf16.msra.mxu0 0
    %1829 = vmatprep.subr.bf16.mxu0 0
    %1830 = vmatpush1.bf16.msra.mxu0 0
    %1831 = vmatprep.subr.bf16.mxu0 0
    %1832 = vmatpush1.bf16.msra.mxu0 0
    %1833 = vmatprep.subr.bf16.mxu0 0
    %1834 = vmatpush1.bf16.msra.mxu0 0
    %1835 = vmatprep.mubr.bf16.mxu0 0
    %1836 = vmatmul.mubr.bf16.gmra.mrb[0].mxu0 %v1801
    %v1837 = vpop.f32.mrb[0].mxu0
    %v1838 = vadd.f32 %v1774, %v1837
    %v1839 = vpop.f32.mrb[0].mxu0
    %v1840 = vpop.f32.mrb[0].mxu0
    %v1841 = vadd.f32 %v1774, %v1840
    %v1842 = vpop.f32.mrb[0].mxu0
    %1843 = vdwg.mxu0
    %v1844 = vadd.f32 %v1838, %v1668
    %v1845 = vadd.f32 %v1841, %v1669
    %s1846 = scalar_lea.vmem %s14, 1
    %v1847 = vld [vmem:[%s1846] sm:$0x1]
    %s1848 = scalar_lea.vmem %s15, 1
    %v1849 = vld [vmem:[%s1848] sm:$0x1]
    %v1850 = vsel %vm95, %v1844, 0.0
    %1851 = vadd.xlane.f32.xlu0 %v1850
    %v1852 = vpop.xlane.xlu0 %1851
    %v1853 = vsel %vm95, %v1845, 0.0
    %1854 = vadd.xlane.f32.xlu0 %v1853
    %v1855 = vpop.xlane.xlu0 %1854
    %v1856 = vmul.f32 %v1852, 0.03125
    %v1857 = vmul.f32 %v1855, 0.03125
    %v1858 = vsub.f32 %v1844, %v1856
    %v1859 = vsub.f32 %v1845, %v1857
    %v1860 = vmul.f32 %v1858, %v1858
    %v1861 = vmul.f32 %v1859, %v1859
    %v1862 = vsel %vm95, %v1860, 0.0
    %1863 = vadd.xlane.f32.xlu0 %v1862
    %v1864 = vpop.xlane.xlu0 %1863
    %v1865 = vsel %vm95, %v1861, 0.0
    %1866 = vadd.xlane.f32.xlu0 %v1865
    %v1867 = vpop.xlane.xlu0 %1866
    %v1868 = vmul.f32 %v1864, 0.03125
    %v1869 = vmul.f32 %v1867, 0.03125
    %v1870 = vadd.f32 %v1868, 1e-12
    %v1871 = vadd.f32 %v1869, 1e-12
    %v1872 = vrsqrt.pop %v1870
    %v1873 = vrsqrt.pop %v1871
    %v1874 = vmul.f32 %v1858, %v1872
    %v1875 = vmul.f32 %v1859, %v1873
    %v1877 = vlaneseq
    %v1878 = vshrl.u32 %v1877, 7
    %v1879 = vsub.s32 0, %v1878
    %v1880 = vrot.slane %v1847, %v1879
    %v1882 = vmul.f32 %v1874, %v1880
    %v1883 = vmul.f32 %v1875, %v1880
    %v1885 = vlaneseq
    %v1886 = vshrl.u32 %v1885, 7
    %v1887 = vsub.s32 0, %v1886
    %v1888 = vrot.slane %v1849, %v1887
    %v1890 = vadd.f32 %v1882, %v1888
    %v1891 = vadd.f32 %v1883, %v1888
    %v1892 = vadd.f32 %v1009, %v1890
    %v1893 = vadd.f32 %v1010, %v1891
    %v1894 = vpack.c.bf16 %v1891, %v1890
    %s1895 = scalar_lea.vmem %s4, 32
    %v1896 = vld [vmem:[%s1895] sm:$0xf]
    %v1897 = vld [vmem:[%s1895 + $0x4] sm:$0xf]
    %v1898 = vld [vmem:[%s1895 + $0x8] sm:$0xf]
    %v1899 = vld [vmem:[%s1895 + $0xc] sm:$0xf]
    %s1900 = scalar_lea.vmem %s5, 2
    %v1901 = vld [vmem:[%s1900] sm:$0x1]
    %v1903 = vlaneseq
    %v1904 = vshrl.u32 %v1903, 7
    %v1905 = vsub.s32 0, %v1904
    %v1906 = vrot.slane %v1901, %v1905
    %v1912 = vunpack.c.l.b16 %v1896
    %v1913 = vunpack.c.l.b16 %v1897
    %v1914 = vunpack.c.l.b16 %v1898
    %v1915 = vunpack.c.l.b16 %v1899
    %v1916 = vpack.c.b16 %v1913, %v1912
    %v1917 = vpack.c.b16 %v1915, %v1914
    %v1921 = vsel %vm95, %v1894, 0
    %1923 = vmatprep.subr.bf16.mxu0 0
    %1924 = vmatpush1.bf16.msra.mxu0 %v1916
    %1925 = vmatprep.subr.bf16.mxu0 0
    %1926 = vmatpush1.bf16.msra.mxu0 %v1917
    %1927 = vmatprep.subr.bf16.mxu0 0
    %1928 = vmatpush1.bf16.msra.mxu0 0
    %1929 = vmatprep.subr.bf16.mxu0 0
    %1930 = vmatpush1.bf16.msra.mxu0 0
    %1931 = vmatprep.subr.bf16.mxu0 0
    %1932 = vmatpush1.bf16.msra.mxu0 0
    %1933 = vmatprep.subr.bf16.mxu0 0
    %1934 = vmatpush1.bf16.msra.mxu0 0
    %1935 = vmatprep.subr.bf16.mxu0 0
    %1936 = vmatpush1.bf16.msra.mxu0 0
    %1937 = vmatprep.subr.bf16.mxu0 0
    %1938 = vmatpush1.bf16.msra.mxu0 0
    %1939 = vmatprep.subr.bf16.mxu0 0
    %1940 = vmatpush1.bf16.msra.mxu0 0
    %1941 = vmatprep.subr.bf16.mxu0 0
    %1942 = vmatpush1.bf16.msra.mxu0 0
    %1943 = vmatprep.subr.bf16.mxu0 0
    %1944 = vmatpush1.bf16.msra.mxu0 0
    %1945 = vmatprep.subr.bf16.mxu0 0
    %1946 = vmatpush1.bf16.msra.mxu0 0
    %1947 = vmatprep.subr.bf16.mxu0 0
    %1948 = vmatpush1.bf16.msra.mxu0 0
    %1949 = vmatprep.subr.bf16.mxu0 0
    %1950 = vmatpush1.bf16.msra.mxu0 0
    %1951 = vmatprep.subr.bf16.mxu0 0
    %1952 = vmatpush1.bf16.msra.mxu0 0
    %1953 = vmatprep.subr.bf16.mxu0 0
    %1954 = vmatpush1.bf16.msra.mxu0 0
    %1955 = vmatprep.mubr.bf16.mxu0 0
    %1956 = vmatmul.mubr.bf16.gmra.mrb[0].mxu0 %v1921
    %v1957 = vpop.f32.mrb[0].mxu0
    %v1958 = vadd.f32 %v1906, %v1957
    %v1959 = vpop.f32.mrb[0].mxu0
    %v1960 = vpop.f32.mrb[0].mxu0
    %v1961 = vadd.f32 %v1906, %v1960
    %v1962 = vpop.f32.mrb[0].mxu0
    %1963 = vdwg.mxu0
    %s1964 = scalar_lea.vmem %s6, 32
    %v1965 = vld [vmem:[%s1964] sm:$0xf]
    %v1966 = vld [vmem:[%s1964 + $0x4] sm:$0xf]
    %v1967 = vld [vmem:[%s1964 + $0x8] sm:$0xf]
    %v1968 = vld [vmem:[%s1964 + $0xc] sm:$0xf]
    %v1969 = vpack.c.bf16 %v1958, %v1958
    %v1970 = vpack.c.bf16 %v1961, %v1961
    %1972 = vrot.lane.b32.xlu0 %v1969, 96
    %v1973 = vpop.permute.xlu0 %1972
    %v1975 = vsel %vm215, %v1969, 0
    %v1978 = vsel %vm215, %v1973, 0
    %1980 = vmatprep.subr.bf16.mxu0 0
    %1981 = vmatpush1.bf16.xpose.msra.mxu0 %v1978
    %1982 = vmatprep.subr.bf16.mxu0 0
    %1983 = vmatpush1.bf16.xpose.msra.mxu0 0
    %1984 = vmatprep.subr.bf16.mxu0 0
    %1985 = vmatpush1.bf16.xpose.msra.mxu0 0
    %1986 = vmatprep.subr.bf16.mxu0 0
    %1987 = vmatpush1.bf16.xpose.msra.mxu0 0
    %1988 = vmatprep.subr.bf16.mxu0 0
    %1989 = vmatpush1.bf16.xpose.msra.mxu0 0
    %1990 = vmatprep.subr.bf16.mxu0 0
    %1991 = vmatpush1.bf16.xpose.msra.mxu0 0
    %1992 = vmatprep.subr.bf16.mxu0 0
    %1993 = vmatpush1.bf16.xpose.msra.mxu0 0
    %1994 = vmatprep.subr.bf16.mxu0 0
    %1995 = vmatpush1.bf16.xpose.msra.mxu0 0
    %1996 = vmatprep.subr.bf16.mxu0 0
    %1997 = vmatpush1.bf16.xpose.msra.mxu0 0
    %1998 = vmatprep.subr.bf16.mxu0 0
    %1999 = vmatpush1.bf16.xpose.msra.mxu0 0
    %2000 = vmatprep.subr.bf16.mxu0 0
    %2001 = vmatpush1.bf16.xpose.msra.mxu0 0
    %2002 = vmatprep.subr.bf16.mxu0 0
    %2003 = vmatpush1.bf16.xpose.msra.mxu0 0
    %2004 = vmatprep.subr.bf16.mxu0 0
    %2005 = vmatpush1.bf16.xpose.msra.mxu0 0
    %2006 = vmatprep.subr.bf16.mxu0 0
    %2007 = vmatpush1.bf16.xpose.msra.mxu0 0
    %2008 = vmatprep.subr.bf16.mxu0 0
    %2009 = vmatpush1.bf16.xpose.msra.mxu0 0
    %2010 = vmatprep.subr.bf16.mxu0 0
    %2011 = vmatpush1.bf16.xpose.msra.mxu0 0
    %2012 = vmatprep.mubr.bf16.mxu0 0
    %2013 = vmatmul.mubr.bf16.gmra.mrb[0].mxu0 %v1975
    %v2014 = vpop.f32.mrb[0].mxu0
    %v2015 = vadd.f32 %v84, %v2014
    %v2016 = vpop.f32.mrb[0].mxu0
    %v2017 = vpop.f32.mrb[0].mxu0
    %v2018 = vpop.f32.mrb[0].mxu0
    %2019 = vdwg.mxu0
    %2021 = vrot.lane.b32.xlu0 %v1970, 96
    %v2022 = vpop.permute.xlu0 %2021
    %v2024 = vsel %vm215, %v1970, 0
    %v2027 = vsel %vm215, %v2022, 0
    %2029 = vmatprep.subr.bf16.mxu0 0
    %2030 = vmatpush1.bf16.xpose.msra.mxu0 %v2027
    %2031 = vmatprep.subr.bf16.mxu0 0
    %2032 = vmatpush1.bf16.xpose.msra.mxu0 0
    %2033 = vmatprep.subr.bf16.mxu0 0
    %2034 = vmatpush1.bf16.xpose.msra.mxu0 0
    %2035 = vmatprep.subr.bf16.mxu0 0
    %2036 = vmatpush1.bf16.xpose.msra.mxu0 0
    %2037 = vmatprep.subr.bf16.mxu0 0
    %2038 = vmatpush1.bf16.xpose.msra.mxu0 0
    %2039 = vmatprep.subr.bf16.mxu0 0
    %2040 = vmatpush1.bf16.xpose.msra.mxu0 0
    %2041 = vmatprep.subr.bf16.mxu0 0
    %2042 = vmatpush1.bf16.xpose.msra.mxu0 0
    %2043 = vmatprep.subr.bf16.mxu0 0
    %2044 = vmatpush1.bf16.xpose.msra.mxu0 0
    %2045 = vmatprep.subr.bf16.mxu0 0
    %2046 = vmatpush1.bf16.xpose.msra.mxu0 0
    %2047 = vmatprep.subr.bf16.mxu0 0
    %2048 = vmatpush1.bf16.xpose.msra.mxu0 0
    %2049 = vmatprep.subr.bf16.mxu0 0
    %2050 = vmatpush1.bf16.xpose.msra.mxu0 0
    %2051 = vmatprep.subr.bf16.mxu0 0
    %2052 = vmatpush1.bf16.xpose.msra.mxu0 0
    %2053 = vmatprep.subr.bf16.mxu0 0
    %2054 = vmatpush1.bf16.xpose.msra.mxu0 0
    %2055 = vmatprep.subr.bf16.mxu0 0
    %2056 = vmatpush1.bf16.xpose.msra.mxu0 0
    %2057 = vmatprep.subr.bf16.mxu0 0
    %2058 = vmatpush1.bf16.xpose.msra.mxu0 0
    %2059 = vmatprep.subr.bf16.mxu0 0
    %2060 = vmatpush1.bf16.xpose.msra.mxu0 0
    %2061 = vmatprep.mubr.bf16.mxu0 0
    %2062 = vmatmul.mubr.bf16.gmra.mrb[0].mxu0 %v2024
    %v2063 = vpop.f32.mrb[0].mxu0
    %v2064 = vadd.f32 %v88, %v2063
    %v2065 = vpop.f32.mrb[0].mxu0
    %v2066 = vpop.f32.mrb[0].mxu0
    %v2067 = vpop.f32.mrb[0].mxu0
    %2068 = vdwg.mxu0
    %v2069 = vmul.f32 %v2015, 1.442695
    %v2070 = vpow.pop %v2069
    %v2071 = vmul.f32 %v2064, 1.442695
    %v2072 = vpow.pop %v2071
    %v2073 = vsel %vm315, %v2070, 0.0
    %2074 = vadd.xlane.f32.xlu0 %v2073
    %v2075 = vpop.xlane.xlu0 %2074
    %v2076 = vsel %vm315, %v2072, 0.0
    %2077 = vadd.xlane.f32.xlu0 %v2076
    %v2078 = vpop.xlane.xlu0 %2077
    %v2079 = vrcp.pop %v2075
    %v2080 = vmul.f32 %v2070, %v2079
    %v2081 = vrcp.pop %v2078
    %v2082 = vmul.f32 %v2072, %v2081
    %v2083 = vpack.c.bf16 %v2080, %v2080
    %v2084 = vpack.c.bf16 %v2082, %v2082
    %2085 = vrot.lane.b32.xlu0 %v1969, 64
    %v2086 = vpop.permute.xlu0 %2085
    %v2088 = vsel %vm315, %v2083, 0
    %v2091 = vsel %vm333, %v2086, 0
    %2093 = vmatprep.subr.bf16.mxu0 0
    %2094 = vmatpush1.bf16.msra.mxu0 %v2091
    %2095 = vmatprep.subr.bf16.mxu0 0
    %2096 = vmatpush1.bf16.msra.mxu0 0
    %2097 = vmatprep.subr.bf16.mxu0 0
    %2098 = vmatpush1.bf16.msra.mxu0 0
    %2099 = vmatprep.subr.bf16.mxu0 0
    %2100 = vmatpush1.bf16.msra.mxu0 0
    %2101 = vmatprep.subr.bf16.mxu0 0
    %2102 = vmatpush1.bf16.msra.mxu0 0
    %2103 = vmatprep.subr.bf16.mxu0 0
    %2104 = vmatpush1.bf16.msra.mxu0 0
    %2105 = vmatprep.subr.bf16.mxu0 0
    %2106 = vmatpush1.bf16.msra.mxu0 0
    %2107 = vmatprep.subr.bf16.mxu0 0
    %2108 = vmatpush1.bf16.msra.mxu0 0
    %2109 = vmatprep.subr.bf16.mxu0 0
    %2110 = vmatpush1.bf16.msra.mxu0 0
    %2111 = vmatprep.subr.bf16.mxu0 0
    %2112 = vmatpush1.bf16.msra.mxu0 0
    %2113 = vmatprep.subr.bf16.mxu0 0
    %2114 = vmatpush1.bf16.msra.mxu0 0
    %2115 = vmatprep.subr.bf16.mxu0 0
    %2116 = vmatpush1.bf16.msra.mxu0 0
    %2117 = vmatprep.subr.bf16.mxu0 0
    %2118 = vmatpush1.bf16.msra.mxu0 0
    %2119 = vmatprep.subr.bf16.mxu0 0
    %2120 = vmatpush1.bf16.msra.mxu0 0
    %2121 = vmatprep.subr.bf16.mxu0 0
    %2122 = vmatpush1.bf16.msra.mxu0 0
    %2123 = vmatprep.subr.bf16.mxu0 0
    %2124 = vmatpush1.bf16.msra.mxu0 0
    %2125 = vmatprep.mubr.bf16.mxu0 0
    %2126 = vmatmul.mubr.bf16.gmra.mrb[0].mxu0 %v2088
    %v2127 = vpop.f32.mrb[0].mxu0
    %v2128 = vadd.f32 0.0, %v2127
    %v2129 = vpop.f32.mrb[0].mxu0
    %v2130 = vpop.f32.mrb[0].mxu0
    %v2131 = vpop.f32.mrb[0].mxu0
    %2132 = vdwg.mxu0
    %2133 = vrot.lane.b32.xlu0 %v1970, 64
    %v2134 = vpop.permute.xlu0 %2133
    %v2136 = vsel %vm315, %v2084, 0
    %v2139 = vsel %vm333, %v2134, 0
    %2141 = vmatprep.subr.bf16.mxu0 0
    %2142 = vmatpush1.bf16.msra.mxu0 %v2139
    %2143 = vmatprep.subr.bf16.mxu0 0
    %2144 = vmatpush1.bf16.msra.mxu0 0
    %2145 = vmatprep.subr.bf16.mxu0 0
    %2146 = vmatpush1.bf16.msra.mxu0 0
    %2147 = vmatprep.subr.bf16.mxu0 0
    %2148 = vmatpush1.bf16.msra.mxu0 0
    %2149 = vmatprep.subr.bf16.mxu0 0
    %2150 = vmatpush1.bf16.msra.mxu0 0
    %2151 = vmatprep.subr.bf16.mxu0 0
    %2152 = vmatpush1.bf16.msra.mxu0 0
    %2153 = vmatprep.subr.bf16.mxu0 0
    %2154 = vmatpush1.bf16.msra.mxu0 0
    %2155 = vmatprep.subr.bf16.mxu0 0
    %2156 = vmatpush1.bf16.msra.mxu0 0
    %2157 = vmatprep.subr.bf16.mxu0 0
    %2158 = vmatpush1.bf16.msra.mxu0 0
    %2159 = vmatprep.subr.bf16.mxu0 0
    %2160 = vmatpush1.bf16.msra.mxu0 0
    %2161 = vmatprep.subr.bf16.mxu0 0
    %2162 = vmatpush1.bf16.msra.mxu0 0
    %2163 = vmatprep.subr.bf16.mxu0 0
    %2164 = vmatpush1.bf16.msra.mxu0 0
    %2165 = vmatprep.subr.bf16.mxu0 0
    %2166 = vmatpush1.bf16.msra.mxu0 0
    %2167 = vmatprep.subr.bf16.mxu0 0
    %2168 = vmatpush1.bf16.msra.mxu0 0
    %2169 = vmatprep.subr.bf16.mxu0 0
    %2170 = vmatpush1.bf16.msra.mxu0 0
    %2171 = vmatprep.subr.bf16.mxu0 0
    %2172 = vmatpush1.bf16.msra.mxu0 0
    %2173 = vmatprep.mubr.bf16.mxu0 0
    %2174 = vmatmul.mubr.bf16.gmra.mrb[0].mxu0 %v2136
    %v2175 = vpop.f32.mrb[0].mxu0
    %v2176 = vadd.f32 0.0, %v2175
    %v2177 = vpop.f32.mrb[0].mxu0
    %v2178 = vpop.f32.mrb[0].mxu0
    %v2179 = vpop.f32.mrb[0].mxu0
    %2180 = vdwg.mxu0
    %v2181 = vpack.c.bf16 %v2176, %v2128
    %2182 = vrot.lane.b32.xlu0 %v1969, 112
    %v2183 = vpop.permute.xlu0 %2182
    %2184 = vrot.lane.b32.xlu0 %v1969, 80
    %v2185 = vpop.permute.xlu0 %2184
    %v2187 = vsel %vm215, %v2183, 0
    %v2190 = vsel %vm215, %v2185, 0
    %2192 = vmatprep.subr.bf16.mxu0 0
    %2193 = vmatpush1.bf16.xpose.msra.mxu0 %v2190
    %2194 = vmatprep.subr.bf16.mxu0 0
    %2195 = vmatpush1.bf16.xpose.msra.mxu0 0
    %2196 = vmatprep.subr.bf16.mxu0 0
    %2197 = vmatpush1.bf16.xpose.msra.mxu0 0
    %2198 = vmatprep.subr.bf16.mxu0 0
    %2199 = vmatpush1.bf16.xpose.msra.mxu0 0
    %2200 = vmatprep.subr.bf16.mxu0 0
    %2201 = vmatpush1.bf16.xpose.msra.mxu0 0
    %2202 = vmatprep.subr.bf16.mxu0 0
    %2203 = vmatpush1.bf16.xpose.msra.mxu0 0
    %2204 = vmatprep.subr.bf16.mxu0 0
    %2205 = vmatpush1.bf16.xpose.msra.mxu0 0
    %2206 = vmatprep.subr.bf16.mxu0 0
    %2207 = vmatpush1.bf16.xpose.msra.mxu0 0
    %2208 = vmatprep.subr.bf16.mxu0 0
    %2209 = vmatpush1.bf16.xpose.msra.mxu0 0
    %2210 = vmatprep.subr.bf16.mxu0 0
    %2211 = vmatpush1.bf16.xpose.msra.mxu0 0
    %2212 = vmatprep.subr.bf16.mxu0 0
    %2213 = vmatpush1.bf16.xpose.msra.mxu0 0
    %2214 = vmatprep.subr.bf16.mxu0 0
    %2215 = vmatpush1.bf16.xpose.msra.mxu0 0
    %2216 = vmatprep.subr.bf16.mxu0 0
    %2217 = vmatpush1.bf16.xpose.msra.mxu0 0
    %2218 = vmatprep.subr.bf16.mxu0 0
    %2219 = vmatpush1.bf16.xpose.msra.mxu0 0
    %2220 = vmatprep.subr.bf16.mxu0 0
    %2221 = vmatpush1.bf16.xpose.msra.mxu0 0
    %2222 = vmatprep.subr.bf16.mxu0 0
    %2223 = vmatpush1.bf16.xpose.msra.mxu0 0
    %2224 = vmatprep.mubr.bf16.mxu0 0
    %2225 = vmatmul.mubr.bf16.gmra.mrb[0].mxu0 %v2187
    %v2226 = vpop.f32.mrb[0].mxu0
    %v2227 = vadd.f32 %v84, %v2226
    %v2228 = vpop.f32.mrb[0].mxu0
    %v2229 = vpop.f32.mrb[0].mxu0
    %v2230 = vpop.f32.mrb[0].mxu0
    %2231 = vdwg.mxu0
    %2232 = vrot.lane.b32.xlu0 %v1970, 112
    %v2233 = vpop.permute.xlu0 %2232
    %2234 = vrot.lane.b32.xlu0 %v1970, 80
    %v2235 = vpop.permute.xlu0 %2234
    %v2237 = vsel %vm215, %v2233, 0
    %v2240 = vsel %vm215, %v2235, 0
    %2242 = vmatprep.subr.bf16.mxu0 0
    %2243 = vmatpush1.bf16.xpose.msra.mxu0 %v2240
    %2244 = vmatprep.subr.bf16.mxu0 0
    %2245 = vmatpush1.bf16.xpose.msra.mxu0 0
    %2246 = vmatprep.subr.bf16.mxu0 0
    %2247 = vmatpush1.bf16.xpose.msra.mxu0 0
    %2248 = vmatprep.subr.bf16.mxu0 0
    %2249 = vmatpush1.bf16.xpose.msra.mxu0 0
    %2250 = vmatprep.subr.bf16.mxu0 0
    %2251 = vmatpush1.bf16.xpose.msra.mxu0 0
    %2252 = vmatprep.subr.bf16.mxu0 0
    %2253 = vmatpush1.bf16.xpose.msra.mxu0 0
    %2254 = vmatprep.subr.bf16.mxu0 0
    %2255 = vmatpush1.bf16.xpose.msra.mxu0 0
    %2256 = vmatprep.subr.bf16.mxu0 0
    %2257 = vmatpush1.bf16.xpose.msra.mxu0 0
    %2258 = vmatprep.subr.bf16.mxu0 0
    %2259 = vmatpush1.bf16.xpose.msra.mxu0 0
    %2260 = vmatprep.subr.bf16.mxu0 0
    %2261 = vmatpush1.bf16.xpose.msra.mxu0 0
    %2262 = vmatprep.subr.bf16.mxu0 0
    %2263 = vmatpush1.bf16.xpose.msra.mxu0 0
    %2264 = vmatprep.subr.bf16.mxu0 0
    %2265 = vmatpush1.bf16.xpose.msra.mxu0 0
    %2266 = vmatprep.subr.bf16.mxu0 0
    %2267 = vmatpush1.bf16.xpose.msra.mxu0 0
    %2268 = vmatprep.subr.bf16.mxu0 0
    %2269 = vmatpush1.bf16.xpose.msra.mxu0 0
    %2270 = vmatprep.subr.bf16.mxu0 0
    %2271 = vmatpush1.bf16.xpose.msra.mxu0 0
    %2272 = vmatprep.subr.bf16.mxu0 0
    %2273 = vmatpush1.bf16.xpose.msra.mxu0 0
    %2274 = vmatprep.mubr.bf16.mxu0 0
    %2275 = vmatmul.mubr.bf16.gmra.mrb[0].mxu0 %v2237
    %v2276 = vpop.f32.mrb[0].mxu0
    %v2277 = vadd.f32 %v88, %v2276
    %v2278 = vpop.f32.mrb[0].mxu0
    %v2279 = vpop.f32.mrb[0].mxu0
    %v2280 = vpop.f32.mrb[0].mxu0
    %2281 = vdwg.mxu0
    %v2282 = vmul.f32 %v2227, 1.442695
    %v2283 = vpow.pop %v2282
    %v2284 = vmul.f32 %v2277, 1.442695
    %v2285 = vpow.pop %v2284
    %v2286 = vsel %vm315, %v2283, 0.0
    %2287 = vadd.xlane.f32.xlu0 %v2286
    %v2288 = vpop.xlane.xlu0 %2287
    %v2289 = vsel %vm315, %v2285, 0.0
    %2290 = vadd.xlane.f32.xlu0 %v2289
    %v2291 = vpop.xlane.xlu0 %2290
    %v2292 = vrcp.pop %v2288
    %v2293 = vmul.f32 %v2283, %v2292
    %v2294 = vrcp.pop %v2291
    %v2295 = vmul.f32 %v2285, %v2294
    %v2296 = vpack.c.bf16 %v2293, %v2293
    %v2297 = vpack.c.bf16 %v2295, %v2295
    %2298 = vrot.lane.b32.xlu0 %v1969, 48
    %v2299 = vpop.permute.xlu0 %2298
    %v2301 = vsel %vm315, %v2296, 0
    %v2304 = vsel %vm333, %v2299, 0
    %2306 = vmatprep.subr.bf16.mxu0 0
    %2307 = vmatpush1.bf16.msra.mxu0 %v2304
    %2308 = vmatprep.subr.bf16.mxu0 0
    %2309 = vmatpush1.bf16.msra.mxu0 0
    %2310 = vmatprep.subr.bf16.mxu0 0
    %2311 = vmatpush1.bf16.msra.mxu0 0
    %2312 = vmatprep.subr.bf16.mxu0 0
    %2313 = vmatpush1.bf16.msra.mxu0 0
    %2314 = vmatprep.subr.bf16.mxu0 0
    %2315 = vmatpush1.bf16.msra.mxu0 0
    %2316 = vmatprep.subr.bf16.mxu0 0
    %2317 = vmatpush1.bf16.msra.mxu0 0
    %2318 = vmatprep.subr.bf16.mxu0 0
    %2319 = vmatpush1.bf16.msra.mxu0 0
    %2320 = vmatprep.subr.bf16.mxu0 0
    %2321 = vmatpush1.bf16.msra.mxu0 0
    %2322 = vmatprep.subr.bf16.mxu0 0
    %2323 = vmatpush1.bf16.msra.mxu0 0
    %2324 = vmatprep.subr.bf16.mxu0 0
    %2325 = vmatpush1.bf16.msra.mxu0 0
    %2326 = vmatprep.subr.bf16.mxu0 0
    %2327 = vmatpush1.bf16.msra.mxu0 0
    %2328 = vmatprep.subr.bf16.mxu0 0
    %2329 = vmatpush1.bf16.msra.mxu0 0
    %2330 = vmatprep.subr.bf16.mxu0 0
    %2331 = vmatpush1.bf16.msra.mxu0 0
    %2332 = vmatprep.subr.bf16.mxu0 0
    %2333 = vmatpush1.bf16.msra.mxu0 0
    %2334 = vmatprep.subr.bf16.mxu0 0
    %2335 = vmatpush1.bf16.msra.mxu0 0
    %2336 = vmatprep.subr.bf16.mxu0 0
    %2337 = vmatpush1.bf16.msra.mxu0 0
    %2338 = vmatprep.mubr.bf16.mxu0 0
    %2339 = vmatmul.mubr.bf16.gmra.mrb[0].mxu0 %v2301
    %v2340 = vpop.f32.mrb[0].mxu0
    %v2341 = vadd.f32 0.0, %v2340
    %v2342 = vpop.f32.mrb[0].mxu0
    %v2343 = vpop.f32.mrb[0].mxu0
    %v2344 = vpop.f32.mrb[0].mxu0
    %2345 = vdwg.mxu0
    %2346 = vrot.lane.b32.xlu0 %v1970, 48
    %v2347 = vpop.permute.xlu0 %2346
    %v2349 = vsel %vm315, %v2297, 0
    %v2352 = vsel %vm333, %v2347, 0
    %2354 = vmatprep.subr.bf16.mxu0 0
    %2355 = vmatpush1.bf16.msra.mxu0 %v2352
    %2356 = vmatprep.subr.bf16.mxu0 0
    %2357 = vmatpush1.bf16.msra.mxu0 0
    %2358 = vmatprep.subr.bf16.mxu0 0
    %2359 = vmatpush1.bf16.msra.mxu0 0
    %2360 = vmatprep.subr.bf16.mxu0 0
    %2361 = vmatpush1.bf16.msra.mxu0 0
    %2362 = vmatprep.subr.bf16.mxu0 0
    %2363 = vmatpush1.bf16.msra.mxu0 0
    %2364 = vmatprep.subr.bf16.mxu0 0
    %2365 = vmatpush1.bf16.msra.mxu0 0
    %2366 = vmatprep.subr.bf16.mxu0 0
    %2367 = vmatpush1.bf16.msra.mxu0 0
    %2368 = vmatprep.subr.bf16.mxu0 0
    %2369 = vmatpush1.bf16.msra.mxu0 0
    %2370 = vmatprep.subr.bf16.mxu0 0
    %2371 = vmatpush1.bf16.msra.mxu0 0
    %2372 = vmatprep.subr.bf16.mxu0 0
    %2373 = vmatpush1.bf16.msra.mxu0 0
    %2374 = vmatprep.subr.bf16.mxu0 0
    %2375 = vmatpush1.bf16.msra.mxu0 0
    %2376 = vmatprep.subr.bf16.mxu0 0
    %2377 = vmatpush1.bf16.msra.mxu0 0
    %2378 = vmatprep.subr.bf16.mxu0 0
    %2379 = vmatpush1.bf16.msra.mxu0 0
    %2380 = vmatprep.subr.bf16.mxu0 0
    %2381 = vmatpush1.bf16.msra.mxu0 0
    %2382 = vmatprep.subr.bf16.mxu0 0
    %2383 = vmatpush1.bf16.msra.mxu0 0
    %2384 = vmatprep.subr.bf16.mxu0 0
    %2385 = vmatpush1.bf16.msra.mxu0 0
    %2386 = vmatprep.mubr.bf16.mxu0 0
    %2387 = vmatmul.mubr.bf16.gmra.mrb[0].mxu0 %v2349
    %v2388 = vpop.f32.mrb[0].mxu0
    %v2389 = vadd.f32 0.0, %v2388
    %v2390 = vpop.f32.mrb[0].mxu0
    %v2391 = vpop.f32.mrb[0].mxu0
    %v2392 = vpop.f32.mrb[0].mxu0
    %2393 = vdwg.mxu0
    %v2394 = vpack.c.bf16 %v2389, %v2341
    %v2397 = vunpack.c.l.b16 %v1967
    %v2398 = vunpack.c.l.b16 %v1968
    %v2399 = vpack.c.b16 %v2398, %v2397
    %v2402 = vsel %vm215, %v2394, 0
    %2404 = vmatprep.subr.bf16.mxu0 0
    %2405 = vmatpush1.bf16.msra.mxu0 %v2399
    %2406 = vmatprep.subr.bf16.mxu0 0
    %2407 = vmatpush1.bf16.msra.mxu0 0
    %2408 = vmatprep.subr.bf16.mxu0 0
    %2409 = vmatpush1.bf16.msra.mxu0 0
    %2410 = vmatprep.subr.bf16.mxu0 0
    %2411 = vmatpush1.bf16.msra.mxu0 0
    %2412 = vmatprep.subr.bf16.mxu0 0
    %2413 = vmatpush1.bf16.msra.mxu0 0
    %2414 = vmatprep.subr.bf16.mxu0 0
    %2415 = vmatpush1.bf16.msra.mxu0 0
    %2416 = vmatprep.subr.bf16.mxu0 0
    %2417 = vmatpush1.bf16.msra.mxu0 0
    %2418 = vmatprep.subr.bf16.mxu0 0
    %2419 = vmatpush1.bf16.msra.mxu0 0
    %2420 = vmatprep.subr.bf16.mxu0 0
    %2421 = vmatpush1.bf16.msra.mxu0 0
    %2422 = vmatprep.subr.bf16.mxu0 0
    %2423 = vmatpush1.bf16.msra.mxu0 0
    %2424 = vmatprep.subr.bf16.mxu0 0
    %2425 = vmatpush1.bf16.msra.mxu0 0
    %2426 = vmatprep.subr.bf16.mxu0 0
    %2427 = vmatpush1.bf16.msra.mxu0 0
    %2428 = vmatprep.subr.bf16.mxu0 0
    %2429 = vmatpush1.bf16.msra.mxu0 0
    %2430 = vmatprep.subr.bf16.mxu0 0
    %2431 = vmatpush1.bf16.msra.mxu0 0
    %2432 = vmatprep.subr.bf16.mxu0 0
    %2433 = vmatpush1.bf16.msra.mxu0 0
    %2434 = vmatprep.subr.bf16.mxu0 0
    %2435 = vmatpush1.bf16.msra.mxu0 0
    %2436 = vmatprep.mubr.bf16.mxu0 0
    %2437 = vmatmul.mubr.bf16.gmra.mrb[0].mxu0 %v2402
    %v2438 = vpop.f32.mrb[0].mxu0
    %v2439 = vadd.f32 0.0, %v2438
    %v2440 = vpop.f32.mrb[0].mxu0
    %v2441 = vpop.f32.mrb[0].mxu0
    %v2442 = vadd.f32 0.0, %v2441
    %v2443 = vpop.f32.mrb[0].mxu0
    %2444 = vdwg.mxu0
    %v2447 = vunpack.c.l.b16 %v1965
    %v2448 = vunpack.c.l.b16 %v1966
    %v2449 = vpack.c.b16 %v2448, %v2447
    %v2452 = vsel %vm215, %v2181, 0
    %2454 = vmatprep.subr.bf16.mxu0 0
    %2455 = vmatpush1.bf16.msra.mxu0 %v2449
    %2456 = vmatprep.subr.bf16.mxu0 0
    %2457 = vmatpush1.bf16.msra.mxu0 0
    %2458 = vmatprep.subr.bf16.mxu0 0
    %2459 = vmatpush1.bf16.msra.mxu0 0
    %2460 = vmatprep.subr.bf16.mxu0 0
    %2461 = vmatpush1.bf16.msra.mxu0 0
    %2462 = vmatprep.subr.bf16.mxu0 0
    %2463 = vmatpush1.bf16.msra.mxu0 0
    %2464 = vmatprep.subr.bf16.mxu0 0
    %2465 = vmatpush1.bf16.msra.mxu0 0
    %2466 = vmatprep.subr.bf16.mxu0 0
    %2467 = vmatpush1.bf16.msra.mxu0 0
    %2468 = vmatprep.subr.bf16.mxu0 0
    %2469 = vmatpush1.bf16.msra.mxu0 0
    %2470 = vmatprep.subr.bf16.mxu0 0
    %2471 = vmatpush1.bf16.msra.mxu0 0
    %2472 = vmatprep.subr.bf16.mxu0 0
    %2473 = vmatpush1.bf16.msra.mxu0 0
    %2474 = vmatprep.subr.bf16.mxu0 0
    %2475 = vmatpush1.bf16.msra.mxu0 0
    %2476 = vmatprep.subr.bf16.mxu0 0
    %2477 = vmatpush1.bf16.msra.mxu0 0
    %2478 = vmatprep.subr.bf16.mxu0 0
    %2479 = vmatpush1.bf16.msra.mxu0 0
    %2480 = vmatprep.subr.bf16.mxu0 0
    %2481 = vmatpush1.bf16.msra.mxu0 0
    %2482 = vmatprep.subr.bf16.mxu0 0
    %2483 = vmatpush1.bf16.msra.mxu0 0
    %2484 = vmatprep.subr.bf16.mxu0 0
    %2485 = vmatpush1.bf16.msra.mxu0 0
    %2486 = vmatprep.mubr.bf16.mxu0 0
    %2487 = vmatmul.mubr.bf16.gmra.mrb[0].mxu0 %v2452
    %v2488 = vpop.f32.mrb[0].mxu0
    %v2489 = vadd.f32 %v2439, %v2488
    %v2490 = vpop.f32.mrb[0].mxu0
    %v2491 = vpop.f32.mrb[0].mxu0
    %v2492 = vadd.f32 %v2442, %v2491
    %v2493 = vpop.f32.mrb[0].mxu0
    %2494 = vdwg.mxu0
    %s2495 = scalar_lea.vmem %s7, 2
    %v2496 = vld [vmem:[%s2495] sm:$0x1]
    %v2498 = vlaneseq
    %v2499 = vshrl.u32 %v2498, 7
    %v2500 = vsub.s32 0, %v2499
    %v2501 = vrot.slane %v2496, %v2500
    %v2503 = vadd.f32 %v2489, %v2501
    %v2504 = vadd.f32 %v2492, %v2501
    %v2505 = vadd.f32 %v2503, %v1890
    %v2506 = vadd.f32 %v2504, %v1891
    %s2507 = scalar_lea.vmem %s8, 2
    %v2508 = vld [vmem:[%s2507] sm:$0x1]
    %s2509 = scalar_lea.vmem %s9, 2
    %v2510 = vld [vmem:[%s2509] sm:$0x1]
    %v2511 = vsel %vm95, %v2505, 0.0
    %2512 = vadd.xlane.f32.xlu0 %v2511
    %v2513 = vpop.xlane.xlu0 %2512
    %v2514 = vsel %vm95, %v2506, 0.0
    %2515 = vadd.xlane.f32.xlu0 %v2514
    %v2516 = vpop.xlane.xlu0 %2515
    %v2517 = vmul.f32 %v2513, 0.03125
    %v2518 = vmul.f32 %v2516, 0.03125
    %v2519 = vsub.f32 %v2505, %v2517
    %v2520 = vsub.f32 %v2506, %v2518
    %v2521 = vmul.f32 %v2519, %v2519
    %v2522 = vmul.f32 %v2520, %v2520
    %v2523 = vsel %vm95, %v2521, 0.0
    %2524 = vadd.xlane.f32.xlu0 %v2523
    %v2525 = vpop.xlane.xlu0 %2524
    %v2526 = vsel %vm95, %v2522, 0.0
    %2527 = vadd.xlane.f32.xlu0 %v2526
    %v2528 = vpop.xlane.xlu0 %2527
    %v2529 = vmul.f32 %v2525, 0.03125
    %v2530 = vmul.f32 %v2528, 0.03125
    %v2531 = vadd.f32 %v2529, 1e-12
    %v2532 = vadd.f32 %v2530, 1e-12
    %v2533 = vrsqrt.pop %v2531
    %v2534 = vrsqrt.pop %v2532
    %v2535 = vmul.f32 %v2519, %v2533
    %v2536 = vmul.f32 %v2520, %v2534
    %v2538 = vlaneseq
    %v2539 = vshrl.u32 %v2538, 7
    %v2540 = vsub.s32 0, %v2539
    %v2541 = vrot.slane %v2508, %v2540
    %v2543 = vmul.f32 %v2535, %v2541
    %v2544 = vmul.f32 %v2536, %v2541
    %v2546 = vlaneseq
    %v2547 = vshrl.u32 %v2546, 7
    %v2548 = vsub.s32 0, %v2547
    %v2549 = vrot.slane %v2510, %v2548
    %v2551 = vadd.f32 %v2543, %v2549
    %v2552 = vadd.f32 %v2544, %v2549
    %v2553 = vpack.c.bf16 %v2552, %v2551
    %s2554 = scalar_lea.vmem %s10, 32
    %v2555 = vld [vmem:[%s2554] sm:$0xf]
    %v2556 = vld [vmem:[%s2554 + $0x4] sm:$0xf]
    %v2557 = vld [vmem:[%s2554 + $0x8] sm:$0xf]
    %v2558 = vld [vmem:[%s2554 + $0xc] sm:$0xf]
    %s2559 = scalar_lea.vmem %s11, 2
    %v2560 = vld [vmem:[%s2559] sm:$0x1]
    %v2562 = vlaneseq
    %v2563 = vshrl.u32 %v2562, 7
    %v2564 = vsub.s32 0, %v2563
    %v2565 = vrot.slane %v2560, %v2564
    %v2571 = vunpack.c.l.b16 %v2555
    %v2572 = vunpack.c.l.b16 %v2556
    %v2573 = vunpack.c.l.b16 %v2557
    %v2574 = vunpack.c.l.b16 %v2558
    %v2575 = vpack.c.b16 %v2572, %v2571
    %v2576 = vpack.c.b16 %v2574, %v2573
    %v2580 = vsel %vm95, %v2553, 0
    %2582 = vmatprep.subr.bf16.mxu0 0
    %2583 = vmatpush1.bf16.msra.mxu0 %v2575
    %2584 = vmatprep.subr.bf16.mxu0 0
    %2585 = vmatpush1.bf16.msra.mxu0 %v2576
    %2586 = vmatprep.subr.bf16.mxu0 0
    %2587 = vmatpush1.bf16.msra.mxu0 0
    %2588 = vmatprep.subr.bf16.mxu0 0
    %2589 = vmatpush1.bf16.msra.mxu0 0
    %2590 = vmatprep.subr.bf16.mxu0 0
    %2591 = vmatpush1.bf16.msra.mxu0 0
    %2592 = vmatprep.subr.bf16.mxu0 0
    %2593 = vmatpush1.bf16.msra.mxu0 0
    %2594 = vmatprep.subr.bf16.mxu0 0
    %2595 = vmatpush1.bf16.msra.mxu0 0
    %2596 = vmatprep.subr.bf16.mxu0 0
    %2597 = vmatpush1.bf16.msra.mxu0 0
    %2598 = vmatprep.subr.bf16.mxu0 0
    %2599 = vmatpush1.bf16.msra.mxu0 0
    %2600 = vmatprep.subr.bf16.mxu0 0
    %2601 = vmatpush1.bf16.msra.mxu0 0
    %2602 = vmatprep.subr.bf16.mxu0 0
    %2603 = vmatpush1.bf16.msra.mxu0 0
    %2604 = vmatprep.subr.bf16.mxu0 0
    %2605 = vmatpush1.bf16.msra.mxu0 0
    %2606 = vmatprep.subr.bf16.mxu0 0
    %2607 = vmatpush1.bf16.msra.mxu0 0
    %2608 = vmatprep.subr.bf16.mxu0 0
    %2609 = vmatpush1.bf16.msra.mxu0 0
    %2610 = vmatprep.subr.bf16.mxu0 0
    %2611 = vmatpush1.bf16.msra.mxu0 0
    %2612 = vmatprep.subr.bf16.mxu0 0
    %2613 = vmatpush1.bf16.msra.mxu0 0
    %2614 = vmatprep.mubr.bf16.mxu0 0
    %2615 = vmatmul.mubr.bf16.gmra.mrb[0].mxu0 %v2580
    %v2616 = vpop.f32.mrb[0].mxu0
    %v2617 = vadd.f32 %v2565, %v2616
    %v2618 = vpop.f32.mrb[0].mxu0
    %v2619 = vpop.f32.mrb[0].mxu0
    %v2620 = vadd.f32 %v2565, %v2619
    %v2621 = vpop.f32.mrb[0].mxu0
    %2622 = vdwg.mxu0
    %v2623 = vmul.f32 %v2617, 0.5
    %v2624 = vmul.f32 %v2620, 0.5
    %v2625 = vmul.f32 %v2617, 0.044715
    %v2626 = vmul.f32 %v2620, 0.044715
    %v2627 = vmul.f32 %v2625, %v2617
    %v2628 = vmul.f32 %v2626, %v2620
    %v2629 = vmul.f32 %v2627, %v2617
    %v2630 = vmul.f32 %v2628, %v2620
    %v2631 = vadd.f32 %v2617, %v2629
    %v2632 = vadd.f32 %v2620, %v2630
    %v2633 = vmul.f32 %v2631, 0.7978846
    %v2634 = vmul.f32 %v2632, 0.7978846
    %v2635 = vtanh.pop %v2633
    %v2636 = vtanh.pop %v2634
    %v2637 = vadd.f32 %v2635, 1.0
    %v2638 = vadd.f32 %v2636, 1.0
    %v2639 = vmul.f32 %v2623, %v2637
    %v2640 = vmul.f32 %v2624, %v2638
    %v2641 = vpack.c.bf16 %v2640, %v2639
    %s2642 = scalar_lea.vmem %s12, 64
    %v2643 = vld [vmem:[%s2642] sm:$0xf]
    %v2644 = vld [vmem:[%s2642 + $0x4] sm:$0xf]
    %v2645 = vld [vmem:[%s2642 + $0x8] sm:$0xf]
    %v2646 = vld [vmem:[%s2642 + $0xc] sm:$0xf]
    %v2647 = vld [vmem:[%s2642 + $0x10] sm:$0xf]
    %v2648 = vld [vmem:[%s2642 + $0x14] sm:$0xf]
    %v2649 = vld [vmem:[%s2642 + $0x18] sm:$0xf]
    %v2650 = vld [vmem:[%s2642 + $0x1c] sm:$0xf]
    %s2651 = scalar_lea.vmem %s13, 2
    %v2652 = vld [vmem:[%s2651] sm:$0x1]
    %v2654 = vlaneseq
    %v2655 = vshrl.u32 %v2654, 7
    %v2656 = vsub.s32 0, %v2655
    %v2657 = vrot.slane %v2652, %v2656
    %v2667 = vunpack.c.l.b16 %v2643
    %v2668 = vunpack.c.l.b16 %v2644
    %v2669 = vunpack.c.l.b16 %v2645
    %v2670 = vunpack.c.l.b16 %v2646
    %v2671 = vunpack.c.l.b16 %v2647
    %v2672 = vunpack.c.l.b16 %v2648
    %v2673 = vunpack.c.l.b16 %v2649
    %v2674 = vunpack.c.l.b16 %v2650
    %v2675 = vpack.c.b16 %v2668, %v2667
    %v2676 = vpack.c.b16 %v2670, %v2669
    %v2677 = vpack.c.b16 %v2672, %v2671
    %v2678 = vpack.c.b16 %v2674, %v2673
    %v2684 = vsel %vm920, %v2641, 0
    %2686 = vmatprep.subr.bf16.mxu0 0
    %2687 = vmatpush1.bf16.msra.mxu0 %v2675
    %2688 = vmatprep.subr.bf16.mxu0 0
    %2689 = vmatpush1.bf16.msra.mxu0 %v2676
    %2690 = vmatprep.subr.bf16.mxu0 0
    %2691 = vmatpush1.bf16.msra.mxu0 %v2677
    %2692 = vmatprep.subr.bf16.mxu0 0
    %2693 = vmatpush1.bf16.msra.mxu0 %v2678
    %2694 = vmatprep.subr.bf16.mxu0 0
    %2695 = vmatpush1.bf16.msra.mxu0 0
    %2696 = vmatprep.subr.bf16.mxu0 0
    %2697 = vmatpush1.bf16.msra.mxu0 0
    %2698 = vmatprep.subr.bf16.mxu0 0
    %2699 = vmatpush1.bf16.msra.mxu0 0
    %2700 = vmatprep.subr.bf16.mxu0 0
    %2701 = vmatpush1.bf16.msra.mxu0 0
    %2702 = vmatprep.subr.bf16.mxu0 0
    %2703 = vmatpush1.bf16.msra.mxu0 0
    %2704 = vmatprep.subr.bf16.mxu0 0
    %2705 = vmatpush1.bf16.msra.mxu0 0
    %2706 = vmatprep.subr.bf16.mxu0 0
    %2707 = vmatpush1.bf16.msra.mxu0 0
    %2708 = vmatprep.subr.bf16.mxu0 0
    %2709 = vmatpush1.bf16.msra.mxu0 0
    %2710 = vmatprep.subr.bf16.mxu0 0
    %2711 = vmatpush1.bf16.msra.mxu0 0
    %2712 = vmatprep.subr.bf16.mxu0 0
    %2713 = vmatpush1.bf16.msra.mxu0 0
    %2714 = vmatprep.subr.bf16.mxu0 0
    %2715 = vmatpush1.bf16.msra.mxu0 0
    %2716 = vmatprep.subr.bf16.mxu0 0
    %2717 = vmatpush1.bf16.msra.mxu0 0
    %2718 = vmatprep.mubr.bf16.mxu0 0
    %2719 = vmatmul.mubr.bf16.gmra.mrb[0].mxu0 %v2684
    %v2720 = vpop.f32.mrb[0].mxu0
    %v2721 = vadd.f32 %v2657, %v2720
    %v2722 = vpop.f32.mrb[0].mxu0
    %v2723 = vpop.f32.mrb[0].mxu0
    %v2724 = vadd.f32 %v2657, %v2723
    %v2725 = vpop.f32.mrb[0].mxu0
    %2726 = vdwg.mxu0
    %v2727 = vadd.f32 %v2721, %v2551
    %v2728 = vadd.f32 %v2724, %v2552
    %s2729 = scalar_lea.vmem %s14, 2
    %v2730 = vld [vmem:[%s2729] sm:$0x1]
    %s2731 = scalar_lea.vmem %s15, 2
    %v2732 = vld [vmem:[%s2731] sm:$0x1]
    %v2733 = vsel %vm95, %v2727, 0.0
    %2734 = vadd.xlane.f32.xlu0 %v2733
    %v2735 = vpop.xlane.xlu0 %2734
    %v2736 = vsel %vm95, %v2728, 0.0
    %2737 = vadd.xlane.f32.xlu0 %v2736
    %v2738 = vpop.xlane.xlu0 %2737
    %v2739 = vmul.f32 %v2735, 0.03125
    %v2740 = vmul.f32 %v2738, 0.03125
    %v2741 = vsub.f32 %v2727, %v2739
    %v2742 = vsub.f32 %v2728, %v2740
    %v2743 = vmul.f32 %v2741, %v2741
    %v2744 = vmul.f32 %v2742, %v2742
    %v2745 = vsel %vm95, %v2743, 0.0
    %2746 = vadd.xlane.f32.xlu0 %v2745
    %v2747 = vpop.xlane.xlu0 %2746
    %v2748 = vsel %vm95, %v2744, 0.0
    %2749 = vadd.xlane.f32.xlu0 %v2748
    %v2750 = vpop.xlane.xlu0 %2749
    %v2751 = vmul.f32 %v2747, 0.03125
    %v2752 = vmul.f32 %v2750, 0.03125
    %v2753 = vadd.f32 %v2751, 1e-12
    %v2754 = vadd.f32 %v2752, 1e-12
    %v2755 = vrsqrt.pop %v2753
    %v2756 = vrsqrt.pop %v2754
    %v2757 = vmul.f32 %v2741, %v2755
    %v2758 = vmul.f32 %v2742, %v2756
    %v2760 = vlaneseq
    %v2761 = vshrl.u32 %v2760, 7
    %v2762 = vsub.s32 0, %v2761
    %v2763 = vrot.slane %v2730, %v2762
    %v2765 = vmul.f32 %v2757, %v2763
    %v2766 = vmul.f32 %v2758, %v2763
    %v2768 = vlaneseq
    %v2769 = vshrl.u32 %v2768, 7
    %v2770 = vsub.s32 0, %v2769
    %v2771 = vrot.slane %v2732, %v2770
    %v2773 = vadd.f32 %v2765, %v2771
    %v2774 = vadd.f32 %v2766, %v2771
    %v2775 = vadd.f32 %v1892, %v2773
    %v2776 = vadd.f32 %v1893, %v2774
    %2777 = vst.msk [vmem:[#allocation2] sm:$0xff] %vm95, %v2775
    %2778 = vst.msk [vmem:[#allocation2 + $0x8] sm:$0xff] %vm95, %v2776
    // Predicated region
    $region66: #{vanilla_bert_layer.1} parent=1 // pred_check
      _
    $region67: #{vanilla_bert_layer.1} parent=1 // pred_check_branch
      %2780 = sbr.rel (0) target = $region69
    $region68: #{vanilla_bert_layer.1} parent=1 // pred_region
      %s2782 = ssub.s32 256, 256
      %2783 = vsyncadd [#allocation3], %s2782
      %s2784 = sshll.u32 [#allocation2], 4
      %s2785 = int_to_ptr.vmem [resolvable:$true] %s2784
      %2790 = dma.vmem_to_hbm [thread:$0]  %s2785, 256, %s16, [#allocation3], 128, 128, 8
    $region69: #{vanilla_bert_layer.1} parent=1 // pred_fallthru
      _
    // Predicated region
    $region70: #{vanilla_bert_layer.1} parent=1 // pred_check
      _
    $region71: #{vanilla_bert_layer.1} parent=1 // pred_check_branch
      %2792 = sbr.rel (0) target = $region73
    $region72: #{vanilla_bert_layer.1} parent=1 // pred_region
      %2793 = dma.done [#allocation3], 256
    $region73: #{vanilla_bert_layer.1} parent=1 // pred_fallthru
      _
    %2794 = vsyncpa [#allocation3], 1

</llo_original>
